<compile_context>
chip_gen: v7x
topology: tpu7x:2x2x1
jax: 0.10.0
libtpu: 0.0.40
codegen_flags: <defaults>
</compile_context>

<pallas_src>
import jax
import jax.numpy as jnp
from jax.experimental import pallas as pl
from jax.experimental.pallas import tpu as pltpu

# ----------------------------- configuration --------------------------------
B, S = 2, 8              # batch, sequence length
H = 32                   # hidden size (768 in real BERT)
NH = 4                   # attention heads (12 in real BERT)
DH = H // NH             # head dim
FF = 4 * H               # intermediate FFN size
NLAYERS = 2              # encoder layers (12 in real BERT)
VOCAB = 100
TYPE_VOCAB = 2
MAX_POS = 16
NUM_LABELS = 5
LOGIT_PAD = 128          # lane-dense padded classifier width
LN_EPS = 1e-12


# ----------------------------- fused Pallas kernel ---------------------------
def _layernorm(x, g, b):
    """LayerNorm over last dim in f32. x: (S, H); g, b: (1, H)."""
    mean = jnp.mean(x, axis=-1, keepdims=True)
    var = jnp.mean(jnp.square(x - mean), axis=-1, keepdims=True)
    return (x - mean) * jax.lax.rsqrt(var + LN_EPS) * g + b


def _bert_kernel(emb_ref, mask_ref, eg_ref, eb_ref,
                 wqkv_ref, bqkv_ref, wo_ref, bo_ref, ln1g_ref, ln1b_ref,
                 w1_ref, b1_ref, w2_ref, b2_ref, ln2g_ref, ln2b_ref,
                 poolw_ref, poolb_ref, clsw_ref, clsb_ref,
                 out_ref):
    bf16 = jnp.bfloat16
    f32 = jnp.float32

    # embeddings LayerNorm (no residual)
    x = _layernorm(emb_ref[0].astype(f32), eg_ref[...], eb_ref[...])   # (S, H)
    mb = mask_ref[0]                                                    # (1, S) additive mask

    for l in range(NLAYERS):
        # --- fused QKV projection: (S,H) @ (H,3H); 1/sqrt(DH) pre-folded into Q ---
        qkv = jnp.dot(x.astype(bf16), wqkv_ref[l],
                      preferred_element_type=f32) + bqkv_ref[l]         # (S, 3H) f32
        q = qkv[:, 0:H]
        k = qkv[:, H:2 * H]
        v = qkv[:, 2 * H:3 * H]

        # --- self-attention, all heads unrolled inside this single launch ---
        ctx_parts = []
        for h in range(NH):
            qh = q[:, h * DH:(h + 1) * DH]                              # (S, DH) f32
            kh = k[:, h * DH:(h + 1) * DH]
            vh = v[:, h * DH:(h + 1) * DH]
            s = jnp.dot(qh.astype(bf16), kh.T.astype(bf16),
                        preferred_element_type=f32) + mb                # (S, S) f32
            s = s - jnp.max(s, axis=-1, keepdims=True)
            p = jnp.exp(s)
            p = p * pl.reciprocal(jnp.sum(p, axis=-1, keepdims=True), approx=True)
            ctx_parts.append(jnp.dot(p.astype(bf16), vh.astype(bf16),
                                     preferred_element_type=f32))       # (S, DH)
        ctx = jnp.concatenate(ctx_parts, axis=-1)                       # (S, H)

        attn_out = jnp.dot(ctx.astype(bf16), wo_ref[l],
                           preferred_element_type=f32) + bo_ref[l]
        x = _layernorm(attn_out + x, ln1g_ref[l], ln1b_ref[l])

        # --- feed-forward ---
        ff = jnp.dot(x.astype(bf16), w1_ref[l],
                     preferred_element_type=f32) + b1_ref[l]            # (S, FF)
        # TODO(synk): HF BERT uses exact erf GELU; tanh approximation used here.
        ff = jax.nn.gelu(ff, approximate=True)
        ff2 = jnp.dot(ff.astype(bf16), w2_ref[l],
                      preferred_element_type=f32) + b2_ref[l]
        x = _layernorm(ff2 + x, ln2g_ref[l], ln2b_ref[l])

    # --- pooler (dense + tanh) computed for all rows; only the [CLS] row is kept ---
    pooled = jnp.tanh(jnp.dot(x.astype(bf16), poolw_ref[...],
                              preferred_element_type=f32) + poolb_ref[...])   # (S, H)
    # Dropout(0.3): identity in eval mode (deterministic inference)
    logits = jnp.dot(pooled.astype(bf16), clsw_ref[...],
                     preferred_element_type=f32) + clsb_ref[...]              # (S, 128)
    out_ref[0] = logits[0:1, :]                                               # [CLS] row only


# ----------------------------- parameter init -------------------------------
def init_params(key):
    def nrm(k, shape, scale=0.02):
        return scale * jax.random.normal(k, shape, dtype=jnp.float32)

    keys = iter(jax.random.split(key, 32))
    return {
        "word_emb": nrm(next(keys), (VOCAB, H)),
        "pos_emb": nrm(next(keys), (MAX_POS, H)),
        "type_emb": nrm(next(keys), (TYPE_VOCAB, H)),
        "emb_ln_g": jnp.ones((H,), jnp.float32),
        "emb_ln_b": jnp.zeros((H,), jnp.float32),
        "wq": nrm(next(keys), (NLAYERS, H, H)), "bq": jnp.zeros((NLAYERS, H), jnp.float32),
        "wk": nrm(next(keys), (NLAYERS, H, H)), "bk": jnp.zeros((NLAYERS, H), jnp.float32),
        "wv": nrm(next(keys), (NLAYERS, H, H)), "bv": jnp.zeros((NLAYERS, H), jnp.float32),
        "wo": nrm(next(keys), (NLAYERS, H, H)), "bo": jnp.zeros((NLAYERS, H), jnp.float32),
        "ln1_g": jnp.ones((NLAYERS, H), jnp.float32), "ln1_b": jnp.zeros((NLAYERS, H), jnp.float32),
        "w1": nrm(next(keys), (NLAYERS, H, FF)), "b1": jnp.zeros((NLAYERS, FF), jnp.float32),
        "w2": nrm(next(keys), (NLAYERS, FF, H)), "b2": jnp.zeros((NLAYERS, H), jnp.float32),
        "ln2_g": jnp.ones((NLAYERS, H), jnp.float32), "ln2_b": jnp.zeros((NLAYERS, H), jnp.float32),
        "pool_w": nrm(next(keys), (H, H)), "pool_b": jnp.zeros((H,), jnp.float32),
        "cls_w": nrm(next(keys), (H, NUM_LABELS)), "cls_b": jnp.zeros((NUM_LABELS,), jnp.float32),
    }


def prepare_kernel_weights(p):
    """Fuse QKV, fold attention scale into Q, pad classifier to 128 lanes, cast to bf16."""
    bf16 = jnp.bfloat16
    scale = 1.0 / (DH ** 0.5)
    wqkv = jnp.concatenate([p["wq"] * scale, p["wk"], p["wv"]], axis=-1).astype(bf16)  # (L,H,3H)
    bqkv = jnp.concatenate([p["bq"] * scale, p["bk"], p["bv"]], axis=-1)[:, None, :]   # (L,1,3H)
    clsw = jnp.zeros((H, LOGIT_PAD), jnp.float32).at[:, :NUM_LABELS].set(p["cls_w"]).astype(bf16)
    clsb = jnp.zeros((1, LOGIT_PAD), jnp.float32).at[0, :NUM_LABELS].set(p["cls_b"])
    return dict(
        emb_ln_g=p["emb_ln_g"][None, :], emb_ln_b=p["emb_ln_b"][None, :],
        wqkv=wqkv, bqkv=bqkv,
        wo=p["wo"].astype(bf16), bo=p["bo"][:, None, :],
        ln1_g=p["ln1_g"][:, None, :], ln1_b=p["ln1_b"][:, None, :],
        w1=p["w1"].astype(bf16), b1=p["b1"][:, None, :],
        w2=p["w2"].astype(bf16), b2=p["b2"][:, None, :],
        ln2_g=p["ln2_g"][:, None, :], ln2_b=p["ln2_b"][:, None, :],
        pool_w=p["pool_w"].astype(bf16), pool_b=p["pool_b"][None, :],
        cls_w=clsw, cls_b=clsb,
    )


# ----------------------------- model forward --------------------------------
def bert_class_forward(params, input_ids, attn_mask, token_type_ids):
    kw = prepare_kernel_weights(params)

    # embeddings (gathers are glue; everything else runs inside the fused kernel)
    word = jnp.take(params["word_emb"], input_ids, axis=0)                 # (B, S, H)
    pos = jnp.take(params["pos_emb"], jnp.arange(S), axis=0)[None]         # (1, S, H)
    typ = jnp.take(params["type_emb"], token_type_ids, axis=0)             # (B, S, H)
    emb = (word + pos + typ).astype(jnp.float32)                           # (B, S, H)

    # additive attention mask: 0 where attended, -1e9 where masked
    ext_mask = ((1.0 - attn_mask.astype(jnp.float32)) * -1e9).reshape(B, 1, S)

    c2 = lambda b: (0, 0)
    c3 = lambda b: (0, 0, 0)
    in_specs = [
        pl.BlockSpec((1, S, H), lambda b: (b, 0, 0)),          # emb
        pl.BlockSpec((1, 1, S), lambda b: (b, 0, 0)),          # mask
        pl.BlockSpec((1, H), c2),                              # emb_ln_g
        pl.BlockSpec((1, H), c2),                              # emb_ln_b
        pl.BlockSpec((NLAYERS, H, 3 * H), c3),                 # wqkv
        pl.BlockSpec((NLAYERS, 1, 3 * H), c3),                 # bqkv
        pl.BlockSpec((NLAYERS, H, H), c3),                     # wo
        pl.BlockSpec((NLAYERS, 1, H), c3),                     # bo
        pl.BlockSpec((NLAYERS, 1, H), c3),                     # ln1_g
        pl.BlockSpec((NLAYERS, 1, H), c3),                     # ln1_b
        pl.BlockSpec((NLAYERS, H, FF), c3),                    # w1
        pl.BlockSpec((NLAYERS, 1, FF), c3),                    # b1
        pl.BlockSpec((NLAYERS, FF, H), c3),                    # w2
        pl.BlockSpec((NLAYERS, 1, H), c3),                     # b2
        pl.BlockSpec((NLAYERS, 1, H), c3),                     # ln2_g
        pl.BlockSpec((NLAYERS, 1, H), c3),                     # ln2_b
        pl.BlockSpec((H, H), c2),                              # pool_w
        pl.BlockSpec((1, H), c2),                              # pool_b
        pl.BlockSpec((H, LOGIT_PAD), c2),                      # cls_w (padded)
        pl.BlockSpec((1, LOGIT_PAD), c2),                      # cls_b (padded)
    ]

    logits_pad = pl.pallas_call(
        _bert_kernel,
        out_shape=jax.ShapeDtypeStruct((B, 1, LOGIT_PAD), jnp.float32),
        grid=(B,),
        in_specs=in_specs,
        out_specs=pl.BlockSpec((1, 1, LOGIT_PAD), lambda b: (b, 0, 0)),
        compiler_params=pltpu.CompilerParams(dimension_semantics=("parallel",)),
    )(emb, ext_mask, kw["emb_ln_g"], kw["emb_ln_b"],
      kw["wqkv"], kw["bqkv"], kw["wo"], kw["bo"], kw["ln1_g"], kw["ln1_b"],
      kw["w1"], kw["b1"], kw["w2"], kw["b2"], kw["ln2_g"], kw["ln2_b"],
      kw["pool_w"], kw["pool_b"], kw["cls_w"], kw["cls_b"])

    return logits_pad[:, 0, :NUM_LABELS]                                   # (B, NUM_LABELS)


# ----------------------------------- main ------------------------------------
if __name__ == "__main__":
    key = jax.random.PRNGKey(0)
    pkey, ikey = jax.random.split(key)
    params = init_params(pkey)

    input_ids = jax.random.randint(ikey, (B, S), 0, VOCAB, dtype=jnp.int32)
    attn_mask = jnp.ones((B, S), dtype=jnp.int32).at[1, 6:].set(0)  # pad last 2 of batch 1
    token_type_ids = jnp.zeros((B, S), dtype=jnp.int32)

    fwd = jax.jit(bert_class_forward)
    logits = fwd(params, input_ids, attn_mask, token_type_ids)
    jax.block_until_ready(logits)
    assert logits.shape == (B, NUM_LABELS)
    assert bool(jnp.all(jnp.isfinite(logits)))
    print("KERNEL_OK")
</pallas_src>

<mosaic_0001>
module attributes {stable_mosaic.version = 11 : i64} {
  func.func @_bert_kernel(%arg0: i32, %arg1: memref<1x8x32xf32, #tpu.memory_space<vmem>>, %arg2: memref<1x1x8xf32, #tpu.memory_space<vmem>>, %arg3: memref<1x32xf32, #tpu.memory_space<vmem>>, %arg4: memref<1x32xf32, #tpu.memory_space<vmem>>, %arg5: memref<2x32x96xbf16, #tpu.memory_space<vmem>>, %arg6: memref<2x1x96xf32, #tpu.memory_space<vmem>>, %arg7: memref<2x32x32xbf16, #tpu.memory_space<vmem>>, %arg8: memref<2x1x32xf32, #tpu.memory_space<vmem>>, %arg9: memref<2x1x32xf32, #tpu.memory_space<vmem>>, %arg10: memref<2x1x32xf32, #tpu.memory_space<vmem>>, %arg11: memref<2x32x128xbf16, #tpu.memory_space<vmem>>, %arg12: memref<2x1x128xf32, #tpu.memory_space<vmem>>, %arg13: memref<2x128x32xbf16, #tpu.memory_space<vmem>>, %arg14: memref<2x1x32xf32, #tpu.memory_space<vmem>>, %arg15: memref<2x1x32xf32, #tpu.memory_space<vmem>>, %arg16: memref<2x1x32xf32, #tpu.memory_space<vmem>>, %arg17: memref<32x32xbf16, #tpu.memory_space<vmem>>, %arg18: memref<1x32xf32, #tpu.memory_space<vmem>>, %arg19: memref<32x128xbf16, #tpu.memory_space<vmem>>, %arg20: memref<1x128xf32, #tpu.memory_space<vmem>>, %arg21: memref<1x1x128xf32, #tpu.memory_space<vmem>>) attributes {dimension_semantics = [#tpu.dimension_semantics<parallel>], iteration_bounds = array<i64: 2>, scalar_prefetch = 0 : i64, scratch_operands = 0 : i64, tpu.core_type = #tpu.core_type<tc>, window_params = [{transform_indices = @transform_0, window_bounds = array<i64: 1, 8, 32>}, {transform_indices = @transform_1, window_bounds = array<i64: 1, 1, 8>}, {pipeline_mode = #tpu.pipeline_mode<synchronous>, transform_indices = @transform_2, window_bounds = array<i64: 1, 32>}, {pipeline_mode = #tpu.pipeline_mode<synchronous>, transform_indices = @transform_3, window_bounds = array<i64: 1, 32>}, {pipeline_mode = #tpu.pipeline_mode<synchronous>, transform_indices = @transform_4, window_bounds = array<i64: 2, 32, 96>}, {pipeline_mode = #tpu.pipeline_mode<synchronous>, transform_indices = @transform_5, window_bounds = array<i64: 2, 1, 96>}, {pipeline_mode = #tpu.pipeline_mode<synchronous>, transform_indices = @transform_6, window_bounds = array<i64: 2, 32, 32>}, {pipeline_mode = #tpu.pipeline_mode<synchronous>, transform_indices = @transform_7, window_bounds = array<i64: 2, 1, 32>}, {pipeline_mode = #tpu.pipeline_mode<synchronous>, transform_indices = @transform_8, window_bounds = array<i64: 2, 1, 32>}, {pipeline_mode = #tpu.pipeline_mode<synchronous>, transform_indices = @transform_9, window_bounds = array<i64: 2, 1, 32>}, {pipeline_mode = #tpu.pipeline_mode<synchronous>, transform_indices = @transform_10, window_bounds = array<i64: 2, 32, 128>}, {pipeline_mode = #tpu.pipeline_mode<synchronous>, transform_indices = @transform_11, window_bounds = array<i64: 2, 1, 128>}, {pipeline_mode = #tpu.pipeline_mode<synchronous>, transform_indices = @transform_12, window_bounds = array<i64: 2, 128, 32>}, {pipeline_mode = #tpu.pipeline_mode<synchronous>, transform_indices = @transform_13, window_bounds = array<i64: 2, 1, 32>}, {pipeline_mode = #tpu.pipeline_mode<synchronous>, transform_indices = @transform_14, window_bounds = array<i64: 2, 1, 32>}, {pipeline_mode = #tpu.pipeline_mode<synchronous>, transform_indices = @transform_15, window_bounds = array<i64: 2, 1, 32>}, {pipeline_mode = #tpu.pipeline_mode<synchronous>, transform_indices = @transform_16, window_bounds = array<i64: 32, 32>}, {pipeline_mode = #tpu.pipeline_mode<synchronous>, transform_indices = @transform_17, window_bounds = array<i64: 1, 32>}, {pipeline_mode = #tpu.pipeline_mode<synchronous>, transform_indices = @transform_18, window_bounds = array<i64: 32, 128>}, {pipeline_mode = #tpu.pipeline_mode<synchronous>, transform_indices = @transform_19, window_bounds = array<i64: 1, 128>}, {transform_indices = @transform_20, window_bounds = array<i64: 1, 1, 128>}]} {
    %c0 = arith.constant 0 : index
    %c0_0 = arith.constant 0 : index
    %c0_1 = arith.constant 0 : index
    %0 = vector.load %arg1[%c0, %c0_0, %c0_1] : memref<1x8x32xf32, #tpu.memory_space<vmem>>, vector<1x8x32xf32>
    %1 = vector.shape_cast %0 : vector<1x8x32xf32> to vector<8x32xf32>
    %c0_2 = arith.constant 0 : index
    %c0_3 = arith.constant 0 : index
    %2 = vector.load %arg3[%c0_2, %c0_3] : memref<1x32xf32, #tpu.memory_space<vmem>>, vector<1x32xf32>
    %c0_4 = arith.constant 0 : index
    %c0_5 = arith.constant 0 : index
    %3 = vector.load %arg4[%c0_4, %c0_5] : memref<1x32xf32, #tpu.memory_space<vmem>>, vector<1x32xf32>
    %cst = arith.constant dense<0.000000e+00> : vector<8xf32>
    %4 = vector.multi_reduction <add>, %1, %cst [1] : vector<8x32xf32> to vector<8xf32>
    %5 = vector.shape_cast %4 : vector<8xf32> to vector<8x1xf32>
    %cst_6 = arith.constant 3.200000e+01 : f32
    %6 = vector.broadcast %cst_6 : f32 to vector<8x1xf32>
    %7 = arith.divf %5, %6 : vector<8x1xf32>
    %8 = vector.broadcast %7 : vector<8x1xf32> to vector<8x32xf32>
    %9 = arith.subf %1, %8 : vector<8x32xf32>
    %10 = arith.mulf %9, %9 : vector<8x32xf32>
    %cst_7 = arith.constant dense<0.000000e+00> : vector<8xf32>
    %11 = vector.multi_reduction <add>, %10, %cst_7 [1] : vector<8x32xf32> to vector<8xf32>
    %12 = vector.shape_cast %11 : vector<8xf32> to vector<8x1xf32>
    %cst_8 = arith.constant 3.200000e+01 : f32
    %13 = vector.broadcast %cst_8 : f32 to vector<8x1xf32>
    %14 = arith.divf %12, %13 : vector<8x1xf32>
    %15 = vector.broadcast %7 : vector<8x1xf32> to vector<8x32xf32>
    %16 = arith.subf %1, %15 : vector<8x32xf32>
    %cst_9 = arith.constant 9.99999996E-13 : f32
    %17 = vector.broadcast %cst_9 : f32 to vector<8x1xf32>
    %18 = arith.addf %14, %17 : vector<8x1xf32>
    %19 = math.rsqrt %18 : vector<8x1xf32>
    %20 = vector.broadcast %19 : vector<8x1xf32> to vector<8x32xf32>
    %21 = arith.mulf %16, %20 : vector<8x32xf32>
    %22 = vector.broadcast %2 : vector<1x32xf32> to vector<8x32xf32>
    %23 = arith.mulf %21, %22 : vector<8x32xf32>
    %24 = vector.broadcast %3 : vector<1x32xf32> to vector<8x32xf32>
    %25 = arith.addf %23, %24 : vector<8x32xf32>
    %c0_10 = arith.constant 0 : index
    %c0_11 = arith.constant 0 : index
    %c0_12 = arith.constant 0 : index
    %26 = vector.load %arg2[%c0_10, %c0_11, %c0_12] : memref<1x1x8xf32, #tpu.memory_space<vmem>>, vector<1x1x8xf32>
    %27 = vector.shape_cast %26 : vector<1x1x8xf32> to vector<1x8xf32>
    %28 = arith.truncf %25 : vector<8x32xf32> to vector<8x32xbf16>
    %c0_13 = arith.constant 0 : index
    %c0_14 = arith.constant 0 : index
    %c0_15 = arith.constant 0 : index
    %29 = vector.load %arg5[%c0_13, %c0_14, %c0_15] : memref<2x32x96xbf16, #tpu.memory_space<vmem>>, vector<1x32x96xbf16>
    %30 = vector.shape_cast %29 : vector<1x32x96xbf16> to vector<32x96xbf16>
    %cst_16 = arith.constant dense<0.000000e+00> : vector<8x96xf32>
    %31 = tpu.matmul %28, %30, %cst_16 {dimension_numbers = #tpu.dot_dimension_numbers<[1], [0], [0], [1], [0, 0, 1, 1], [], []>} : vector<8x32xbf16>, vector<32x96xbf16>, vector<8x96xf32> -> vector<8x96xf32>
    %c0_17 = arith.constant 0 : index
    %c0_18 = arith.constant 0 : index
    %c0_19 = arith.constant 0 : index
    %32 = vector.load %arg6[%c0_17, %c0_18, %c0_19] : memref<2x1x96xf32, #tpu.memory_space<vmem>>, vector<1x1x96xf32>
    %33 = vector.shape_cast %32 : vector<1x1x96xf32> to vector<1x96xf32>
    %34 = vector.broadcast %33 : vector<1x96xf32> to vector<8x96xf32>
    %35 = arith.addf %31, %34 : vector<8x96xf32>
    %36 = vector.extract_strided_slice %35 {offsets = [0, 0], sizes = [8, 32], strides = [1, 1]} : vector<8x96xf32> to vector<8x32xf32>
    %37 = vector.extract_strided_slice %35 {offsets = [0, 32], sizes = [8, 32], strides = [1, 1]} : vector<8x96xf32> to vector<8x32xf32>
    %38 = vector.extract_strided_slice %35 {offsets = [0, 64], sizes = [8, 32], strides = [1, 1]} : vector<8x96xf32> to vector<8x32xf32>
    %39 = vector.extract_strided_slice %36 {offsets = [0, 0], sizes = [8, 8], strides = [1, 1]} : vector<8x32xf32> to vector<8x8xf32>
    %40 = vector.extract_strided_slice %37 {offsets = [0, 0], sizes = [8, 8], strides = [1, 1]} : vector<8x32xf32> to vector<8x8xf32>
    %41 = vector.extract_strided_slice %38 {offsets = [0, 0], sizes = [8, 8], strides = [1, 1]} : vector<8x32xf32> to vector<8x8xf32>
    %42 = arith.truncf %39 : vector<8x8xf32> to vector<8x8xbf16>
    %43 = tpu.transpose %40, [1, 0] : vector<8x8xf32> -> vector<8x8xf32>
    %44 = arith.truncf %43 : vector<8x8xf32> to vector<8x8xbf16>
    %cst_20 = arith.constant dense<0.000000e+00> : vector<8x8xf32>
    %45 = tpu.matmul %42, %44, %cst_20 {dimension_numbers = #tpu.dot_dimension_numbers<[1], [0], [0], [1], [0, 0, 1, 1], [], []>} : vector<8x8xbf16>, vector<8x8xbf16>, vector<8x8xf32> -> vector<8x8xf32>
    %46 = vector.broadcast %27 : vector<1x8xf32> to vector<8x8xf32>
    %47 = arith.addf %45, %46 : vector<8x8xf32>
    %cst_21 = arith.constant dense<0xFF800000> : vector<8xf32>
    %48 = vector.multi_reduction <maximumf>, %47, %cst_21 [1] : vector<8x8xf32> to vector<8xf32>
    %49 = vector.shape_cast %48 : vector<8xf32> to vector<8x1xf32>
    %50 = vector.broadcast %49 : vector<8x1xf32> to vector<8x8xf32>
    %51 = arith.subf %47, %50 : vector<8x8xf32>
    %52 = math.exp %51 : vector<8x8xf32>
    %cst_22 = arith.constant dense<0.000000e+00> : vector<8xf32>
    %53 = vector.multi_reduction <add>, %52, %cst_22 [1] : vector<8x8xf32> to vector<8xf32>
    %54 = vector.shape_cast %53 : vector<8xf32> to vector<8x1xf32>
    %55 = tpu.reciprocal %54 {approx = true} : vector<8x1xf32> -> vector<8x1xf32>
    %56 = vector.broadcast %55 : vector<8x1xf32> to vector<8x8xf32>
    %57 = arith.mulf %52, %56 : vector<8x8xf32>
    %58 = arith.truncf %57 : vector<8x8xf32> to vector<8x8xbf16>
    %59 = arith.truncf %41 : vector<8x8xf32> to vector<8x8xbf16>
    %cst_23 = arith.constant dense<0.000000e+00> : vector<8x8xf32>
    %60 = tpu.matmul %58, %59, %cst_23 {dimension_numbers = #tpu.dot_dimension_numbers<[1], [0], [0], [1], [0, 0, 1, 1], [], []>} : vector<8x8xbf16>, vector<8x8xbf16>, vector<8x8xf32> -> vector<8x8xf32>
    %61 = vector.extract_strided_slice %36 {offsets = [0, 8], sizes = [8, 8], strides = [1, 1]} : vector<8x32xf32> to vector<8x8xf32>
    %62 = vector.extract_strided_slice %37 {offsets = [0, 8], sizes = [8, 8], strides = [1, 1]} : vector<8x32xf32> to vector<8x8xf32>
    %63 = vector.extract_strided_slice %38 {offsets = [0, 8], sizes = [8, 8], strides = [1, 1]} : vector<8x32xf32> to vector<8x8xf32>
    %64 = arith.truncf %61 : vector<8x8xf32> to vector<8x8xbf16>
    %65 = tpu.transpose %62, [1, 0] : vector<8x8xf32> -> vector<8x8xf32>
    %66 = arith.truncf %65 : vector<8x8xf32> to vector<8x8xbf16>
    %cst_24 = arith.constant dense<0.000000e+00> : vector<8x8xf32>
    %67 = tpu.matmul %64, %66, %cst_24 {dimension_numbers = #tpu.dot_dimension_numbers<[1], [0], [0], [1], [0, 0, 1, 1], [], []>} : vector<8x8xbf16>, vector<8x8xbf16>, vector<8x8xf32> -> vector<8x8xf32>
    %68 = vector.broadcast %27 : vector<1x8xf32> to vector<8x8xf32>
    %69 = arith.addf %67, %68 : vector<8x8xf32>
    %cst_25 = arith.constant dense<0xFF800000> : vector<8xf32>
    %70 = vector.multi_reduction <maximumf>, %69, %cst_25 [1] : vector<8x8xf32> to vector<8xf32>
    %71 = vector.shape_cast %70 : vector<8xf32> to vector<8x1xf32>
    %72 = vector.broadcast %71 : vector<8x1xf32> to vector<8x8xf32>
    %73 = arith.subf %69, %72 : vector<8x8xf32>
    %74 = math.exp %73 : vector<8x8xf32>
    %cst_26 = arith.constant dense<0.000000e+00> : vector<8xf32>
    %75 = vector.multi_reduction <add>, %74, %cst_26 [1] : vector<8x8xf32> to vector<8xf32>
    %76 = vector.shape_cast %75 : vector<8xf32> to vector<8x1xf32>
    %77 = tpu.reciprocal %76 {approx = true} : vector<8x1xf32> -> vector<8x1xf32>
    %78 = vector.broadcast %77 : vector<8x1xf32> to vector<8x8xf32>
    %79 = arith.mulf %74, %78 : vector<8x8xf32>
    %80 = arith.truncf %79 : vector<8x8xf32> to vector<8x8xbf16>
    %81 = arith.truncf %63 : vector<8x8xf32> to vector<8x8xbf16>
    %cst_27 = arith.constant dense<0.000000e+00> : vector<8x8xf32>
    %82 = tpu.matmul %80, %81, %cst_27 {dimension_numbers = #tpu.dot_dimension_numbers<[1], [0], [0], [1], [0, 0, 1, 1], [], []>} : vector<8x8xbf16>, vector<8x8xbf16>, vector<8x8xf32> -> vector<8x8xf32>
    %83 = vector.extract_strided_slice %36 {offsets = [0, 16], sizes = [8, 8], strides = [1, 1]} : vector<8x32xf32> to vector<8x8xf32>
    %84 = vector.extract_strided_slice %37 {offsets = [0, 16], sizes = [8, 8], strides = [1, 1]} : vector<8x32xf32> to vector<8x8xf32>
    %85 = vector.extract_strided_slice %38 {offsets = [0, 16], sizes = [8, 8], strides = [1, 1]} : vector<8x32xf32> to vector<8x8xf32>
    %86 = arith.truncf %83 : vector<8x8xf32> to vector<8x8xbf16>
    %87 = tpu.transpose %84, [1, 0] : vector<8x8xf32> -> vector<8x8xf32>
    %88 = arith.truncf %87 : vector<8x8xf32> to vector<8x8xbf16>
    %cst_28 = arith.constant dense<0.000000e+00> : vector<8x8xf32>
    %89 = tpu.matmul %86, %88, %cst_28 {dimension_numbers = #tpu.dot_dimension_numbers<[1], [0], [0], [1], [0, 0, 1, 1], [], []>} : vector<8x8xbf16>, vector<8x8xbf16>, vector<8x8xf32> -> vector<8x8xf32>
    %90 = vector.broadcast %27 : vector<1x8xf32> to vector<8x8xf32>
    %91 = arith.addf %89, %90 : vector<8x8xf32>
    %cst_29 = arith.constant dense<0xFF800000> : vector<8xf32>
    %92 = vector.multi_reduction <maximumf>, %91, %cst_29 [1] : vector<8x8xf32> to vector<8xf32>
    %93 = vector.shape_cast %92 : vector<8xf32> to vector<8x1xf32>
    %94 = vector.broadcast %93 : vector<8x1xf32> to vector<8x8xf32>
    %95 = arith.subf %91, %94 : vector<8x8xf32>
    %96 = math.exp %95 : vector<8x8xf32>
    %cst_30 = arith.constant dense<0.000000e+00> : vector<8xf32>
    %97 = vector.multi_reduction <add>, %96, %cst_30 [1] : vector<8x8xf32> to vector<8xf32>
    %98 = vector.shape_cast %97 : vector<8xf32> to vector<8x1xf32>
    %99 = tpu.reciprocal %98 {approx = true} : vector<8x1xf32> -> vector<8x1xf32>
    %100 = vector.broadcast %99 : vector<8x1xf32> to vector<8x8xf32>
    %101 = arith.mulf %96, %100 : vector<8x8xf32>
    %102 = arith.truncf %101 : vector<8x8xf32> to vector<8x8xbf16>
    %103 = arith.truncf %85 : vector<8x8xf32> to vector<8x8xbf16>
    %cst_31 = arith.constant dense<0.000000e+00> : vector<8x8xf32>
    %104 = tpu.matmul %102, %103, %cst_31 {dimension_numbers = #tpu.dot_dimension_numbers<[1], [0], [0], [1], [0, 0, 1, 1], [], []>} : vector<8x8xbf16>, vector<8x8xbf16>, vector<8x8xf32> -> vector<8x8xf32>
    %105 = vector.extract_strided_slice %36 {offsets = [0, 24], sizes = [8, 8], strides = [1, 1]} : vector<8x32xf32> to vector<8x8xf32>
    %106 = vector.extract_strided_slice %37 {offsets = [0, 24], sizes = [8, 8], strides = [1, 1]} : vector<8x32xf32> to vector<8x8xf32>
    %107 = vector.extract_strided_slice %38 {offsets = [0, 24], sizes = [8, 8], strides = [1, 1]} : vector<8x32xf32> to vector<8x8xf32>
    %108 = arith.truncf %105 : vector<8x8xf32> to vector<8x8xbf16>
    %109 = tpu.transpose %106, [1, 0] : vector<8x8xf32> -> vector<8x8xf32>
    %110 = arith.truncf %109 : vector<8x8xf32> to vector<8x8xbf16>
    %cst_32 = arith.constant dense<0.000000e+00> : vector<8x8xf32>
    %111 = tpu.matmul %108, %110, %cst_32 {dimension_numbers = #tpu.dot_dimension_numbers<[1], [0], [0], [1], [0, 0, 1, 1], [], []>} : vector<8x8xbf16>, vector<8x8xbf16>, vector<8x8xf32> -> vector<8x8xf32>
    %112 = vector.broadcast %27 : vector<1x8xf32> to vector<8x8xf32>
    %113 = arith.addf %111, %112 : vector<8x8xf32>
    %cst_33 = arith.constant dense<0xFF800000> : vector<8xf32>
    %114 = vector.multi_reduction <maximumf>, %113, %cst_33 [1] : vector<8x8xf32> to vector<8xf32>
    %115 = vector.shape_cast %114 : vector<8xf32> to vector<8x1xf32>
    %116 = vector.broadcast %115 : vector<8x1xf32> to vector<8x8xf32>
    %117 = arith.subf %113, %116 : vector<8x8xf32>
    %118 = math.exp %117 : vector<8x8xf32>
    %cst_34 = arith.constant dense<0.000000e+00> : vector<8xf32>
    %119 = vector.multi_reduction <add>, %118, %cst_34 [1] : vector<8x8xf32> to vector<8xf32>
    %120 = vector.shape_cast %119 : vector<8xf32> to vector<8x1xf32>
    %121 = tpu.reciprocal %120 {approx = true} : vector<8x1xf32> -> vector<8x1xf32>
    %122 = vector.broadcast %121 : vector<8x1xf32> to vector<8x8xf32>
    %123 = arith.mulf %118, %122 : vector<8x8xf32>
    %124 = arith.truncf %123 : vector<8x8xf32> to vector<8x8xbf16>
    %125 = arith.truncf %107 : vector<8x8xf32> to vector<8x8xbf16>
    %cst_35 = arith.constant dense<0.000000e+00> : vector<8x8xf32>
    %126 = tpu.matmul %124, %125, %cst_35 {dimension_numbers = #tpu.dot_dimension_numbers<[1], [0], [0], [1], [0, 0, 1, 1], [], []>} : vector<8x8xbf16>, vector<8x8xbf16>, vector<8x8xf32> -> vector<8x8xf32>
    %127 = tpu.concatenate %60, %82, %104, %126 in 1 : vector<8x8xf32>, vector<8x8xf32>, vector<8x8xf32>, vector<8x8xf32> -> vector<8x32xf32>
    %128 = arith.truncf %127 : vector<8x32xf32> to vector<8x32xbf16>
    %c0_36 = arith.constant 0 : index
    %c0_37 = arith.constant 0 : index
    %c0_38 = arith.constant 0 : index
    %129 = vector.load %arg7[%c0_36, %c0_37, %c0_38] : memref<2x32x32xbf16, #tpu.memory_space<vmem>>, vector<1x32x32xbf16>
    %130 = vector.shape_cast %129 : vector<1x32x32xbf16> to vector<32x32xbf16>
    %cst_39 = arith.constant dense<0.000000e+00> : vector<8x32xf32>
    %131 = tpu.matmul %128, %130, %cst_39 {dimension_numbers = #tpu.dot_dimension_numbers<[1], [0], [0], [1], [0, 0, 1, 1], [], []>} : vector<8x32xbf16>, vector<32x32xbf16>, vector<8x32xf32> -> vector<8x32xf32>
    %c0_40 = arith.constant 0 : index
    %c0_41 = arith.constant 0 : index
    %c0_42 = arith.constant 0 : index
    %132 = vector.load %arg8[%c0_40, %c0_41, %c0_42] : memref<2x1x32xf32, #tpu.memory_space<vmem>>, vector<1x1x32xf32>
    %133 = vector.shape_cast %132 : vector<1x1x32xf32> to vector<1x32xf32>
    %134 = vector.broadcast %133 : vector<1x32xf32> to vector<8x32xf32>
    %135 = arith.addf %131, %134 : vector<8x32xf32>
    %136 = arith.addf %135, %25 : vector<8x32xf32>
    %c0_43 = arith.constant 0 : index
    %c0_44 = arith.constant 0 : index
    %c0_45 = arith.constant 0 : index
    %137 = vector.load %arg9[%c0_43, %c0_44, %c0_45] : memref<2x1x32xf32, #tpu.memory_space<vmem>>, vector<1x1x32xf32>
    %138 = vector.shape_cast %137 : vector<1x1x32xf32> to vector<1x32xf32>
    %c0_46 = arith.constant 0 : index
    %c0_47 = arith.constant 0 : index
    %c0_48 = arith.constant 0 : index
    %139 = vector.load %arg10[%c0_46, %c0_47, %c0_48] : memref<2x1x32xf32, #tpu.memory_space<vmem>>, vector<1x1x32xf32>
    %140 = vector.shape_cast %139 : vector<1x1x32xf32> to vector<1x32xf32>
    %cst_49 = arith.constant dense<0.000000e+00> : vector<8xf32>
    %141 = vector.multi_reduction <add>, %136, %cst_49 [1] : vector<8x32xf32> to vector<8xf32>
    %142 = vector.shape_cast %141 : vector<8xf32> to vector<8x1xf32>
    %cst_50 = arith.constant 3.200000e+01 : f32
    %143 = vector.broadcast %cst_50 : f32 to vector<8x1xf32>
    %144 = arith.divf %142, %143 : vector<8x1xf32>
    %145 = vector.broadcast %144 : vector<8x1xf32> to vector<8x32xf32>
    %146 = arith.subf %136, %145 : vector<8x32xf32>
    %147 = arith.mulf %146, %146 : vector<8x32xf32>
    %cst_51 = arith.constant dense<0.000000e+00> : vector<8xf32>
    %148 = vector.multi_reduction <add>, %147, %cst_51 [1] : vector<8x32xf32> to vector<8xf32>
    %149 = vector.shape_cast %148 : vector<8xf32> to vector<8x1xf32>
    %cst_52 = arith.constant 3.200000e+01 : f32
    %150 = vector.broadcast %cst_52 : f32 to vector<8x1xf32>
    %151 = arith.divf %149, %150 : vector<8x1xf32>
    %152 = vector.broadcast %144 : vector<8x1xf32> to vector<8x32xf32>
    %153 = arith.subf %136, %152 : vector<8x32xf32>
    %cst_53 = arith.constant 9.99999996E-13 : f32
    %154 = vector.broadcast %cst_53 : f32 to vector<8x1xf32>
    %155 = arith.addf %151, %154 : vector<8x1xf32>
    %156 = math.rsqrt %155 : vector<8x1xf32>
    %157 = vector.broadcast %156 : vector<8x1xf32> to vector<8x32xf32>
    %158 = arith.mulf %153, %157 : vector<8x32xf32>
    %159 = vector.broadcast %138 : vector<1x32xf32> to vector<8x32xf32>
    %160 = arith.mulf %158, %159 : vector<8x32xf32>
    %161 = vector.broadcast %140 : vector<1x32xf32> to vector<8x32xf32>
    %162 = arith.addf %160, %161 : vector<8x32xf32>
    %163 = arith.truncf %162 : vector<8x32xf32> to vector<8x32xbf16>
    %c0_54 = arith.constant 0 : index
    %c0_55 = arith.constant 0 : index
    %c0_56 = arith.constant 0 : index
    %164 = vector.load %arg11[%c0_54, %c0_55, %c0_56] : memref<2x32x128xbf16, #tpu.memory_space<vmem>>, vector<1x32x128xbf16>
    %165 = vector.shape_cast %164 : vector<1x32x128xbf16> to vector<32x128xbf16>
    %cst_57 = arith.constant dense<0.000000e+00> : vector<8x128xf32>
    %166 = tpu.matmul %163, %165, %cst_57 {dimension_numbers = #tpu.dot_dimension_numbers<[1], [0], [0], [1], [0, 0, 1, 1], [], []>} : vector<8x32xbf16>, vector<32x128xbf16>, vector<8x128xf32> -> vector<8x128xf32>
    %c0_58 = arith.constant 0 : index
    %c0_59 = arith.constant 0 : index
    %c0_60 = arith.constant 0 : index
    %167 = vector.load %arg12[%c0_58, %c0_59, %c0_60] : memref<2x1x128xf32, #tpu.memory_space<vmem>>, vector<1x1x128xf32>
    %168 = vector.shape_cast %167 : vector<1x1x128xf32> to vector<1x128xf32>
    %169 = vector.broadcast %168 : vector<1x128xf32> to vector<8x128xf32>
    %170 = arith.addf %166, %169 : vector<8x128xf32>
    %171 = arith.mulf %170, %170 : vector<8x128xf32>
    %172 = arith.mulf %170, %171 : vector<8x128xf32>
    %cst_61 = arith.constant 4.471500e-02 : f32
    %173 = vector.broadcast %cst_61 : f32 to vector<8x128xf32>
    %174 = arith.mulf %173, %172 : vector<8x128xf32>
    %175 = arith.addf %170, %174 : vector<8x128xf32>
    %cst_62 = arith.constant 0.797884583 : f32
    %176 = vector.broadcast %cst_62 : f32 to vector<8x128xf32>
    %177 = arith.mulf %176, %175 : vector<8x128xf32>
    %178 = math.tanh %177 : vector<8x128xf32>
    %cst_63 = arith.constant 1.000000e+00 : f32
    %179 = vector.broadcast %cst_63 : f32 to vector<8x128xf32>
    %180 = arith.addf %179, %178 : vector<8x128xf32>
    %cst_64 = arith.constant 5.000000e-01 : f32
    %181 = vector.broadcast %cst_64 : f32 to vector<8x128xf32>
    %182 = arith.mulf %181, %180 : vector<8x128xf32>
    %183 = arith.mulf %170, %182 : vector<8x128xf32>
    %184 = arith.truncf %183 : vector<8x128xf32> to vector<8x128xbf16>
    %c0_65 = arith.constant 0 : index
    %c0_66 = arith.constant 0 : index
    %c0_67 = arith.constant 0 : index
    %185 = vector.load %arg13[%c0_65, %c0_66, %c0_67] : memref<2x128x32xbf16, #tpu.memory_space<vmem>>, vector<1x128x32xbf16>
    %186 = vector.shape_cast %185 : vector<1x128x32xbf16> to vector<128x32xbf16>
    %cst_68 = arith.constant dense<0.000000e+00> : vector<8x32xf32>
    %187 = tpu.matmul %184, %186, %cst_68 {dimension_numbers = #tpu.dot_dimension_numbers<[1], [0], [0], [1], [0, 0, 1, 1], [], []>} : vector<8x128xbf16>, vector<128x32xbf16>, vector<8x32xf32> -> vector<8x32xf32>
    %c0_69 = arith.constant 0 : index
    %c0_70 = arith.constant 0 : index
    %c0_71 = arith.constant 0 : index
    %188 = vector.load %arg14[%c0_69, %c0_70, %c0_71] : memref<2x1x32xf32, #tpu.memory_space<vmem>>, vector<1x1x32xf32>
    %189 = vector.shape_cast %188 : vector<1x1x32xf32> to vector<1x32xf32>
    %190 = vector.broadcast %189 : vector<1x32xf32> to vector<8x32xf32>
    %191 = arith.addf %187, %190 : vector<8x32xf32>
    %192 = arith.addf %191, %162 : vector<8x32xf32>
    %c0_72 = arith.constant 0 : index
    %c0_73 = arith.constant 0 : index
    %c0_74 = arith.constant 0 : index
    %193 = vector.load %arg15[%c0_72, %c0_73, %c0_74] : memref<2x1x32xf32, #tpu.memory_space<vmem>>, vector<1x1x32xf32>
    %194 = vector.shape_cast %193 : vector<1x1x32xf32> to vector<1x32xf32>
    %c0_75 = arith.constant 0 : index
    %c0_76 = arith.constant 0 : index
    %c0_77 = arith.constant 0 : index
    %195 = vector.load %arg16[%c0_75, %c0_76, %c0_77] : memref<2x1x32xf32, #tpu.memory_space<vmem>>, vector<1x1x32xf32>
    %196 = vector.shape_cast %195 : vector<1x1x32xf32> to vector<1x32xf32>
    %cst_78 = arith.constant dense<0.000000e+00> : vector<8xf32>
    %197 = vector.multi_reduction <add>, %192, %cst_78 [1] : vector<8x32xf32> to vector<8xf32>
    %198 = vector.shape_cast %197 : vector<8xf32> to vector<8x1xf32>
    %cst_79 = arith.constant 3.200000e+01 : f32
    %199 = vector.broadcast %cst_79 : f32 to vector<8x1xf32>
    %200 = arith.divf %198, %199 : vector<8x1xf32>
    %201 = vector.broadcast %200 : vector<8x1xf32> to vector<8x32xf32>
    %202 = arith.subf %192, %201 : vector<8x32xf32>
    %203 = arith.mulf %202, %202 : vector<8x32xf32>
    %cst_80 = arith.constant dense<0.000000e+00> : vector<8xf32>
    %204 = vector.multi_reduction <add>, %203, %cst_80 [1] : vector<8x32xf32> to vector<8xf32>
    %205 = vector.shape_cast %204 : vector<8xf32> to vector<8x1xf32>
    %cst_81 = arith.constant 3.200000e+01 : f32
    %206 = vector.broadcast %cst_81 : f32 to vector<8x1xf32>
    %207 = arith.divf %205, %206 : vector<8x1xf32>
    %208 = vector.broadcast %200 : vector<8x1xf32> to vector<8x32xf32>
    %209 = arith.subf %192, %208 : vector<8x32xf32>
    %cst_82 = arith.constant 9.99999996E-13 : f32
    %210 = vector.broadcast %cst_82 : f32 to vector<8x1xf32>
    %211 = arith.addf %207, %210 : vector<8x1xf32>
    %212 = math.rsqrt %211 : vector<8x1xf32>
    %213 = vector.broadcast %212 : vector<8x1xf32> to vector<8x32xf32>
    %214 = arith.mulf %209, %213 : vector<8x32xf32>
    %215 = vector.broadcast %194 : vector<1x32xf32> to vector<8x32xf32>
    %216 = arith.mulf %214, %215 : vector<8x32xf32>
    %217 = vector.broadcast %196 : vector<1x32xf32> to vector<8x32xf32>
    %218 = arith.addf %216, %217 : vector<8x32xf32>
    %219 = arith.truncf %218 : vector<8x32xf32> to vector<8x32xbf16>
    %c1 = arith.constant 1 : index
    %c0_83 = arith.constant 0 : index
    %c0_84 = arith.constant 0 : index
    %220 = vector.load %arg5[%c1, %c0_83, %c0_84] : memref<2x32x96xbf16, #tpu.memory_space<vmem>>, vector<1x32x96xbf16>
    %221 = vector.shape_cast %220 : vector<1x32x96xbf16> to vector<32x96xbf16>
    %cst_85 = arith.constant dense<0.000000e+00> : vector<8x96xf32>
    %222 = tpu.matmul %219, %221, %cst_85 {dimension_numbers = #tpu.dot_dimension_numbers<[1], [0], [0], [1], [0, 0, 1, 1], [], []>} : vector<8x32xbf16>, vector<32x96xbf16>, vector<8x96xf32> -> vector<8x96xf32>
    %c1_86 = arith.constant 1 : index
    %c0_87 = arith.constant 0 : index
    %c0_88 = arith.constant 0 : index
    %223 = vector.load %arg6[%c1_86, %c0_87, %c0_88] : memref<2x1x96xf32, #tpu.memory_space<vmem>>, vector<1x1x96xf32>
    %224 = vector.shape_cast %223 : vector<1x1x96xf32> to vector<1x96xf32>
    %225 = vector.broadcast %224 : vector<1x96xf32> to vector<8x96xf32>
    %226 = arith.addf %222, %225 : vector<8x96xf32>
    %227 = vector.extract_strided_slice %226 {offsets = [0, 0], sizes = [8, 32], strides = [1, 1]} : vector<8x96xf32> to vector<8x32xf32>
    %228 = vector.extract_strided_slice %226 {offsets = [0, 32], sizes = [8, 32], strides = [1, 1]} : vector<8x96xf32> to vector<8x32xf32>
    %229 = vector.extract_strided_slice %226 {offsets = [0, 64], sizes = [8, 32], strides = [1, 1]} : vector<8x96xf32> to vector<8x32xf32>
    %230 = vector.extract_strided_slice %227 {offsets = [0, 0], sizes = [8, 8], strides = [1, 1]} : vector<8x32xf32> to vector<8x8xf32>
    %231 = vector.extract_strided_slice %228 {offsets = [0, 0], sizes = [8, 8], strides = [1, 1]} : vector<8x32xf32> to vector<8x8xf32>
    %232 = vector.extract_strided_slice %229 {offsets = [0, 0], sizes = [8, 8], strides = [1, 1]} : vector<8x32xf32> to vector<8x8xf32>
    %233 = arith.truncf %230 : vector<8x8xf32> to vector<8x8xbf16>
    %234 = tpu.transpose %231, [1, 0] : vector<8x8xf32> -> vector<8x8xf32>
    %235 = arith.truncf %234 : vector<8x8xf32> to vector<8x8xbf16>
    %cst_89 = arith.constant dense<0.000000e+00> : vector<8x8xf32>
    %236 = tpu.matmul %233, %235, %cst_89 {dimension_numbers = #tpu.dot_dimension_numbers<[1], [0], [0], [1], [0, 0, 1, 1], [], []>} : vector<8x8xbf16>, vector<8x8xbf16>, vector<8x8xf32> -> vector<8x8xf32>
    %237 = vector.broadcast %27 : vector<1x8xf32> to vector<8x8xf32>
    %238 = arith.addf %236, %237 : vector<8x8xf32>
    %cst_90 = arith.constant dense<0xFF800000> : vector<8xf32>
    %239 = vector.multi_reduction <maximumf>, %238, %cst_90 [1] : vector<8x8xf32> to vector<8xf32>
    %240 = vector.shape_cast %239 : vector<8xf32> to vector<8x1xf32>
    %241 = vector.broadcast %240 : vector<8x1xf32> to vector<8x8xf32>
    %242 = arith.subf %238, %241 : vector<8x8xf32>
    %243 = math.exp %242 : vector<8x8xf32>
    %cst_91 = arith.constant dense<0.000000e+00> : vector<8xf32>
    %244 = vector.multi_reduction <add>, %243, %cst_91 [1] : vector<8x8xf32> to vector<8xf32>
    %245 = vector.shape_cast %244 : vector<8xf32> to vector<8x1xf32>
    %246 = tpu.reciprocal %245 {approx = true} : vector<8x1xf32> -> vector<8x1xf32>
    %247 = vector.broadcast %246 : vector<8x1xf32> to vector<8x8xf32>
    %248 = arith.mulf %243, %247 : vector<8x8xf32>
    %249 = arith.truncf %248 : vector<8x8xf32> to vector<8x8xbf16>
    %250 = arith.truncf %232 : vector<8x8xf32> to vector<8x8xbf16>
    %cst_92 = arith.constant dense<0.000000e+00> : vector<8x8xf32>
    %251 = tpu.matmul %249, %250, %cst_92 {dimension_numbers = #tpu.dot_dimension_numbers<[1], [0], [0], [1], [0, 0, 1, 1], [], []>} : vector<8x8xbf16>, vector<8x8xbf16>, vector<8x8xf32> -> vector<8x8xf32>
    %252 = vector.extract_strided_slice %227 {offsets = [0, 8], sizes = [8, 8], strides = [1, 1]} : vector<8x32xf32> to vector<8x8xf32>
    %253 = vector.extract_strided_slice %228 {offsets = [0, 8], sizes = [8, 8], strides = [1, 1]} : vector<8x32xf32> to vector<8x8xf32>
    %254 = vector.extract_strided_slice %229 {offsets = [0, 8], sizes = [8, 8], strides = [1, 1]} : vector<8x32xf32> to vector<8x8xf32>
    %255 = arith.truncf %252 : vector<8x8xf32> to vector<8x8xbf16>
    %256 = tpu.transpose %253, [1, 0] : vector<8x8xf32> -> vector<8x8xf32>
    %257 = arith.truncf %256 : vector<8x8xf32> to vector<8x8xbf16>
    %cst_93 = arith.constant dense<0.000000e+00> : vector<8x8xf32>
    %258 = tpu.matmul %255, %257, %cst_93 {dimension_numbers = #tpu.dot_dimension_numbers<[1], [0], [0], [1], [0, 0, 1, 1], [], []>} : vector<8x8xbf16>, vector<8x8xbf16>, vector<8x8xf32> -> vector<8x8xf32>
    %259 = vector.broadcast %27 : vector<1x8xf32> to vector<8x8xf32>
    %260 = arith.addf %258, %259 : vector<8x8xf32>
    %cst_94 = arith.constant dense<0xFF800000> : vector<8xf32>
    %261 = vector.multi_reduction <maximumf>, %260, %cst_94 [1] : vector<8x8xf32> to vector<8xf32>
    %262 = vector.shape_cast %261 : vector<8xf32> to vector<8x1xf32>
    %263 = vector.broadcast %262 : vector<8x1xf32> to vector<8x8xf32>
    %264 = arith.subf %260, %263 : vector<8x8xf32>
    %265 = math.exp %264 : vector<8x8xf32>
    %cst_95 = arith.constant dense<0.000000e+00> : vector<8xf32>
    %266 = vector.multi_reduction <add>, %265, %cst_95 [1] : vector<8x8xf32> to vector<8xf32>
    %267 = vector.shape_cast %266 : vector<8xf32> to vector<8x1xf32>
    %268 = tpu.reciprocal %267 {approx = true} : vector<8x1xf32> -> vector<8x1xf32>
    %269 = vector.broadcast %268 : vector<8x1xf32> to vector<8x8xf32>
    %270 = arith.mulf %265, %269 : vector<8x8xf32>
    %271 = arith.truncf %270 : vector<8x8xf32> to vector<8x8xbf16>
    %272 = arith.truncf %254 : vector<8x8xf32> to vector<8x8xbf16>
    %cst_96 = arith.constant dense<0.000000e+00> : vector<8x8xf32>
    %273 = tpu.matmul %271, %272, %cst_96 {dimension_numbers = #tpu.dot_dimension_numbers<[1], [0], [0], [1], [0, 0, 1, 1], [], []>} : vector<8x8xbf16>, vector<8x8xbf16>, vector<8x8xf32> -> vector<8x8xf32>
    %274 = vector.extract_strided_slice %227 {offsets = [0, 16], sizes = [8, 8], strides = [1, 1]} : vector<8x32xf32> to vector<8x8xf32>
    %275 = vector.extract_strided_slice %228 {offsets = [0, 16], sizes = [8, 8], strides = [1, 1]} : vector<8x32xf32> to vector<8x8xf32>
    %276 = vector.extract_strided_slice %229 {offsets = [0, 16], sizes = [8, 8], strides = [1, 1]} : vector<8x32xf32> to vector<8x8xf32>
    %277 = arith.truncf %274 : vector<8x8xf32> to vector<8x8xbf16>
    %278 = tpu.transpose %275, [1, 0] : vector<8x8xf32> -> vector<8x8xf32>
    %279 = arith.truncf %278 : vector<8x8xf32> to vector<8x8xbf16>
    %cst_97 = arith.constant dense<0.000000e+00> : vector<8x8xf32>
    %280 = tpu.matmul %277, %279, %cst_97 {dimension_numbers = #tpu.dot_dimension_numbers<[1], [0], [0], [1], [0, 0, 1, 1], [], []>} : vector<8x8xbf16>, vector<8x8xbf16>, vector<8x8xf32> -> vector<8x8xf32>
    %281 = vector.broadcast %27 : vector<1x8xf32> to vector<8x8xf32>
    %282 = arith.addf %280, %281 : vector<8x8xf32>
    %cst_98 = arith.constant dense<0xFF800000> : vector<8xf32>
    %283 = vector.multi_reduction <maximumf>, %282, %cst_98 [1] : vector<8x8xf32> to vector<8xf32>
    %284 = vector.shape_cast %283 : vector<8xf32> to vector<8x1xf32>
    %285 = vector.broadcast %284 : vector<8x1xf32> to vector<8x8xf32>
    %286 = arith.subf %282, %285 : vector<8x8xf32>
    %287 = math.exp %286 : vector<8x8xf32>
    %cst_99 = arith.constant dense<0.000000e+00> : vector<8xf32>
    %288 = vector.multi_reduction <add>, %287, %cst_99 [1] : vector<8x8xf32> to vector<8xf32>
    %289 = vector.shape_cast %288 : vector<8xf32> to vector<8x1xf32>
    %290 = tpu.reciprocal %289 {approx = true} : vector<8x1xf32> -> vector<8x1xf32>
    %291 = vector.broadcast %290 : vector<8x1xf32> to vector<8x8xf32>
    %292 = arith.mulf %287, %291 : vector<8x8xf32>
    %293 = arith.truncf %292 : vector<8x8xf32> to vector<8x8xbf16>
    %294 = arith.truncf %276 : vector<8x8xf32> to vector<8x8xbf16>
    %cst_100 = arith.constant dense<0.000000e+00> : vector<8x8xf32>
    %295 = tpu.matmul %293, %294, %cst_100 {dimension_numbers = #tpu.dot_dimension_numbers<[1], [0], [0], [1], [0, 0, 1, 1], [], []>} : vector<8x8xbf16>, vector<8x8xbf16>, vector<8x8xf32> -> vector<8x8xf32>
    %296 = vector.extract_strided_slice %227 {offsets = [0, 24], sizes = [8, 8], strides = [1, 1]} : vector<8x32xf32> to vector<8x8xf32>
    %297 = vector.extract_strided_slice %228 {offsets = [0, 24], sizes = [8, 8], strides = [1, 1]} : vector<8x32xf32> to vector<8x8xf32>
    %298 = vector.extract_strided_slice %229 {offsets = [0, 24], sizes = [8, 8], strides = [1, 1]} : vector<8x32xf32> to vector<8x8xf32>
    %299 = arith.truncf %296 : vector<8x8xf32> to vector<8x8xbf16>
    %300 = tpu.transpose %297, [1, 0] : vector<8x8xf32> -> vector<8x8xf32>
    %301 = arith.truncf %300 : vector<8x8xf32> to vector<8x8xbf16>
    %cst_101 = arith.constant dense<0.000000e+00> : vector<8x8xf32>
    %302 = tpu.matmul %299, %301, %cst_101 {dimension_numbers = #tpu.dot_dimension_numbers<[1], [0], [0], [1], [0, 0, 1, 1], [], []>} : vector<8x8xbf16>, vector<8x8xbf16>, vector<8x8xf32> -> vector<8x8xf32>
    %303 = vector.broadcast %27 : vector<1x8xf32> to vector<8x8xf32>
    %304 = arith.addf %302, %303 : vector<8x8xf32>
    %cst_102 = arith.constant dense<0xFF800000> : vector<8xf32>
    %305 = vector.multi_reduction <maximumf>, %304, %cst_102 [1] : vector<8x8xf32> to vector<8xf32>
    %306 = vector.shape_cast %305 : vector<8xf32> to vector<8x1xf32>
    %307 = vector.broadcast %306 : vector<8x1xf32> to vector<8x8xf32>
    %308 = arith.subf %304, %307 : vector<8x8xf32>
    %309 = math.exp %308 : vector<8x8xf32>
    %cst_103 = arith.constant dense<0.000000e+00> : vector<8xf32>
    %310 = vector.multi_reduction <add>, %309, %cst_103 [1] : vector<8x8xf32> to vector<8xf32>
    %311 = vector.shape_cast %310 : vector<8xf32> to vector<8x1xf32>
    %312 = tpu.reciprocal %311 {approx = true} : vector<8x1xf32> -> vector<8x1xf32>
    %313 = vector.broadcast %312 : vector<8x1xf32> to vector<8x8xf32>
    %314 = arith.mulf %309, %313 : vector<8x8xf32>
    %315 = arith.truncf %314 : vector<8x8xf32> to vector<8x8xbf16>
    %316 = arith.truncf %298 : vector<8x8xf32> to vector<8x8xbf16>
    %cst_104 = arith.constant dense<0.000000e+00> : vector<8x8xf32>
    %317 = tpu.matmul %315, %316, %cst_104 {dimension_numbers = #tpu.dot_dimension_numbers<[1], [0], [0], [1], [0, 0, 1, 1], [], []>} : vector<8x8xbf16>, vector<8x8xbf16>, vector<8x8xf32> -> vector<8x8xf32>
    %318 = tpu.concatenate %251, %273, %295, %317 in 1 : vector<8x8xf32>, vector<8x8xf32>, vector<8x8xf32>, vector<8x8xf32> -> vector<8x32xf32>
    %319 = arith.truncf %318 : vector<8x32xf32> to vector<8x32xbf16>
    %c1_105 = arith.constant 1 : index
    %c0_106 = arith.constant 0 : index
    %c0_107 = arith.constant 0 : index
    %320 = vector.load %arg7[%c1_105, %c0_106, %c0_107] : memref<2x32x32xbf16, #tpu.memory_space<vmem>>, vector<1x32x32xbf16>
    %321 = vector.shape_cast %320 : vector<1x32x32xbf16> to vector<32x32xbf16>
    %cst_108 = arith.constant dense<0.000000e+00> : vector<8x32xf32>
    %322 = tpu.matmul %319, %321, %cst_108 {dimension_numbers = #tpu.dot_dimension_numbers<[1], [0], [0], [1], [0, 0, 1, 1], [], []>} : vector<8x32xbf16>, vector<32x32xbf16>, vector<8x32xf32> -> vector<8x32xf32>
    %c1_109 = arith.constant 1 : index
    %c0_110 = arith.constant 0 : index
    %c0_111 = arith.constant 0 : index
    %323 = vector.load %arg8[%c1_109, %c0_110, %c0_111] : memref<2x1x32xf32, #tpu.memory_space<vmem>>, vector<1x1x32xf32>
    %324 = vector.shape_cast %323 : vector<1x1x32xf32> to vector<1x32xf32>
    %325 = vector.broadcast %324 : vector<1x32xf32> to vector<8x32xf32>
    %326 = arith.addf %322, %325 : vector<8x32xf32>
    %327 = arith.addf %326, %218 : vector<8x32xf32>
    %c1_112 = arith.constant 1 : index
    %c0_113 = arith.constant 0 : index
    %c0_114 = arith.constant 0 : index
    %328 = vector.load %arg9[%c1_112, %c0_113, %c0_114] : memref<2x1x32xf32, #tpu.memory_space<vmem>>, vector<1x1x32xf32>
    %329 = vector.shape_cast %328 : vector<1x1x32xf32> to vector<1x32xf32>
    %c1_115 = arith.constant 1 : index
    %c0_116 = arith.constant 0 : index
    %c0_117 = arith.constant 0 : index
    %330 = vector.load %arg10[%c1_115, %c0_116, %c0_117] : memref<2x1x32xf32, #tpu.memory_space<vmem>>, vector<1x1x32xf32>
    %331 = vector.shape_cast %330 : vector<1x1x32xf32> to vector<1x32xf32>
    %cst_118 = arith.constant dense<0.000000e+00> : vector<8xf32>
    %332 = vector.multi_reduction <add>, %327, %cst_118 [1] : vector<8x32xf32> to vector<8xf32>
    %333 = vector.shape_cast %332 : vector<8xf32> to vector<8x1xf32>
    %cst_119 = arith.constant 3.200000e+01 : f32
    %334 = vector.broadcast %cst_119 : f32 to vector<8x1xf32>
    %335 = arith.divf %333, %334 : vector<8x1xf32>
    %336 = vector.broadcast %335 : vector<8x1xf32> to vector<8x32xf32>
    %337 = arith.subf %327, %336 : vector<8x32xf32>
    %338 = arith.mulf %337, %337 : vector<8x32xf32>
    %cst_120 = arith.constant dense<0.000000e+00> : vector<8xf32>
    %339 = vector.multi_reduction <add>, %338, %cst_120 [1] : vector<8x32xf32> to vector<8xf32>
    %340 = vector.shape_cast %339 : vector<8xf32> to vector<8x1xf32>
    %cst_121 = arith.constant 3.200000e+01 : f32
    %341 = vector.broadcast %cst_121 : f32 to vector<8x1xf32>
    %342 = arith.divf %340, %341 : vector<8x1xf32>
    %343 = vector.broadcast %335 : vector<8x1xf32> to vector<8x32xf32>
    %344 = arith.subf %327, %343 : vector<8x32xf32>
    %cst_122 = arith.constant 9.99999996E-13 : f32
    %345 = vector.broadcast %cst_122 : f32 to vector<8x1xf32>
    %346 = arith.addf %342, %345 : vector<8x1xf32>
    %347 = math.rsqrt %346 : vector<8x1xf32>
    %348 = vector.broadcast %347 : vector<8x1xf32> to vector<8x32xf32>
    %349 = arith.mulf %344, %348 : vector<8x32xf32>
    %350 = vector.broadcast %329 : vector<1x32xf32> to vector<8x32xf32>
    %351 = arith.mulf %349, %350 : vector<8x32xf32>
    %352 = vector.broadcast %331 : vector<1x32xf32> to vector<8x32xf32>
    %353 = arith.addf %351, %352 : vector<8x32xf32>
    %354 = arith.truncf %353 : vector<8x32xf32> to vector<8x32xbf16>
    %c1_123 = arith.constant 1 : index
    %c0_124 = arith.constant 0 : index
    %c0_125 = arith.constant 0 : index
    %355 = vector.load %arg11[%c1_123, %c0_124, %c0_125] : memref<2x32x128xbf16, #tpu.memory_space<vmem>>, vector<1x32x128xbf16>
    %356 = vector.shape_cast %355 : vector<1x32x128xbf16> to vector<32x128xbf16>
    %cst_126 = arith.constant dense<0.000000e+00> : vector<8x128xf32>
    %357 = tpu.matmul %354, %356, %cst_126 {dimension_numbers = #tpu.dot_dimension_numbers<[1], [0], [0], [1], [0, 0, 1, 1], [], []>} : vector<8x32xbf16>, vector<32x128xbf16>, vector<8x128xf32> -> vector<8x128xf32>
    %c1_127 = arith.constant 1 : index
    %c0_128 = arith.constant 0 : index
    %c0_129 = arith.constant 0 : index
    %358 = vector.load %arg12[%c1_127, %c0_128, %c0_129] : memref<2x1x128xf32, #tpu.memory_space<vmem>>, vector<1x1x128xf32>
    %359 = vector.shape_cast %358 : vector<1x1x128xf32> to vector<1x128xf32>
    %360 = vector.broadcast %359 : vector<1x128xf32> to vector<8x128xf32>
    %361 = arith.addf %357, %360 : vector<8x128xf32>
    %362 = arith.mulf %361, %361 : vector<8x128xf32>
    %363 = arith.mulf %361, %362 : vector<8x128xf32>
    %cst_130 = arith.constant 4.471500e-02 : f32
    %364 = vector.broadcast %cst_130 : f32 to vector<8x128xf32>
    %365 = arith.mulf %364, %363 : vector<8x128xf32>
    %366 = arith.addf %361, %365 : vector<8x128xf32>
    %cst_131 = arith.constant 0.797884583 : f32
    %367 = vector.broadcast %cst_131 : f32 to vector<8x128xf32>
    %368 = arith.mulf %367, %366 : vector<8x128xf32>
    %369 = math.tanh %368 : vector<8x128xf32>
    %cst_132 = arith.constant 1.000000e+00 : f32
    %370 = vector.broadcast %cst_132 : f32 to vector<8x128xf32>
    %371 = arith.addf %370, %369 : vector<8x128xf32>
    %cst_133 = arith.constant 5.000000e-01 : f32
    %372 = vector.broadcast %cst_133 : f32 to vector<8x128xf32>
    %373 = arith.mulf %372, %371 : vector<8x128xf32>
    %374 = arith.mulf %361, %373 : vector<8x128xf32>
    %375 = arith.truncf %374 : vector<8x128xf32> to vector<8x128xbf16>
    %c1_134 = arith.constant 1 : index
    %c0_135 = arith.constant 0 : index
    %c0_136 = arith.constant 0 : index
    %376 = vector.load %arg13[%c1_134, %c0_135, %c0_136] : memref<2x128x32xbf16, #tpu.memory_space<vmem>>, vector<1x128x32xbf16>
    %377 = vector.shape_cast %376 : vector<1x128x32xbf16> to vector<128x32xbf16>
    %cst_137 = arith.constant dense<0.000000e+00> : vector<8x32xf32>
    %378 = tpu.matmul %375, %377, %cst_137 {dimension_numbers = #tpu.dot_dimension_numbers<[1], [0], [0], [1], [0, 0, 1, 1], [], []>} : vector<8x128xbf16>, vector<128x32xbf16>, vector<8x32xf32> -> vector<8x32xf32>
    %c1_138 = arith.constant 1 : index
    %c0_139 = arith.constant 0 : index
    %c0_140 = arith.constant 0 : index
    %379 = vector.load %arg14[%c1_138, %c0_139, %c0_140] : memref<2x1x32xf32, #tpu.memory_space<vmem>>, vector<1x1x32xf32>
    %380 = vector.shape_cast %379 : vector<1x1x32xf32> to vector<1x32xf32>
    %381 = vector.broadcast %380 : vector<1x32xf32> to vector<8x32xf32>
    %382 = arith.addf %378, %381 : vector<8x32xf32>
    %383 = arith.addf %382, %353 : vector<8x32xf32>
    %c1_141 = arith.constant 1 : index
    %c0_142 = arith.constant 0 : index
    %c0_143 = arith.constant 0 : index
    %384 = vector.load %arg15[%c1_141, %c0_142, %c0_143] : memref<2x1x32xf32, #tpu.memory_space<vmem>>, vector<1x1x32xf32>
    %385 = vector.shape_cast %384 : vector<1x1x32xf32> to vector<1x32xf32>
    %c1_144 = arith.constant 1 : index
    %c0_145 = arith.constant 0 : index
    %c0_146 = arith.constant 0 : index
    %386 = vector.load %arg16[%c1_144, %c0_145, %c0_146] : memref<2x1x32xf32, #tpu.memory_space<vmem>>, vector<1x1x32xf32>
    %387 = vector.shape_cast %386 : vector<1x1x32xf32> to vector<1x32xf32>
    %cst_147 = arith.constant dense<0.000000e+00> : vector<8xf32>
    %388 = vector.multi_reduction <add>, %383, %cst_147 [1] : vector<8x32xf32> to vector<8xf32>
    %389 = vector.shape_cast %388 : vector<8xf32> to vector<8x1xf32>
    %cst_148 = arith.constant 3.200000e+01 : f32
    %390 = vector.broadcast %cst_148 : f32 to vector<8x1xf32>
    %391 = arith.divf %389, %390 : vector<8x1xf32>
    %392 = vector.broadcast %391 : vector<8x1xf32> to vector<8x32xf32>
    %393 = arith.subf %383, %392 : vector<8x32xf32>
    %394 = arith.mulf %393, %393 : vector<8x32xf32>
    %cst_149 = arith.constant dense<0.000000e+00> : vector<8xf32>
    %395 = vector.multi_reduction <add>, %394, %cst_149 [1] : vector<8x32xf32> to vector<8xf32>
    %396 = vector.shape_cast %395 : vector<8xf32> to vector<8x1xf32>
    %cst_150 = arith.constant 3.200000e+01 : f32
    %397 = vector.broadcast %cst_150 : f32 to vector<8x1xf32>
    %398 = arith.divf %396, %397 : vector<8x1xf32>
    %399 = vector.broadcast %391 : vector<8x1xf32> to vector<8x32xf32>
    %400 = arith.subf %383, %399 : vector<8x32xf32>
    %cst_151 = arith.constant 9.99999996E-13 : f32
    %401 = vector.broadcast %cst_151 : f32 to vector<8x1xf32>
    %402 = arith.addf %398, %401 : vector<8x1xf32>
    %403 = math.rsqrt %402 : vector<8x1xf32>
    %404 = vector.broadcast %403 : vector<8x1xf32> to vector<8x32xf32>
    %405 = arith.mulf %400, %404 : vector<8x32xf32>
    %406 = vector.broadcast %385 : vector<1x32xf32> to vector<8x32xf32>
    %407 = arith.mulf %405, %406 : vector<8x32xf32>
    %408 = vector.broadcast %387 : vector<1x32xf32> to vector<8x32xf32>
    %409 = arith.addf %407, %408 : vector<8x32xf32>
    %410 = arith.truncf %409 : vector<8x32xf32> to vector<8x32xbf16>
    %c0_152 = arith.constant 0 : index
    %c0_153 = arith.constant 0 : index
    %411 = vector.load %arg17[%c0_152, %c0_153] : memref<32x32xbf16, #tpu.memory_space<vmem>>, vector<32x32xbf16>
    %cst_154 = arith.constant dense<0.000000e+00> : vector<8x32xf32>
    %412 = tpu.matmul %410, %411, %cst_154 {dimension_numbers = #tpu.dot_dimension_numbers<[1], [0], [0], [1], [0, 0, 1, 1], [], []>} : vector<8x32xbf16>, vector<32x32xbf16>, vector<8x32xf32> -> vector<8x32xf32>
    %c0_155 = arith.constant 0 : index
    %c0_156 = arith.constant 0 : index
    %413 = vector.load %arg18[%c0_155, %c0_156] : memref<1x32xf32, #tpu.memory_space<vmem>>, vector<1x32xf32>
    %414 = vector.broadcast %413 : vector<1x32xf32> to vector<8x32xf32>
    %415 = arith.addf %412, %414 : vector<8x32xf32>
    %416 = math.tanh %415 : vector<8x32xf32>
    %417 = arith.truncf %416 : vector<8x32xf32> to vector<8x32xbf16>
    %c0_157 = arith.constant 0 : index
    %c0_158 = arith.constant 0 : index
    %418 = vector.load %arg19[%c0_157, %c0_158] : memref<32x128xbf16, #tpu.memory_space<vmem>>, vector<32x128xbf16>
    %cst_159 = arith.constant dense<0.000000e+00> : vector<8x128xf32>
    %419 = tpu.matmul %417, %418, %cst_159 {dimension_numbers = #tpu.dot_dimension_numbers<[1], [0], [0], [1], [0, 0, 1, 1], [], []>} : vector<8x32xbf16>, vector<32x128xbf16>, vector<8x128xf32> -> vector<8x128xf32>
    %c0_160 = arith.constant 0 : index
    %c0_161 = arith.constant 0 : index
    %420 = vector.load %arg20[%c0_160, %c0_161] : memref<1x128xf32, #tpu.memory_space<vmem>>, vector<1x128xf32>
    %421 = vector.broadcast %420 : vector<1x128xf32> to vector<8x128xf32>
    %422 = arith.addf %419, %421 : vector<8x128xf32>
    %423 = vector.extract_strided_slice %422 {offsets = [0, 0], sizes = [1, 128], strides = [1, 1]} : vector<8x128xf32> to vector<1x128xf32>
    %c0_162 = arith.constant 0 : index
    %c0_163 = arith.constant 0 : index
    %c0_164 = arith.constant 0 : index
    %424 = vector.load %arg21[%c0_162, %c0_163, %c0_164] : memref<1x1x128xf32, #tpu.memory_space<vmem>>, vector<1x1x128xf32>
    %425 = vector.shape_cast %424 : vector<1x1x128xf32> to vector<1x128xf32>
    %426 = vector.shape_cast %423 : vector<1x128xf32> to vector<1x1x128xf32>
    tpu.vector_store %arg21[%c0_162, %c0_163, %c0_164], %426 {strides = array<i32>} : memref<1x1x128xf32, #tpu.memory_space<vmem>>, vector<1x1x128xf32>,
    return
  }
  func.func @transform_0(%arg0: i32) -> (i32, i32, i32) {
    %c0_i32 = arith.constant 0 : i32
    %c0_i32_0 = arith.constant 0 : i32
    %c0_i32_1 = arith.constant 0 : i32
    return %arg0, %c0_i32, %c0_i32_0 : i32, i32, i32
  }
  func.func @transform_1(%arg0: i32) -> (i32, i32, i32) {
    %c0_i32 = arith.constant 0 : i32
    %c0_i32_0 = arith.constant 0 : i32
    %c0_i32_1 = arith.constant 0 : i32
    return %arg0, %c0_i32, %c0_i32_0 : i32, i32, i32
  }
  func.func @transform_2(%arg0: i32) -> (i32, i32) {
    %c0_i32 = arith.constant 0 : i32
    %c0_i32_0 = arith.constant 0 : i32
    %c0_i32_1 = arith.constant 0 : i32
    return %c0_i32, %c0_i32_0 : i32, i32
  }
  func.func @transform_3(%arg0: i32) -> (i32, i32) {
    %c0_i32 = arith.constant 0 : i32
    %c0_i32_0 = arith.constant 0 : i32
    %c0_i32_1 = arith.constant 0 : i32
    return %c0_i32, %c0_i32_0 : i32, i32
  }
  func.func @transform_4(%arg0: i32) -> (i32, i32, i32) {
    %c0_i32 = arith.constant 0 : i32
    %c0_i32_0 = arith.constant 0 : i32
    %c0_i32_1 = arith.constant 0 : i32
    %c0_i32_2 = arith.constant 0 : i32
    return %c0_i32, %c0_i32_0, %c0_i32_1 : i32, i32, i32
  }
  func.func @transform_5(%arg0: i32) -> (i32, i32, i32) {
    %c0_i32 = arith.constant 0 : i32
    %c0_i32_0 = arith.constant 0 : i32
    %c0_i32_1 = arith.constant 0 : i32
    %c0_i32_2 = arith.constant 0 : i32
    return %c0_i32, %c0_i32_0, %c0_i32_1 : i32, i32, i32
  }
  func.func @transform_6(%arg0: i32) -> (i32, i32, i32) {
    %c0_i32 = arith.constant 0 : i32
    %c0_i32_0 = arith.constant 0 : i32
    %c0_i32_1 = arith.constant 0 : i32
    %c0_i32_2 = arith.constant 0 : i32
    return %c0_i32, %c0_i32_0, %c0_i32_1 : i32, i32, i32
  }
  func.func @transform_7(%arg0: i32) -> (i32, i32, i32) {
    %c0_i32 = arith.constant 0 : i32
    %c0_i32_0 = arith.constant 0 : i32
    %c0_i32_1 = arith.constant 0 : i32
    %c0_i32_2 = arith.constant 0 : i32
    return %c0_i32, %c0_i32_0, %c0_i32_1 : i32, i32, i32
  }
  func.func @transform_8(%arg0: i32) -> (i32, i32, i32) {
    %c0_i32 = arith.constant 0 : i32
    %c0_i32_0 = arith.constant 0 : i32
    %c0_i32_1 = arith.constant 0 : i32
    %c0_i32_2 = arith.constant 0 : i32
    return %c0_i32, %c0_i32_0, %c0_i32_1 : i32, i32, i32
  }
  func.func @transform_9(%arg0: i32) -> (i32, i32, i32) {
    %c0_i32 = arith.constant 0 : i32
    %c0_i32_0 = arith.constant 0 : i32
    %c0_i32_1 = arith.constant 0 : i32
    %c0_i32_2 = arith.constant 0 : i32
    return %c0_i32, %c0_i32_0, %c0_i32_1 : i32, i32, i32
  }
  func.func @transform_10(%arg0: i32) -> (i32, i32, i32) {
    %c0_i32 = arith.constant 0 : i32
    %c0_i32_0 = arith.constant 0 : i32
    %c0_i32_1 = arith.constant 0 : i32
    %c0_i32_2 = arith.constant 0 : i32
    return %c0_i32, %c0_i32_0, %c0_i32_1 : i32, i32, i32
  }
  func.func @transform_11(%arg0: i32) -> (i32, i32, i32) {
    %c0_i32 = arith.constant 0 : i32
    %c0_i32_0 = arith.constant 0 : i32
    %c0_i32_1 = arith.constant 0 : i32
    %c0_i32_2 = arith.constant 0 : i32
    return %c0_i32, %c0_i32_0, %c0_i32_1 : i32, i32, i32
  }
  func.func @transform_12(%arg0: i32) -> (i32, i32, i32) {
    %c0_i32 = arith.constant 0 : i32
    %c0_i32_0 = arith.constant 0 : i32
    %c0_i32_1 = arith.constant 0 : i32
    %c0_i32_2 = arith.constant 0 : i32
    return %c0_i32, %c0_i32_0, %c0_i32_1 : i32, i32, i32
  }
  func.func @transform_13(%arg0: i32) -> (i32, i32, i32) {
    %c0_i32 = arith.constant 0 : i32
    %c0_i32_0 = arith.constant 0 : i32
    %c0_i32_1 = arith.constant 0 : i32
    %c0_i32_2 = arith.constant 0 : i32
    return %c0_i32, %c0_i32_0, %c0_i32_1 : i32, i32, i32
  }
  func.func @transform_14(%arg0: i32) -> (i32, i32, i32) {
    %c0_i32 = arith.constant 0 : i32
    %c0_i32_0 = arith.constant 0 : i32
    %c0_i32_1 = arith.constant 0 : i32
    %c0_i32_2 = arith.constant 0 : i32
    return %c0_i32, %c0_i32_0, %c0_i32_1 : i32, i32, i32
  }
  func.func @transform_15(%arg0: i32) -> (i32, i32, i32) {
    %c0_i32 = arith.constant 0 : i32
    %c0_i32_0 = arith.constant 0 : i32
    %c0_i32_1 = arith.constant 0 : i32
    %c0_i32_2 = arith.constant 0 : i32
    return %c0_i32, %c0_i32_0, %c0_i32_1 : i32, i32, i32
  }
  func.func @transform_16(%arg0: i32) -> (i32, i32) {
    %c0_i32 = arith.constant 0 : i32
    %c0_i32_0 = arith.constant 0 : i32
    %c0_i32_1 = arith.constant 0 : i32
    return %c0_i32, %c0_i32_0 : i32, i32
  }
  func.func @transform_17(%arg0: i32) -> (i32, i32) {
    %c0_i32 = arith.constant 0 : i32
    %c0_i32_0 = arith.constant 0 : i32
    %c0_i32_1 = arith.constant 0 : i32
    return %c0_i32, %c0_i32_0 : i32, i32
  }
  func.func @transform_18(%arg0: i32) -> (i32, i32) {
    %c0_i32 = arith.constant 0 : i32
    %c0_i32_0 = arith.constant 0 : i32
    %c0_i32_1 = arith.constant 0 : i32
    return %c0_i32, %c0_i32_0 : i32, i32
  }
  func.func @transform_19(%arg0: i32) -> (i32, i32) {
    %c0_i32 = arith.constant 0 : i32
    %c0_i32_0 = arith.constant 0 : i32
    %c0_i32_1 = arith.constant 0 : i32
    return %c0_i32, %c0_i32_0 : i32, i32
  }
  func.func @transform_20(%arg0: i32) -> (i32, i32, i32) {
    %c0_i32 = arith.constant 0 : i32
    %c0_i32_0 = arith.constant 0 : i32
    %c0_i32_1 = arith.constant 0 : i32
    return %arg0, %c0_i32, %c0_i32_0 : i32, i32, i32
  }
}

</mosaic_0001>

<llo_original>
// kernel: bert_class_forward.1
$region0: #{bert_class_forward.1}
  #allocation0 [shape = 'u32[]', space=smem, size = 0x4, offset = 0x4, fixed_abs, tag = 'smem constant byte address 0x4 - core index']
  #allocation1 [shape = 'u32[144,128]{1,0:T(1,128)}', space=vmem, size = 0x12000, scoped, tag = 'internal scratch']
  %s0 = inlined_call_operand.vmem [shape: f32[2,8,32], index: 0, kind: input, shape index: {}]
  %s1 = inlined_call_operand.vmem [shape: f32[2,1,8], index: 1, kind: input, shape index: {}]
  %s2 = inlined_call_operand.vmem [shape: f32[1,32], index: 2, kind: input, shape index: {}]
  %s3 = inlined_call_operand.vmem [shape: f32[1,32], index: 3, kind: input, shape index: {}]
  %s4 = inlined_call_operand.vmem [shape: bf16[2,32,96], index: 4, kind: input, shape index: {}]
  %s5 = inlined_call_operand.vmem [shape: f32[2,1,96], index: 5, kind: input, shape index: {}]
  %s6 = inlined_call_operand.vmem [shape: bf16[2,32,32], index: 6, kind: input, shape index: {}]
  %s7 = inlined_call_operand.vmem [shape: f32[2,1,32], index: 7, kind: input, shape index: {}]
  %s8 = inlined_call_operand.vmem [shape: f32[2,1,32], index: 8, kind: input, shape index: {}]
  %s9 = inlined_call_operand.vmem [shape: f32[2,1,32], index: 9, kind: input, shape index: {}]
  %s10 = inlined_call_operand.vmem [shape: bf16[2,32,128], index: 10, kind: input, shape index: {}]
  %s11 = inlined_call_operand.vmem [shape: f32[2,1,128], index: 11, kind: input, shape index: {}]
  %s12 = inlined_call_operand.vmem [shape: bf16[2,128,32], index: 12, kind: input, shape index: {}]
  %s13 = inlined_call_operand.vmem [shape: f32[2,1,32], index: 13, kind: input, shape index: {}]
  %s14 = inlined_call_operand.vmem [shape: f32[2,1,32], index: 14, kind: input, shape index: {}]
  %s15 = inlined_call_operand.vmem [shape: f32[2,1,32], index: 15, kind: input, shape index: {}]
  %s16 = inlined_call_operand.vmem [shape: bf16[32,32], index: 16, kind: input, shape index: {}]
  %s17 = inlined_call_operand.vmem [shape: f32[1,32], index: 17, kind: input, shape index: {}]
  %s18 = inlined_call_operand.vmem [shape: bf16[32,128], index: 18, kind: input, shape index: {}]
  %s19 = inlined_call_operand.vmem [shape: f32[1,128], index: 19, kind: input, shape index: {}]
  %s20 = inlined_call_operand.hbm [shape: f32[2,1,128], index: 20, kind: output, shape index: {}]
  %s21 = sld [smem:[#allocation0]]
  $region113: #{bert_class_forward.1} parent=0
    _
  %s23 = ssub.s32 1, %s21
  %s24 = scalar_select 0, %s23, %s21
  $region1: #{bert_class_forward.1} parent=0
    #allocation2 [shape = 'u8[1024]{0}', space=vmem, size = 0x400, scoped, tag = 'output window, operand 0']
    #allocation3 [shape = 's32[2]{0}', space=sflag, size = 0x8, scoped, tag = 'scoped memory for bert_class_forward.1']
    %25 = vsyncpa [#allocation3], 0
    %s26 = scalar_lea.sflag [#allocation3], 1
    %27 = vsyncpa %s26, 0
    loop: start=0, step=1, limit=4
    $region2: #{bert_class_forward.1} parent=1 // loop_pre_header
      _
    $region3: #{bert_class_forward.1} parent=1 // loop_header
      %s29 = sphi 0, %s33
      %p30 = scmp.ge.s32.totalorder %s29, 4
      %s39 = sphi 0, %s41
      %s42 = sphi 0, %s39
      %s43 = sphi 0, %s42
      %s59 = sphi 0, %s43
      %s65 = sphi 0, %s67
      %s68 = sphi 0, %s65
      %s69 = sphi 0, %s68
      %s85 = sphi 0, %s69
      %s89 = sphi 0, %s89
      %s91 = sphi 0, %s89
      %s92 = sphi 0, %s91
      %s106 = sphi 0, %s92
      %s110 = sphi 0, %s110
      %s112 = sphi 0, %s110
      %s113 = sphi 0, %s112
      %s127 = sphi 0, %s113
      %s131 = sphi 0, %s131
      %s133 = sphi 0, %s131
      %s134 = sphi 0, %s133
      %s148 = sphi 0, %s134
      %s152 = sphi 0, %s152
      %s154 = sphi 0, %s152
      %s155 = sphi 0, %s154
      %s169 = sphi 0, %s155
      %s173 = sphi 0, %s173
      %s175 = sphi 0, %s173
      %s176 = sphi 0, %s175
      %s190 = sphi 0, %s176
      %s194 = sphi 0, %s194
      %s196 = sphi 0, %s194
      %s197 = sphi 0, %s196
      %s211 = sphi 0, %s197
      %s215 = sphi 0, %s215
      %s217 = sphi 0, %s215
      %s218 = sphi 0, %s217
      %s232 = sphi 0, %s218
      %s236 = sphi 0, %s236
      %s238 = sphi 0, %s236
      %s239 = sphi 0, %s238
      %s253 = sphi 0, %s239
      %s257 = sphi 0, %s257
      %s259 = sphi 0, %s257
      %s260 = sphi 0, %s259
      %s274 = sphi 0, %s260
      %s278 = sphi 0, %s278
      %s280 = sphi 0, %s278
      %s281 = sphi 0, %s280
      %s295 = sphi 0, %s281
      %s299 = sphi 0, %s299
      %s301 = sphi 0, %s299
      %s302 = sphi 0, %s301
      %s316 = sphi 0, %s302
      %s320 = sphi 0, %s320
      %s322 = sphi 0, %s320
      %s323 = sphi 0, %s322
      %s337 = sphi 0, %s323
      %s341 = sphi 0, %s341
      %s343 = sphi 0, %s341
      %s344 = sphi 0, %s343
      %s358 = sphi 0, %s344
      %s362 = sphi 0, %s362
      %s364 = sphi 0, %s362
      %s365 = sphi 0, %s364
      %s379 = sphi 0, %s365
      %s383 = sphi 0, %s383
      %s385 = sphi 0, %s383
      %s386 = sphi 0, %s385
      %s400 = sphi 0, %s386
      %s404 = sphi 0, %s404
      %s406 = sphi 0, %s404
      %s407 = sphi 0, %s406
      %s421 = sphi 0, %s407
      %s425 = sphi 0, %s425
      %s427 = sphi 0, %s425
      %s428 = sphi 0, %s427
      %s442 = sphi 0, %s428
      %s446 = sphi 0, %s446
      %s448 = sphi 0, %s446
      %s449 = sphi 0, %s448
      %s463 = sphi 0, %s449
      %s469 = sphi 0, %s471
      %s472 = sphi 0, %s469
      %s473 = sphi 0, %s472
      %s489 = sphi 0, %s473
    $region4: #{bert_class_forward.1} parent=1 // loop_header_branch
      %32 = sbr.rel (%p30) target = $region8
    $region5: #{bert_class_forward.1} parent=1 // loop_body
      %s34 = ssub.s32 %s29, 1
      %s35 = ssub.s32 %s29, 2
      %s36 = sadd.s32 %s29, 1
      %s37 = ssub.s32 %s29, %s36
      %p38 = scmp.eq.s32.totalorder %s37, 0
      %s40 = sadd.s32 %s39, 1
      %s41 = scalar_select %p38, %s39, %s40
      %p44 = pneg %p38
      %p45 = scmp.eq.s32.totalorder %s29, 1
      %p46 = por %p44, %p45
      %p47 = scmp.ne.s32.totalorder %s39, %s42
      %p48 = scmp.eq.s32.totalorder %s29, 0
      %p49 = por %p47, %p48
      %p50 = scmp.ne.s32.totalorder %s39, %s42
      %p51 = scmp.eq.s32.totalorder %s34, 1
      %p52 = por %p50, %p51
      %p53 = scmp.ne.s32.totalorder %s42, %s43
      %p54 = scmp.eq.s32.totalorder %s34, 0
      %p55 = por %p53, %p54
      %p56 = scmp.ne.s32.totalorder %s42, %s43
      %p57 = scmp.eq.s32.totalorder %s35, 1
      %p58 = por %p56, %p57
      %p60 = scmp.ne.s32.totalorder %s43, %s59
      %p61 = scmp.eq.s32.totalorder %s35, 0
      %p62 = por %p60, %p61
      %s63 = ssub.s32 %s29, %s36
      %p64 = scmp.eq.s32.totalorder %s63, 0
      %s66 = sadd.s32 %s65, 1
      %s67 = scalar_select %p64, %s65, %s66
      %p70 = pneg %p64
      %p71 = scmp.eq.s32.totalorder %s29, 1
      %p72 = por %p70, %p71
      %p73 = scmp.ne.s32.totalorder %s65, %s68
      %p74 = scmp.eq.s32.totalorder %s29, 0
      %p75 = por %p73, %p74
      %p76 = scmp.ne.s32.totalorder %s65, %s68
      %p77 = scmp.eq.s32.totalorder %s34, 1
      %p78 = por %p76, %p77
      %p79 = scmp.ne.s32.totalorder %s68, %s69
      %p80 = scmp.eq.s32.totalorder %s34, 0
      %p81 = por %p79, %p80
      %p82 = scmp.ne.s32.totalorder %s68, %s69
      %p83 = scmp.eq.s32.totalorder %s35, 1
      %p84 = por %p82, %p83
      %p86 = scmp.ne.s32.totalorder %s69, %s85
      %p87 = scmp.eq.s32.totalorder %s35, 0
      %p88 = por %p86, %p87
      %s90 = sadd.s32 %s89, 1
      %p93 = scmp.eq.s32.totalorder %s29, 1
      %p94 = scmp.ne.s32.totalorder %s89, %s91
      %p95 = scmp.eq.s32.totalorder %s29, 0
      %p96 = por %p94, %p95
      %p97 = scmp.ne.s32.totalorder %s89, %s91
      %p98 = scmp.eq.s32.totalorder %s34, 1
      %p99 = por %p97, %p98
      %p100 = scmp.ne.s32.totalorder %s91, %s92
      %p101 = scmp.eq.s32.totalorder %s34, 0
      %p102 = por %p100, %p101
      %p103 = scmp.ne.s32.totalorder %s91, %s92
      %p104 = scmp.eq.s32.totalorder %s35, 1
      %p105 = por %p103, %p104
      %p107 = scmp.ne.s32.totalorder %s92, %s106
      %p108 = scmp.eq.s32.totalorder %s35, 0
      %p109 = por %p107, %p108
      %s111 = sadd.s32 %s110, 1
      %p114 = scmp.eq.s32.totalorder %s29, 1
      %p115 = scmp.ne.s32.totalorder %s110, %s112
      %p116 = scmp.eq.s32.totalorder %s29, 0
      %p117 = por %p115, %p116
      %p118 = scmp.ne.s32.totalorder %s110, %s112
      %p119 = scmp.eq.s32.totalorder %s34, 1
      %p120 = por %p118, %p119
      %p121 = scmp.ne.s32.totalorder %s112, %s113
      %p122 = scmp.eq.s32.totalorder %s34, 0
      %p123 = por %p121, %p122
      %p124 = scmp.ne.s32.totalorder %s112, %s113
      %p125 = scmp.eq.s32.totalorder %s35, 1
      %p126 = por %p124, %p125
      %p128 = scmp.ne.s32.totalorder %s113, %s127
      %p129 = scmp.eq.s32.totalorder %s35, 0
      %p130 = por %p128, %p129
      %s132 = sadd.s32 %s131, 1
      %p135 = scmp.eq.s32.totalorder %s29, 1
      %p136 = scmp.ne.s32.totalorder %s131, %s133
      %p137 = scmp.eq.s32.totalorder %s29, 0
      %p138 = por %p136, %p137
      %p139 = scmp.ne.s32.totalorder %s131, %s133
      %p140 = scmp.eq.s32.totalorder %s34, 1
      %p141 = por %p139, %p140
      %p142 = scmp.ne.s32.totalorder %s133, %s134
      %p143 = scmp.eq.s32.totalorder %s34, 0
      %p144 = por %p142, %p143
      %p145 = scmp.ne.s32.totalorder %s133, %s134
      %p146 = scmp.eq.s32.totalorder %s35, 1
      %p147 = por %p145, %p146
      %p149 = scmp.ne.s32.totalorder %s134, %s148
      %p150 = scmp.eq.s32.totalorder %s35, 0
      %p151 = por %p149, %p150
      %s153 = sadd.s32 %s152, 1
      %p156 = scmp.eq.s32.totalorder %s29, 1
      %p157 = scmp.ne.s32.totalorder %s152, %s154
      %p158 = scmp.eq.s32.totalorder %s29, 0
      %p159 = por %p157, %p158
      %p160 = scmp.ne.s32.totalorder %s152, %s154
      %p161 = scmp.eq.s32.totalorder %s34, 1
      %p162 = por %p160, %p161
      %p163 = scmp.ne.s32.totalorder %s154, %s155
      %p164 = scmp.eq.s32.totalorder %s34, 0
      %p165 = por %p163, %p164
      %p166 = scmp.ne.s32.totalorder %s154, %s155
      %p167 = scmp.eq.s32.totalorder %s35, 1
      %p168 = por %p166, %p167
      %p170 = scmp.ne.s32.totalorder %s155, %s169
      %p171 = scmp.eq.s32.totalorder %s35, 0
      %p172 = por %p170, %p171
      %s174 = sadd.s32 %s173, 1
      %p177 = scmp.eq.s32.totalorder %s29, 1
      %p178 = scmp.ne.s32.totalorder %s173, %s175
      %p179 = scmp.eq.s32.totalorder %s29, 0
      %p180 = por %p178, %p179
      %p181 = scmp.ne.s32.totalorder %s173, %s175
      %p182 = scmp.eq.s32.totalorder %s34, 1
      %p183 = por %p181, %p182
      %p184 = scmp.ne.s32.totalorder %s175, %s176
      %p185 = scmp.eq.s32.totalorder %s34, 0
      %p186 = por %p184, %p185
      %p187 = scmp.ne.s32.totalorder %s175, %s176
      %p188 = scmp.eq.s32.totalorder %s35, 1
      %p189 = por %p187, %p188
      %p191 = scmp.ne.s32.totalorder %s176, %s190
      %p192 = scmp.eq.s32.totalorder %s35, 0
      %p193 = por %p191, %p192
      %s195 = sadd.s32 %s194, 1
      %p198 = scmp.eq.s32.totalorder %s29, 1
      %p199 = scmp.ne.s32.totalorder %s194, %s196
      %p200 = scmp.eq.s32.totalorder %s29, 0
      %p201 = por %p199, %p200
      %p202 = scmp.ne.s32.totalorder %s194, %s196
      %p203 = scmp.eq.s32.totalorder %s34, 1
      %p204 = por %p202, %p203
      %p205 = scmp.ne.s32.totalorder %s196, %s197
      %p206 = scmp.eq.s32.totalorder %s34, 0
      %p207 = por %p205, %p206
      %p208 = scmp.ne.s32.totalorder %s196, %s197
      %p209 = scmp.eq.s32.totalorder %s35, 1
      %p210 = por %p208, %p209
      %p212 = scmp.ne.s32.totalorder %s197, %s211
      %p213 = scmp.eq.s32.totalorder %s35, 0
      %p214 = por %p212, %p213
      %s216 = sadd.s32 %s215, 1
      %p219 = scmp.eq.s32.totalorder %s29, 1
      %p220 = scmp.ne.s32.totalorder %s215, %s217
      %p221 = scmp.eq.s32.totalorder %s29, 0
      %p222 = por %p220, %p221
      %p223 = scmp.ne.s32.totalorder %s215, %s217
      %p224 = scmp.eq.s32.totalorder %s34, 1
      %p225 = por %p223, %p224
      %p226 = scmp.ne.s32.totalorder %s217, %s218
      %p227 = scmp.eq.s32.totalorder %s34, 0
      %p228 = por %p226, %p227
      %p229 = scmp.ne.s32.totalorder %s217, %s218
      %p230 = scmp.eq.s32.totalorder %s35, 1
      %p231 = por %p229, %p230
      %p233 = scmp.ne.s32.totalorder %s218, %s232
      %p234 = scmp.eq.s32.totalorder %s35, 0
      %p235 = por %p233, %p234
      %s237 = sadd.s32 %s236, 1
      %p240 = scmp.eq.s32.totalorder %s29, 1
      %p241 = scmp.ne.s32.totalorder %s236, %s238
      %p242 = scmp.eq.s32.totalorder %s29, 0
      %p243 = por %p241, %p242
      %p244 = scmp.ne.s32.totalorder %s236, %s238
      %p245 = scmp.eq.s32.totalorder %s34, 1
      %p246 = por %p244, %p245
      %p247 = scmp.ne.s32.totalorder %s238, %s239
      %p248 = scmp.eq.s32.totalorder %s34, 0
      %p249 = por %p247, %p248
      %p250 = scmp.ne.s32.totalorder %s238, %s239
      %p251 = scmp.eq.s32.totalorder %s35, 1
      %p252 = por %p250, %p251
      %p254 = scmp.ne.s32.totalorder %s239, %s253
      %p255 = scmp.eq.s32.totalorder %s35, 0
      %p256 = por %p254, %p255
      %s258 = sadd.s32 %s257, 1
      %p261 = scmp.eq.s32.totalorder %s29, 1
      %p262 = scmp.ne.s32.totalorder %s257, %s259
      %p263 = scmp.eq.s32.totalorder %s29, 0
      %p264 = por %p262, %p263
      %p265 = scmp.ne.s32.totalorder %s257, %s259
      %p266 = scmp.eq.s32.totalorder %s34, 1
      %p267 = por %p265, %p266
      %p268 = scmp.ne.s32.totalorder %s259, %s260
      %p269 = scmp.eq.s32.totalorder %s34, 0
      %p270 = por %p268, %p269
      %p271 = scmp.ne.s32.totalorder %s259, %s260
      %p272 = scmp.eq.s32.totalorder %s35, 1
      %p273 = por %p271, %p272
      %p275 = scmp.ne.s32.totalorder %s260, %s274
      %p276 = scmp.eq.s32.totalorder %s35, 0
      %p277 = por %p275, %p276
      %s279 = sadd.s32 %s278, 1
      %p282 = scmp.eq.s32.totalorder %s29, 1
      %p283 = scmp.ne.s32.totalorder %s278, %s280
      %p284 = scmp.eq.s32.totalorder %s29, 0
      %p285 = por %p283, %p284
      %p286 = scmp.ne.s32.totalorder %s278, %s280
      %p287 = scmp.eq.s32.totalorder %s34, 1
      %p288 = por %p286, %p287
      %p289 = scmp.ne.s32.totalorder %s280, %s281
      %p290 = scmp.eq.s32.totalorder %s34, 0
      %p291 = por %p289, %p290
      %p292 = scmp.ne.s32.totalorder %s280, %s281
      %p293 = scmp.eq.s32.totalorder %s35, 1
      %p294 = por %p292, %p293
      %p296 = scmp.ne.s32.totalorder %s281, %s295
      %p297 = scmp.eq.s32.totalorder %s35, 0
      %p298 = por %p296, %p297
      %s300 = sadd.s32 %s299, 1
      %p303 = scmp.eq.s32.totalorder %s29, 1
      %p304 = scmp.ne.s32.totalorder %s299, %s301
      %p305 = scmp.eq.s32.totalorder %s29, 0
      %p306 = por %p304, %p305
      %p307 = scmp.ne.s32.totalorder %s299, %s301
      %p308 = scmp.eq.s32.totalorder %s34, 1
      %p309 = por %p307, %p308
      %p310 = scmp.ne.s32.totalorder %s301, %s302
      %p311 = scmp.eq.s32.totalorder %s34, 0
      %p312 = por %p310, %p311
      %p313 = scmp.ne.s32.totalorder %s301, %s302
      %p314 = scmp.eq.s32.totalorder %s35, 1
      %p315 = por %p313, %p314
      %p317 = scmp.ne.s32.totalorder %s302, %s316
      %p318 = scmp.eq.s32.totalorder %s35, 0
      %p319 = por %p317, %p318
      %s321 = sadd.s32 %s320, 1
      %p324 = scmp.eq.s32.totalorder %s29, 1
      %p325 = scmp.ne.s32.totalorder %s320, %s322
      %p326 = scmp.eq.s32.totalorder %s29, 0
      %p327 = por %p325, %p326
      %p328 = scmp.ne.s32.totalorder %s320, %s322
      %p329 = scmp.eq.s32.totalorder %s34, 1
      %p330 = por %p328, %p329
      %p331 = scmp.ne.s32.totalorder %s322, %s323
      %p332 = scmp.eq.s32.totalorder %s34, 0
      %p333 = por %p331, %p332
      %p334 = scmp.ne.s32.totalorder %s322, %s323
      %p335 = scmp.eq.s32.totalorder %s35, 1
      %p336 = por %p334, %p335
      %p338 = scmp.ne.s32.totalorder %s323, %s337
      %p339 = scmp.eq.s32.totalorder %s35, 0
      %p340 = por %p338, %p339
      %s342 = sadd.s32 %s341, 1
      %p345 = scmp.eq.s32.totalorder %s29, 1
      %p346 = scmp.ne.s32.totalorder %s341, %s343
      %p347 = scmp.eq.s32.totalorder %s29, 0
      %p348 = por %p346, %p347
      %p349 = scmp.ne.s32.totalorder %s341, %s343
      %p350 = scmp.eq.s32.totalorder %s34, 1
      %p351 = por %p349, %p350
      %p352 = scmp.ne.s32.totalorder %s343, %s344
      %p353 = scmp.eq.s32.totalorder %s34, 0
      %p354 = por %p352, %p353
      %p355 = scmp.ne.s32.totalorder %s343, %s344
      %p356 = scmp.eq.s32.totalorder %s35, 1
      %p357 = por %p355, %p356
      %p359 = scmp.ne.s32.totalorder %s344, %s358
      %p360 = scmp.eq.s32.totalorder %s35, 0
      %p361 = por %p359, %p360
      %s363 = sadd.s32 %s362, 1
      %p366 = scmp.eq.s32.totalorder %s29, 1
      %p367 = scmp.ne.s32.totalorder %s362, %s364
      %p368 = scmp.eq.s32.totalorder %s29, 0
      %p369 = por %p367, %p368
      %p370 = scmp.ne.s32.totalorder %s362, %s364
      %p371 = scmp.eq.s32.totalorder %s34, 1
      %p372 = por %p370, %p371
      %p373 = scmp.ne.s32.totalorder %s364, %s365
      %p374 = scmp.eq.s32.totalorder %s34, 0
      %p375 = por %p373, %p374
      %p376 = scmp.ne.s32.totalorder %s364, %s365
      %p377 = scmp.eq.s32.totalorder %s35, 1
      %p378 = por %p376, %p377
      %p380 = scmp.ne.s32.totalorder %s365, %s379
      %p381 = scmp.eq.s32.totalorder %s35, 0
      %p382 = por %p380, %p381
      %s384 = sadd.s32 %s383, 1
      %p387 = scmp.eq.s32.totalorder %s29, 1
      %p388 = scmp.ne.s32.totalorder %s383, %s385
      %p389 = scmp.eq.s32.totalorder %s29, 0
      %p390 = por %p388, %p389
      %p391 = scmp.ne.s32.totalorder %s383, %s385
      %p392 = scmp.eq.s32.totalorder %s34, 1
      %p393 = por %p391, %p392
      %p394 = scmp.ne.s32.totalorder %s385, %s386
      %p395 = scmp.eq.s32.totalorder %s34, 0
      %p396 = por %p394, %p395
      %p397 = scmp.ne.s32.totalorder %s385, %s386
      %p398 = scmp.eq.s32.totalorder %s35, 1
      %p399 = por %p397, %p398
      %p401 = scmp.ne.s32.totalorder %s386, %s400
      %p402 = scmp.eq.s32.totalorder %s35, 0
      %p403 = por %p401, %p402
      %s405 = sadd.s32 %s404, 1
      %p408 = scmp.eq.s32.totalorder %s29, 1
      %p409 = scmp.ne.s32.totalorder %s404, %s406
      %p410 = scmp.eq.s32.totalorder %s29, 0
      %p411 = por %p409, %p410
      %p412 = scmp.ne.s32.totalorder %s404, %s406
      %p413 = scmp.eq.s32.totalorder %s34, 1
      %p414 = por %p412, %p413
      %p415 = scmp.ne.s32.totalorder %s406, %s407
      %p416 = scmp.eq.s32.totalorder %s34, 0
      %p417 = por %p415, %p416
      %p418 = scmp.ne.s32.totalorder %s406, %s407
      %p419 = scmp.eq.s32.totalorder %s35, 1
      %p420 = por %p418, %p419
      %p422 = scmp.ne.s32.totalorder %s407, %s421
      %p423 = scmp.eq.s32.totalorder %s35, 0
      %p424 = por %p422, %p423
      %s426 = sadd.s32 %s425, 1
      %p429 = scmp.eq.s32.totalorder %s29, 1
      %p430 = scmp.ne.s32.totalorder %s425, %s427
      %p431 = scmp.eq.s32.totalorder %s29, 0
      %p432 = por %p430, %p431
      %p433 = scmp.ne.s32.totalorder %s425, %s427
      %p434 = scmp.eq.s32.totalorder %s34, 1
      %p435 = por %p433, %p434
      %p436 = scmp.ne.s32.totalorder %s427, %s428
      %p437 = scmp.eq.s32.totalorder %s34, 0
      %p438 = por %p436, %p437
      %p439 = scmp.ne.s32.totalorder %s427, %s428
      %p440 = scmp.eq.s32.totalorder %s35, 1
      %p441 = por %p439, %p440
      %p443 = scmp.ne.s32.totalorder %s428, %s442
      %p444 = scmp.eq.s32.totalorder %s35, 0
      %p445 = por %p443, %p444
      %s447 = sadd.s32 %s446, 1
      %p450 = scmp.eq.s32.totalorder %s29, 1
      %p451 = scmp.ne.s32.totalorder %s446, %s448
      %p452 = scmp.eq.s32.totalorder %s29, 0
      %p453 = por %p451, %p452
      %p454 = scmp.ne.s32.totalorder %s446, %s448
      %p455 = scmp.eq.s32.totalorder %s34, 1
      %p456 = por %p454, %p455
      %p457 = scmp.ne.s32.totalorder %s448, %s449
      %p458 = scmp.eq.s32.totalorder %s34, 0
      %p459 = por %p457, %p458
      %p460 = scmp.ne.s32.totalorder %s448, %s449
      %p461 = scmp.eq.s32.totalorder %s35, 1
      %p462 = por %p460, %p461
      %p464 = scmp.ne.s32.totalorder %s449, %s463
      %p465 = scmp.eq.s32.totalorder %s35, 0
      %p466 = por %p464, %p465
      %s467 = ssub.s32 %s29, %s36
      %p468 = scmp.eq.s32.totalorder %s467, 0
      %s470 = sadd.s32 %s469, 1
      %s471 = scalar_select %p468, %s469, %s470
      %p474 = pneg %p468
      %p475 = scmp.eq.s32.totalorder %s29, 1
      %p476 = por %p474, %p475
      %p477 = scmp.ne.s32.totalorder %s469, %s472
      %p478 = scmp.eq.s32.totalorder %s29, 0
      %p479 = por %p477, %p478
      %p480 = scmp.ne.s32.totalorder %s469, %s472
      %p481 = scmp.eq.s32.totalorder %s34, 1
      %p482 = por %p480, %p481
      %p483 = scmp.ne.s32.totalorder %s472, %s473
      %p484 = scmp.eq.s32.totalorder %s34, 0
      %p485 = por %p483, %p484
      %p486 = scmp.ne.s32.totalorder %s472, %s473
      %p487 = scmp.eq.s32.totalorder %s35, 1
      %p488 = por %p486, %p487
      %p490 = scmp.ne.s32.totalorder %s473, %s489
      %p491 = scmp.eq.s32.totalorder %s35, 0
      %p492 = por %p490, %p491
      %p493 = scmp.le.s32.totalorder 1, %s29
      %p494 = scmp.lt.s32.totalorder %s29, 3
      %p495 = pnand %p493, %p494
      %p496 = pneg %p495
      // Predicated region
      $region9: #{bert_class_forward.1} parent=5 // pred_check
        _
      $region10: #{bert_class_forward.1} parent=5 // pred_check_branch
        %498 = sbr.rel (%p495) target = $region12
      $region11: #{bert_class_forward.1} parent=5 // pred_region
        %s499 = ssub.s32 %s29, 1
        // Predicated region
        $region13: #{bert_class_forward.1} parent=11 // pred_check
          %p500 = pneg %p102
        $region14: #{bert_class_forward.1} parent=11 // pred_check_branch
          %502 = sbr.rel (%p500) target = $region16
        $region15: #{bert_class_forward.1} parent=11 // pred_region
          _
        $region16: #{bert_class_forward.1} parent=11 // pred_fallthru
          _
        // Predicated region
        $region17: #{bert_class_forward.1} parent=11 // pred_check
          %p503 = pneg %p123
        $region18: #{bert_class_forward.1} parent=11 // pred_check_branch
          %505 = sbr.rel (%p503) target = $region20
        $region19: #{bert_class_forward.1} parent=11 // pred_region
          _
        $region20: #{bert_class_forward.1} parent=11 // pred_fallthru
          _
        // Predicated region
        $region21: #{bert_class_forward.1} parent=11 // pred_check
          %p506 = pneg %p144
        $region22: #{bert_class_forward.1} parent=11 // pred_check_branch
          %508 = sbr.rel (%p506) target = $region24
        $region23: #{bert_class_forward.1} parent=11 // pred_region
          _
        $region24: #{bert_class_forward.1} parent=11 // pred_fallthru
          _
        // Predicated region
        $region25: #{bert_class_forward.1} parent=11 // pred_check
          %p509 = pneg %p165
        $region26: #{bert_class_forward.1} parent=11 // pred_check_branch
          %511 = sbr.rel (%p509) target = $region28
        $region27: #{bert_class_forward.1} parent=11 // pred_region
          _
        $region28: #{bert_class_forward.1} parent=11 // pred_fallthru
          _
        // Predicated region
        $region29: #{bert_class_forward.1} parent=11 // pred_check
          %p512 = pneg %p186
        $region30: #{bert_class_forward.1} parent=11 // pred_check_branch
          %514 = sbr.rel (%p512) target = $region32
        $region31: #{bert_class_forward.1} parent=11 // pred_region
          _
        $region32: #{bert_class_forward.1} parent=11 // pred_fallthru
          _
        // Predicated region
        $region33: #{bert_class_forward.1} parent=11 // pred_check
          %p515 = pneg %p207
        $region34: #{bert_class_forward.1} parent=11 // pred_check_branch
          %517 = sbr.rel (%p515) target = $region36
        $region35: #{bert_class_forward.1} parent=11 // pred_region
          _
        $region36: #{bert_class_forward.1} parent=11 // pred_fallthru
          _
        // Predicated region
        $region37: #{bert_class_forward.1} parent=11 // pred_check
          %p518 = pneg %p228
        $region38: #{bert_class_forward.1} parent=11 // pred_check_branch
          %520 = sbr.rel (%p518) target = $region40
        $region39: #{bert_class_forward.1} parent=11 // pred_region
          _
        $region40: #{bert_class_forward.1} parent=11 // pred_fallthru
          _
        // Predicated region
        $region41: #{bert_class_forward.1} parent=11 // pred_check
          %p521 = pneg %p249
        $region42: #{bert_class_forward.1} parent=11 // pred_check_branch
          %523 = sbr.rel (%p521) target = $region44
        $region43: #{bert_class_forward.1} parent=11 // pred_region
          _
        $region44: #{bert_class_forward.1} parent=11 // pred_fallthru
          _
        // Predicated region
        $region45: #{bert_class_forward.1} parent=11 // pred_check
          %p524 = pneg %p270
        $region46: #{bert_class_forward.1} parent=11 // pred_check_branch
          %526 = sbr.rel (%p524) target = $region48
        $region47: #{bert_class_forward.1} parent=11 // pred_region
          _
        $region48: #{bert_class_forward.1} parent=11 // pred_fallthru
          _
        // Predicated region
        $region49: #{bert_class_forward.1} parent=11 // pred_check
          %p527 = pneg %p291
        $region50: #{bert_class_forward.1} parent=11 // pred_check_branch
          %529 = sbr.rel (%p527) target = $region52
        $region51: #{bert_class_forward.1} parent=11 // pred_region
          _
        $region52: #{bert_class_forward.1} parent=11 // pred_fallthru
          _
        // Predicated region
        $region53: #{bert_class_forward.1} parent=11 // pred_check
          %p530 = pneg %p312
        $region54: #{bert_class_forward.1} parent=11 // pred_check_branch
          %532 = sbr.rel (%p530) target = $region56
        $region55: #{bert_class_forward.1} parent=11 // pred_region
          _
        $region56: #{bert_class_forward.1} parent=11 // pred_fallthru
          _
        // Predicated region
        $region57: #{bert_class_forward.1} parent=11 // pred_check
          %p533 = pneg %p333
        $region58: #{bert_class_forward.1} parent=11 // pred_check_branch
          %535 = sbr.rel (%p533) target = $region60
        $region59: #{bert_class_forward.1} parent=11 // pred_region
          _
        $region60: #{bert_class_forward.1} parent=11 // pred_fallthru
          _
        // Predicated region
        $region61: #{bert_class_forward.1} parent=11 // pred_check
          %p536 = pneg %p354
        $region62: #{bert_class_forward.1} parent=11 // pred_check_branch
          %538 = sbr.rel (%p536) target = $region64
        $region63: #{bert_class_forward.1} parent=11 // pred_region
          _
        $region64: #{bert_class_forward.1} parent=11 // pred_fallthru
          _
        // Predicated region
        $region65: #{bert_class_forward.1} parent=11 // pred_check
          %p539 = pneg %p375
        $region66: #{bert_class_forward.1} parent=11 // pred_check_branch
          %541 = sbr.rel (%p539) target = $region68
        $region67: #{bert_class_forward.1} parent=11 // pred_region
          _
        $region68: #{bert_class_forward.1} parent=11 // pred_fallthru
          _
        // Predicated region
        $region69: #{bert_class_forward.1} parent=11 // pred_check
          %p542 = pneg %p396
        $region70: #{bert_class_forward.1} parent=11 // pred_check_branch
          %544 = sbr.rel (%p542) target = $region72
        $region71: #{bert_class_forward.1} parent=11 // pred_region
          _
        $region72: #{bert_class_forward.1} parent=11 // pred_fallthru
          _
        // Predicated region
        $region73: #{bert_class_forward.1} parent=11 // pred_check
          %p545 = pneg %p417
        $region74: #{bert_class_forward.1} parent=11 // pred_check_branch
          %547 = sbr.rel (%p545) target = $region76
        $region75: #{bert_class_forward.1} parent=11 // pred_region
          _
        $region76: #{bert_class_forward.1} parent=11 // pred_fallthru
          _
        // Predicated region
        $region77: #{bert_class_forward.1} parent=11 // pred_check
          %p548 = pneg %p438
        $region78: #{bert_class_forward.1} parent=11 // pred_check_branch
          %550 = sbr.rel (%p548) target = $region80
        $region79: #{bert_class_forward.1} parent=11 // pred_region
          _
        $region80: #{bert_class_forward.1} parent=11 // pred_fallthru
          _
        // Predicated region
        $region81: #{bert_class_forward.1} parent=11 // pred_check
          %p551 = pneg %p459
        $region82: #{bert_class_forward.1} parent=11 // pred_check_branch
          %553 = sbr.rel (%p551) target = $region84
        $region83: #{bert_class_forward.1} parent=11 // pred_region
          _
        $region84: #{bert_class_forward.1} parent=11 // pred_fallthru
          _
      $region12: #{bert_class_forward.1} parent=5 // pred_fallthru
        _
      %p554 = scmp.lt.s32.totalorder %s29, 2
      // Predicated region
      $region85: #{bert_class_forward.1} parent=5 // pred_check
        %p555 = pneg %p554
      $region86: #{bert_class_forward.1} parent=5 // pred_check_branch
        %557 = sbr.rel (%p555) target = $region88
      $region87: #{bert_class_forward.1} parent=5 // pred_region
        // Predicated region
        $region89: #{bert_class_forward.1} parent=87 // pred_check
          %p558 = pneg %p49
        $region90: #{bert_class_forward.1} parent=87 // pred_check_branch
          %560 = sbr.rel (%p558) target = $region92
        $region91: #{bert_class_forward.1} parent=87 // pred_region
          %p561 = scmp.lt.s32.totalorder %s29, 1
          %s562 = scalar_select %p561, %s29, 1
          %s563 = smul.addr %s562, 8
          %s564 = scalar_lea.vmem %s0, %s563
        $region92: #{bert_class_forward.1} parent=87 // pred_fallthru
          _
        // Predicated region
        $region93: #{bert_class_forward.1} parent=87 // pred_check
          %p565 = pneg %p75
        $region94: #{bert_class_forward.1} parent=87 // pred_check_branch
          %567 = sbr.rel (%p565) target = $region96
        $region95: #{bert_class_forward.1} parent=87 // pred_region
          %p568 = scmp.lt.s32.totalorder %s29, 1
          %s569 = scalar_select %p568, %s29, 1
          %s570 = scalar_lea.vmem %s1, %s569
        $region96: #{bert_class_forward.1} parent=87 // pred_fallthru
          _
      $region88: #{bert_class_forward.1} parent=5 // pred_fallthru
        _
      %p571 = scmp.le.s32.totalorder 1, %s29
      %p572 = scmp.lt.s32.totalorder %s29, 3
      %p573 = pnand %p571, %p572
      %p574 = pneg %p573
      // Predicated region
      $region97: #{bert_class_forward.1} parent=5 // pred_check
        _
      $region98: #{bert_class_forward.1} parent=5 // pred_check_branch
        %576 = sbr.rel (%p573) target = $region100
      $region99: #{bert_class_forward.1} parent=5 // pred_region
        %s577 = ssub.s32 %s29, 1
        %p578 = scmp.lt.s32.totalorder %s34, 1
        %s579 = scalar_select %p578, %s34, 1
        %s580 = smul.addr %s579, 8
        %s581 = scalar_lea.vmem %s0, %s580
        %p582 = pneg %p55
        %p583 = pneg %p52
        %p584 = scmp.lt.s32.totalorder %s34, 1
        %s585 = scalar_select %p584, %s34, 1
        %s586 = scalar_lea.vmem %s1, %s585
        %p587 = pneg %p81
        %p588 = pneg %p78
        %p589 = pneg %p102
        %p590 = pneg %p99
        %p591 = pneg %p123
        %p592 = pneg %p120
        %p593 = pneg %p144
        %p594 = pneg %p141
        %p595 = pneg %p165
        %p596 = pneg %p162
        %p597 = pneg %p186
        %p598 = pneg %p183
        %p599 = pneg %p207
        %p600 = pneg %p204
        %p601 = pneg %p228
        %p602 = pneg %p225
        %p603 = pneg %p249
        %p604 = pneg %p246
        %p605 = pneg %p270
        %p606 = pneg %p267
        %p607 = pneg %p291
        %p608 = pneg %p288
        %p609 = pneg %p312
        %p610 = pneg %p309
        %p611 = pneg %p333
        %p612 = pneg %p330
        %p613 = pneg %p354
        %p614 = pneg %p351
        %p615 = pneg %p375
        %p616 = pneg %p372
        %p617 = pneg %p396
        %p618 = pneg %p393
        %p619 = pneg %p417
        %p620 = pneg %p414
        %p621 = pneg %p438
        %p622 = pneg %p435
        %p623 = pneg %p459
        %p624 = pneg %p456
        %p625 = pneg %p485
        %p626 = pneg %p482
        %s627 = sand.u32 %s472, 1
        %s628 = scalar_lea.sflag [#allocation3], %s627
        %s629 = sand.u32 %s472, 1
        %s630 = scalar_lea.vmem [#allocation2], %s629
        %p631 = scmp.lt.s32.totalorder %s34, 1
        %s632 = scalar_select %p631, %s34, 1
        %s633 = smul.addr %s632, 8
        %s634 = scalar_lea.vmem %s0, %s633
        %p635 = scmp.lt.s32.totalorder %s34, 1
        %s636 = scalar_select %p635, %s34, 1
        %s637 = scalar_lea.vmem %s1, %s636
        %v639 = vld [vmem:[%s634] sm:$0xff]
        %v640 = vld [vmem:[%s2] sm:$0x1]
        %v641 = vld [vmem:[%s3] sm:$0x1]
        %vm642 = vcmask 261120
        %v643 = vsel %vm642, %v639, 0.0
        %644 = vadd.xlane.f32.xlu0 %v643
        %v645 = vpop.xlane.xlu0 %644
        %v646 = vrcp.pop 32.0
        %v647 = vmul.f32 %v645, %v646
        %v648 = vsub.f32 %v639, %v647
        %v649 = vmul.f32 %v648, %v648
        %v650 = vsel %vm642, %v649, 0.0
        %651 = vadd.xlane.f32.xlu0 %v650
        %v652 = vpop.xlane.xlu0 %651
        %v653 = vmul.f32 %v652, %v646
        %v654 = vadd.f32 %v653, 1e-12
        %v655 = vrsqrt.pop %v654
        %v656 = vmul.f32 %v648, %v655
        %v658 = vlaneseq
        %v659 = vshrl.u32 %v658, 7
        %v660 = vsub.s32 0, %v659
        %v661 = vrot.slane %v640, %v660
        %v663 = vmul.f32 %v656, %v661
        %v665 = vlaneseq
        %v666 = vshrl.u32 %v665, 7
        %v667 = vsub.s32 0, %v666
        %v668 = vrot.slane %v641, %v667
        %v670 = vadd.f32 %v663, %v668
        %v671 = vld [vmem:[%s637] sm:$0x1]
        %v672 = vpack.c.bf16 %v670, %v670
        %v673 = vld [vmem:[%s4] sm:$0xf]
        %v674 = vld [vmem:[%s4 + $0x4] sm:$0xf]
        %v675 = vld [vmem:[%s4 + $0x8] sm:$0xf]
        %v676 = vld [vmem:[%s4 + $0xc] sm:$0xf]
        %v677 = vld [vmem:[%s5] sm:$0x1]
        %v679 = vlaneseq
        %v680 = vshrl.u32 %v679, 7
        %v681 = vsub.s32 0, %v680
        %v682 = vrot.slane %v677, %v681
        %v688 = vunpack.c.l.b16 %v673
        %v689 = vunpack.c.l.b16 %v674
        %v690 = vunpack.c.l.b16 %v675
        %v691 = vunpack.c.l.b16 %v676
        %v692 = vpack.c.b16 %v689, %v688
        %v693 = vpack.c.b16 %v691, %v690
        %v697 = vsel %vm642, %v672, 0
        %699 = vmatprep.subr.bf16.mxu0 0
        %700 = vmatpush1.bf16.msra.mxu0 %v692
        %701 = vmatprep.subr.bf16.mxu0 0
        %702 = vmatpush1.bf16.msra.mxu0 %v693
        %703 = vmatprep.subr.bf16.mxu0 0
        %704 = vmatpush1.bf16.msra.mxu0 0
        %705 = vmatprep.subr.bf16.mxu0 0
        %706 = vmatpush1.bf16.msra.mxu0 0
        %707 = vmatprep.subr.bf16.mxu0 0
        %708 = vmatpush1.bf16.msra.mxu0 0
        %709 = vmatprep.subr.bf16.mxu0 0
        %710 = vmatpush1.bf16.msra.mxu0 0
        %711 = vmatprep.subr.bf16.mxu0 0
        %712 = vmatpush1.bf16.msra.mxu0 0
        %713 = vmatprep.subr.bf16.mxu0 0
        %714 = vmatpush1.bf16.msra.mxu0 0
        %715 = vmatprep.subr.bf16.mxu0 0
        %716 = vmatpush1.bf16.msra.mxu0 0
        %717 = vmatprep.subr.bf16.mxu0 0
        %718 = vmatpush1.bf16.msra.mxu0 0
        %719 = vmatprep.subr.bf16.mxu0 0
        %720 = vmatpush1.bf16.msra.mxu0 0
        %721 = vmatprep.subr.bf16.mxu0 0
        %722 = vmatpush1.bf16.msra.mxu0 0
        %723 = vmatprep.subr.bf16.mxu0 0
        %724 = vmatpush1.bf16.msra.mxu0 0
        %725 = vmatprep.subr.bf16.mxu0 0
        %726 = vmatpush1.bf16.msra.mxu0 0
        %727 = vmatprep.subr.bf16.mxu0 0
        %728 = vmatpush1.bf16.msra.mxu0 0
        %729 = vmatprep.subr.bf16.mxu0 0
        %730 = vmatpush1.bf16.msra.mxu0 0
        %731 = vmatprep.mubr.bf16.mxu0 0
        %732 = vmatmul.mubr.bf16.gmra.mrb[0].mxu0 %v697
        %v733 = vpop.f32.mrb[0].mxu0
        %v734 = vadd.f32 %v682, %v733
        %v735 = vpop.f32.mrb[0].mxu0
        %v736 = vpop.f32.mrb[0].mxu0
        %v737 = vpop.f32.mrb[0].mxu0
        %738 = vdwg.mxu0
        %v739 = vpack.c.bf16 %v734, %v734
        %741 = vrot.lane.b32.xlu0 %v734, 96
        %v742 = vpop.permute.xlu0 %741
        %744 = vxpose.xlu0.b32.start [1/16] %v742, 128
        %745 = vxpose.xlu0.b32.cont [2/16] 0.0, 128
        %746 = vxpose.xlu0.b32.cont [3/16] 0.0, 128
        %747 = vxpose.xlu0.b32.cont [4/16] 0.0, 128
        %748 = vxpose.xlu0.b32.cont [5/16] 0.0, 128
        %749 = vxpose.xlu0.b32.cont [6/16] 0.0, 128
        %750 = vxpose.xlu0.b32.cont [7/16] 0.0, 128
        %751 = vxpose.xlu0.b32.cont [8/16] 0.0, 128
        %752 = vxpose.xlu0.b32.cont [9/16] 0.0, 128
        %753 = vxpose.xlu0.b32.cont [10/16] 0.0, 128
        %754 = vxpose.xlu0.b32.cont [11/16] 0.0, 128
        %755 = vxpose.xlu0.b32.cont [12/16] 0.0, 128
        %756 = vxpose.xlu0.b32.cont [13/16] 0.0, 128
        %757 = vxpose.xlu0.b32.cont [14/16] 0.0, 128
        %758 = vxpose.xlu0.b32.cont [15/16] 0.0, 128
        %759 = vxpose.xlu0.b32.end [16/16] 0.0, 128
        %v760 = vpop.trf.xlu0
        %v761 = vpop.trf.xlu0
        %v762 = vpop.trf.xlu0
        %v763 = vpop.trf.xlu0
        %v764 = vpop.trf.xlu0
        %v765 = vpop.trf.xlu0
        %v766 = vpop.trf.xlu0
        %v767 = vpop.trf.xlu0
        %v768 = vpop.trf.xlu0
        %v769 = vpop.trf.xlu0
        %v770 = vpop.trf.xlu0
        %v771 = vpop.trf.xlu0
        %v772 = vpop.trf.xlu0
        %v773 = vpop.trf.xlu0
        %v774 = vpop.trf.xlu0
        %v775 = vpop.trf.xlu0
        %v776 = vpack.c.bf16 %v760, %v760
        %v778 = vlaneseq
        %v779 = vshrl.u32 %v778, 7
        %v780 = vsub.s32 0, %v779
        %v781 = vrot.slane %v671, %v780
        %vm783 = vcmask 64512
        %v785 = vsel %vm783, %v739, 0
        %vm787 = vcmask 1043456
        %v789 = vsel %vm787, %v776, 0
        %791 = vmatprep.subr.bf16.mxu0 0
        %792 = vmatpush1.bf16.msra.mxu0 %v789
        %793 = vmatprep.subr.bf16.mxu0 0
        %794 = vmatpush1.bf16.msra.mxu0 0
        %795 = vmatprep.subr.bf16.mxu0 0
        %796 = vmatpush1.bf16.msra.mxu0 0
        %797 = vmatprep.subr.bf16.mxu0 0
        %798 = vmatpush1.bf16.msra.mxu0 0
        %799 = vmatprep.subr.bf16.mxu0 0
        %800 = vmatpush1.bf16.msra.mxu0 0
        %801 = vmatprep.subr.bf16.mxu0 0
        %802 = vmatpush1.bf16.msra.mxu0 0
        %803 = vmatprep.subr.bf16.mxu0 0
        %804 = vmatpush1.bf16.msra.mxu0 0
        %805 = vmatprep.subr.bf16.mxu0 0
        %806 = vmatpush1.bf16.msra.mxu0 0
        %807 = vmatprep.subr.bf16.mxu0 0
        %808 = vmatpush1.bf16.msra.mxu0 0
        %809 = vmatprep.subr.bf16.mxu0 0
        %810 = vmatpush1.bf16.msra.mxu0 0
        %811 = vmatprep.subr.bf16.mxu0 0
        %812 = vmatpush1.bf16.msra.mxu0 0
        %813 = vmatprep.subr.bf16.mxu0 0
        %814 = vmatpush1.bf16.msra.mxu0 0
        %815 = vmatprep.subr.bf16.mxu0 0
        %816 = vmatpush1.bf16.msra.mxu0 0
        %817 = vmatprep.subr.bf16.mxu0 0
        %818 = vmatpush1.bf16.msra.mxu0 0
        %819 = vmatprep.subr.bf16.mxu0 0
        %820 = vmatpush1.bf16.msra.mxu0 0
        %821 = vmatprep.subr.bf16.mxu0 0
        %822 = vmatpush1.bf16.msra.mxu0 0
        %823 = vmatprep.mubr.bf16.mxu0 0
        %824 = vmatmul.mubr.bf16.gmra.mrb[0].mxu0 %v785
        %v825 = vpop.f32.mrb[0].mxu0
        %v826 = vadd.f32 %v781, %v825
        %v827 = vpop.f32.mrb[0].mxu0
        %v828 = vpop.f32.mrb[0].mxu0
        %v829 = vpop.f32.mrb[0].mxu0
        %830 = vdwg.mxu0
        %v831 = vsel %vm783, %v826, -inf
        %832 = vmax.xlane.f32.xlu0 %v831
        %v833 = vpop.xlane.xlu0 %832
        %v834 = vsub.f32 %v826, %v833
        %v835 = vmul.f32 %v834, 1.442695
        %v836 = vpow.pop %v835
        %v837 = vsel %vm783, %v836, 0.0
        %838 = vadd.xlane.f32.xlu0 %v837
        %v839 = vpop.xlane.xlu0 %838
        %v840 = vrcp.pop %v839
        %v841 = vmul.f32 %v836, %v840
        %v842 = vpack.c.bf16 %v841, %v841
        %844 = vrot.lane.b32.xlu0 %v739, 64
        %v845 = vpop.permute.xlu0 %844
        %v847 = vsel %vm783, %v842, 0
        %v850 = vsel %vm787, %v845, 0
        %852 = vmatprep.subr.bf16.mxu0 0
        %853 = vmatpush1.bf16.msra.mxu0 %v850
        %854 = vmatprep.subr.bf16.mxu0 0
        %855 = vmatpush1.bf16.msra.mxu0 0
        %856 = vmatprep.subr.bf16.mxu0 0
        %857 = vmatpush1.bf16.msra.mxu0 0
        %858 = vmatprep.subr.bf16.mxu0 0
        %859 = vmatpush1.bf16.msra.mxu0 0
        %860 = vmatprep.subr.bf16.mxu0 0
        %861 = vmatpush1.bf16.msra.mxu0 0
        %862 = vmatprep.subr.bf16.mxu0 0
        %863 = vmatpush1.bf16.msra.mxu0 0
        %864 = vmatprep.subr.bf16.mxu0 0
        %865 = vmatpush1.bf16.msra.mxu0 0
        %866 = vmatprep.subr.bf16.mxu0 0
        %867 = vmatpush1.bf16.msra.mxu0 0
        %868 = vmatprep.subr.bf16.mxu0 0
        %869 = vmatpush1.bf16.msra.mxu0 0
        %870 = vmatprep.subr.bf16.mxu0 0
        %871 = vmatpush1.bf16.msra.mxu0 0
        %872 = vmatprep.subr.bf16.mxu0 0
        %873 = vmatpush1.bf16.msra.mxu0 0
        %874 = vmatprep.subr.bf16.mxu0 0
        %875 = vmatpush1.bf16.msra.mxu0 0
        %876 = vmatprep.subr.bf16.mxu0 0
        %877 = vmatpush1.bf16.msra.mxu0 0
        %878 = vmatprep.subr.bf16.mxu0 0
        %879 = vmatpush1.bf16.msra.mxu0 0
        %880 = vmatprep.subr.bf16.mxu0 0
        %881 = vmatpush1.bf16.msra.mxu0 0
        %882 = vmatprep.subr.bf16.mxu0 0
        %883 = vmatpush1.bf16.msra.mxu0 0
        %884 = vmatprep.mubr.bf16.mxu0 0
        %885 = vmatmul.mubr.bf16.gmra.mrb[0].mxu0 %v847
        %v886 = vpop.f32.mrb[0].mxu0
        %v887 = vadd.f32 0.0, %v886
        %v888 = vpop.f32.mrb[0].mxu0
        %v889 = vpop.f32.mrb[0].mxu0
        %v890 = vpop.f32.mrb[0].mxu0
        %891 = vdwg.mxu0
        %892 = vrot.lane.b32.xlu0 %v734, 88
        %v893 = vpop.permute.xlu0 %892
        %895 = vxpose.xlu0.b32.start [1/16] %v893, 128
        %896 = vxpose.xlu0.b32.cont [2/16] 0.0, 128
        %897 = vxpose.xlu0.b32.cont [3/16] 0.0, 128
        %898 = vxpose.xlu0.b32.cont [4/16] 0.0, 128
        %899 = vxpose.xlu0.b32.cont [5/16] 0.0, 128
        %900 = vxpose.xlu0.b32.cont [6/16] 0.0, 128
        %901 = vxpose.xlu0.b32.cont [7/16] 0.0, 128
        %902 = vxpose.xlu0.b32.cont [8/16] 0.0, 128
        %903 = vxpose.xlu0.b32.cont [9/16] 0.0, 128
        %904 = vxpose.xlu0.b32.cont [10/16] 0.0, 128
        %905 = vxpose.xlu0.b32.cont [11/16] 0.0, 128
        %906 = vxpose.xlu0.b32.cont [12/16] 0.0, 128
        %907 = vxpose.xlu0.b32.cont [13/16] 0.0, 128
        %908 = vxpose.xlu0.b32.cont [14/16] 0.0, 128
        %909 = vxpose.xlu0.b32.cont [15/16] 0.0, 128
        %910 = vxpose.xlu0.b32.end [16/16] 0.0, 128
        %v911 = vpop.trf.xlu0
        %v912 = vpop.trf.xlu0
        %v913 = vpop.trf.xlu0
        %v914 = vpop.trf.xlu0
        %v915 = vpop.trf.xlu0
        %v916 = vpop.trf.xlu0
        %v917 = vpop.trf.xlu0
        %v918 = vpop.trf.xlu0
        %v919 = vpop.trf.xlu0
        %v920 = vpop.trf.xlu0
        %v921 = vpop.trf.xlu0
        %v922 = vpop.trf.xlu0
        %v923 = vpop.trf.xlu0
        %v924 = vpop.trf.xlu0
        %v925 = vpop.trf.xlu0
        %v926 = vpop.trf.xlu0
        %v927 = vpack.c.bf16 %v911, %v911
        %928 = vrot.lane.b32.xlu0 %v739, 120
        %v929 = vpop.permute.xlu0 %928
        %v931 = vsel %vm783, %v929, 0
        %v934 = vsel %vm787, %v927, 0
        %936 = vmatprep.subr.bf16.mxu0 0
        %937 = vmatpush1.bf16.msra.mxu0 %v934
        %938 = vmatprep.subr.bf16.mxu0 0
        %939 = vmatpush1.bf16.msra.mxu0 0
        %940 = vmatprep.subr.bf16.mxu0 0
        %941 = vmatpush1.bf16.msra.mxu0 0
        %942 = vmatprep.subr.bf16.mxu0 0
        %943 = vmatpush1.bf16.msra.mxu0 0
        %944 = vmatprep.subr.bf16.mxu0 0
        %945 = vmatpush1.bf16.msra.mxu0 0
        %946 = vmatprep.subr.bf16.mxu0 0
        %947 = vmatpush1.bf16.msra.mxu0 0
        %948 = vmatprep.subr.bf16.mxu0 0
        %949 = vmatpush1.bf16.msra.mxu0 0
        %950 = vmatprep.subr.bf16.mxu0 0
        %951 = vmatpush1.bf16.msra.mxu0 0
        %952 = vmatprep.subr.bf16.mxu0 0
        %953 = vmatpush1.bf16.msra.mxu0 0
        %954 = vmatprep.subr.bf16.mxu0 0
        %955 = vmatpush1.bf16.msra.mxu0 0
        %956 = vmatprep.subr.bf16.mxu0 0
        %957 = vmatpush1.bf16.msra.mxu0 0
        %958 = vmatprep.subr.bf16.mxu0 0
        %959 = vmatpush1.bf16.msra.mxu0 0
        %960 = vmatprep.subr.bf16.mxu0 0
        %961 = vmatpush1.bf16.msra.mxu0 0
        %962 = vmatprep.subr.bf16.mxu0 0
        %963 = vmatpush1.bf16.msra.mxu0 0
        %964 = vmatprep.subr.bf16.mxu0 0
        %965 = vmatpush1.bf16.msra.mxu0 0
        %966 = vmatprep.subr.bf16.mxu0 0
        %967 = vmatpush1.bf16.msra.mxu0 0
        %968 = vmatprep.mubr.bf16.mxu0 0
        %969 = vmatmul.mubr.bf16.gmra.mrb[0].mxu0 %v931
        %v970 = vpop.f32.mrb[0].mxu0
        %v971 = vadd.f32 %v781, %v970
        %v972 = vpop.f32.mrb[0].mxu0
        %v973 = vpop.f32.mrb[0].mxu0
        %v974 = vpop.f32.mrb[0].mxu0
        %975 = vdwg.mxu0
        %v976 = vsel %vm783, %v971, -inf
        %977 = vmax.xlane.f32.xlu0 %v976
        %v978 = vpop.xlane.xlu0 %977
        %v979 = vsub.f32 %v971, %v978
        %v980 = vmul.f32 %v979, 1.442695
        %v981 = vpow.pop %v980
        %v982 = vsel %vm783, %v981, 0.0
        %983 = vadd.xlane.f32.xlu0 %v982
        %v984 = vpop.xlane.xlu0 %983
        %v985 = vrcp.pop %v984
        %v986 = vmul.f32 %v981, %v985
        %v987 = vpack.c.bf16 %v986, %v986
        %988 = vrot.lane.b32.xlu0 %v739, 56
        %v989 = vpop.permute.xlu0 %988
        %v991 = vsel %vm783, %v987, 0
        %v994 = vsel %vm787, %v989, 0
        %996 = vmatprep.subr.bf16.mxu0 0
        %997 = vmatpush1.bf16.msra.mxu0 %v994
        %998 = vmatprep.subr.bf16.mxu0 0
        %999 = vmatpush1.bf16.msra.mxu0 0
        %1000 = vmatprep.subr.bf16.mxu0 0
        %1001 = vmatpush1.bf16.msra.mxu0 0
        %1002 = vmatprep.subr.bf16.mxu0 0
        %1003 = vmatpush1.bf16.msra.mxu0 0
        %1004 = vmatprep.subr.bf16.mxu0 0
        %1005 = vmatpush1.bf16.msra.mxu0 0
        %1006 = vmatprep.subr.bf16.mxu0 0
        %1007 = vmatpush1.bf16.msra.mxu0 0
        %1008 = vmatprep.subr.bf16.mxu0 0
        %1009 = vmatpush1.bf16.msra.mxu0 0
        %1010 = vmatprep.subr.bf16.mxu0 0
        %1011 = vmatpush1.bf16.msra.mxu0 0
        %1012 = vmatprep.subr.bf16.mxu0 0
        %1013 = vmatpush1.bf16.msra.mxu0 0
        %1014 = vmatprep.subr.bf16.mxu0 0
        %1015 = vmatpush1.bf16.msra.mxu0 0
        %1016 = vmatprep.subr.bf16.mxu0 0
        %1017 = vmatpush1.bf16.msra.mxu0 0
        %1018 = vmatprep.subr.bf16.mxu0 0
        %1019 = vmatpush1.bf16.msra.mxu0 0
        %1020 = vmatprep.subr.bf16.mxu0 0
        %1021 = vmatpush1.bf16.msra.mxu0 0
        %1022 = vmatprep.subr.bf16.mxu0 0
        %1023 = vmatpush1.bf16.msra.mxu0 0
        %1024 = vmatprep.subr.bf16.mxu0 0
        %1025 = vmatpush1.bf16.msra.mxu0 0
        %1026 = vmatprep.subr.bf16.mxu0 0
        %1027 = vmatpush1.bf16.msra.mxu0 0
        %1028 = vmatprep.mubr.bf16.mxu0 0
        %1029 = vmatmul.mubr.bf16.gmra.mrb[0].mxu0 %v991
        %v1030 = vpop.f32.mrb[0].mxu0
        %v1031 = vadd.f32 0.0, %v1030
        %v1032 = vpop.f32.mrb[0].mxu0
        %v1033 = vpop.f32.mrb[0].mxu0
        %v1034 = vpop.f32.mrb[0].mxu0
        %1035 = vdwg.mxu0
        %1036 = vrot.lane.b32.xlu0 %v734, 80
        %v1037 = vpop.permute.xlu0 %1036
        %1039 = vxpose.xlu0.b32.start [1/16] %v1037, 128
        %1040 = vxpose.xlu0.b32.cont [2/16] 0.0, 128
        %1041 = vxpose.xlu0.b32.cont [3/16] 0.0, 128
        %1042 = vxpose.xlu0.b32.cont [4/16] 0.0, 128
        %1043 = vxpose.xlu0.b32.cont [5/16] 0.0, 128
        %1044 = vxpose.xlu0.b32.cont [6/16] 0.0, 128
        %1045 = vxpose.xlu0.b32.cont [7/16] 0.0, 128
        %1046 = vxpose.xlu0.b32.cont [8/16] 0.0, 128
        %1047 = vxpose.xlu0.b32.cont [9/16] 0.0, 128
        %1048 = vxpose.xlu0.b32.cont [10/16] 0.0, 128
        %1049 = vxpose.xlu0.b32.cont [11/16] 0.0, 128
        %1050 = vxpose.xlu0.b32.cont [12/16] 0.0, 128
        %1051 = vxpose.xlu0.b32.cont [13/16] 0.0, 128
        %1052 = vxpose.xlu0.b32.cont [14/16] 0.0, 128
        %1053 = vxpose.xlu0.b32.cont [15/16] 0.0, 128
        %1054 = vxpose.xlu0.b32.end [16/16] 0.0, 128
        %v1055 = vpop.trf.xlu0
        %v1056 = vpop.trf.xlu0
        %v1057 = vpop.trf.xlu0
        %v1058 = vpop.trf.xlu0
        %v1059 = vpop.trf.xlu0
        %v1060 = vpop.trf.xlu0
        %v1061 = vpop.trf.xlu0
        %v1062 = vpop.trf.xlu0
        %v1063 = vpop.trf.xlu0
        %v1064 = vpop.trf.xlu0
        %v1065 = vpop.trf.xlu0
        %v1066 = vpop.trf.xlu0
        %v1067 = vpop.trf.xlu0
        %v1068 = vpop.trf.xlu0
        %v1069 = vpop.trf.xlu0
        %v1070 = vpop.trf.xlu0
        %v1071 = vpack.c.bf16 %v1055, %v1055
        %1072 = vrot.lane.b32.xlu0 %v739, 112
        %v1073 = vpop.permute.xlu0 %1072
        %v1075 = vsel %vm783, %v1073, 0
        %v1078 = vsel %vm787, %v1071, 0
        %1080 = vmatprep.subr.bf16.mxu0 0
        %1081 = vmatpush1.bf16.msra.mxu0 %v1078
        %1082 = vmatprep.subr.bf16.mxu0 0
        %1083 = vmatpush1.bf16.msra.mxu0 0
        %1084 = vmatprep.subr.bf16.mxu0 0
        %1085 = vmatpush1.bf16.msra.mxu0 0
        %1086 = vmatprep.subr.bf16.mxu0 0
        %1087 = vmatpush1.bf16.msra.mxu0 0
        %1088 = vmatprep.subr.bf16.mxu0 0
        %1089 = vmatpush1.bf16.msra.mxu0 0
        %1090 = vmatprep.subr.bf16.mxu0 0
        %1091 = vmatpush1.bf16.msra.mxu0 0
        %1092 = vmatprep.subr.bf16.mxu0 0
        %1093 = vmatpush1.bf16.msra.mxu0 0
        %1094 = vmatprep.subr.bf16.mxu0 0
        %1095 = vmatpush1.bf16.msra.mxu0 0
        %1096 = vmatprep.subr.bf16.mxu0 0
        %1097 = vmatpush1.bf16.msra.mxu0 0
        %1098 = vmatprep.subr.bf16.mxu0 0
        %1099 = vmatpush1.bf16.msra.mxu0 0
        %1100 = vmatprep.subr.bf16.mxu0 0
        %1101 = vmatpush1.bf16.msra.mxu0 0
        %1102 = vmatprep.subr.bf16.mxu0 0
        %1103 = vmatpush1.bf16.msra.mxu0 0
        %1104 = vmatprep.subr.bf16.mxu0 0
        %1105 = vmatpush1.bf16.msra.mxu0 0
        %1106 = vmatprep.subr.bf16.mxu0 0
        %1107 = vmatpush1.bf16.msra.mxu0 0
        %1108 = vmatprep.subr.bf16.mxu0 0
        %1109 = vmatpush1.bf16.msra.mxu0 0
        %1110 = vmatprep.subr.bf16.mxu0 0
        %1111 = vmatpush1.bf16.msra.mxu0 0
        %1112 = vmatprep.mubr.bf16.mxu0 0
        %1113 = vmatmul.mubr.bf16.gmra.mrb[0].mxu0 %v1075
        %v1114 = vpop.f32.mrb[0].mxu0
        %v1115 = vadd.f32 %v781, %v1114
        %v1116 = vpop.f32.mrb[0].mxu0
        %v1117 = vpop.f32.mrb[0].mxu0
        %v1118 = vpop.f32.mrb[0].mxu0
        %1119 = vdwg.mxu0
        %v1120 = vsel %vm783, %v1115, -inf
        %1121 = vmax.xlane.f32.xlu0 %v1120
        %v1122 = vpop.xlane.xlu0 %1121
        %v1123 = vsub.f32 %v1115, %v1122
        %v1124 = vmul.f32 %v1123, 1.442695
        %v1125 = vpow.pop %v1124
        %v1126 = vsel %vm783, %v1125, 0.0
        %1127 = vadd.xlane.f32.xlu0 %v1126
        %v1128 = vpop.xlane.xlu0 %1127
        %v1129 = vrcp.pop %v1128
        %v1130 = vmul.f32 %v1125, %v1129
        %v1131 = vpack.c.bf16 %v1130, %v1130
        %1132 = vrot.lane.b32.xlu0 %v739, 48
        %v1133 = vpop.permute.xlu0 %1132
        %v1135 = vsel %vm783, %v1131, 0
        %v1138 = vsel %vm787, %v1133, 0
        %1140 = vmatprep.subr.bf16.mxu0 0
        %1141 = vmatpush1.bf16.msra.mxu0 %v1138
        %1142 = vmatprep.subr.bf16.mxu0 0
        %1143 = vmatpush1.bf16.msra.mxu0 0
        %1144 = vmatprep.subr.bf16.mxu0 0
        %1145 = vmatpush1.bf16.msra.mxu0 0
        %1146 = vmatprep.subr.bf16.mxu0 0
        %1147 = vmatpush1.bf16.msra.mxu0 0
        %1148 = vmatprep.subr.bf16.mxu0 0
        %1149 = vmatpush1.bf16.msra.mxu0 0
        %1150 = vmatprep.subr.bf16.mxu0 0
        %1151 = vmatpush1.bf16.msra.mxu0 0
        %1152 = vmatprep.subr.bf16.mxu0 0
        %1153 = vmatpush1.bf16.msra.mxu0 0
        %1154 = vmatprep.subr.bf16.mxu0 0
        %1155 = vmatpush1.bf16.msra.mxu0 0
        %1156 = vmatprep.subr.bf16.mxu0 0
        %1157 = vmatpush1.bf16.msra.mxu0 0
        %1158 = vmatprep.subr.bf16.mxu0 0
        %1159 = vmatpush1.bf16.msra.mxu0 0
        %1160 = vmatprep.subr.bf16.mxu0 0
        %1161 = vmatpush1.bf16.msra.mxu0 0
        %1162 = vmatprep.subr.bf16.mxu0 0
        %1163 = vmatpush1.bf16.msra.mxu0 0
        %1164 = vmatprep.subr.bf16.mxu0 0
        %1165 = vmatpush1.bf16.msra.mxu0 0
        %1166 = vmatprep.subr.bf16.mxu0 0
        %1167 = vmatpush1.bf16.msra.mxu0 0
        %1168 = vmatprep.subr.bf16.mxu0 0
        %1169 = vmatpush1.bf16.msra.mxu0 0
        %1170 = vmatprep.subr.bf16.mxu0 0
        %1171 = vmatpush1.bf16.msra.mxu0 0
        %1172 = vmatprep.mubr.bf16.mxu0 0
        %1173 = vmatmul.mubr.bf16.gmra.mrb[0].mxu0 %v1135
        %v1174 = vpop.f32.mrb[0].mxu0
        %v1175 = vadd.f32 0.0, %v1174
        %v1176 = vpop.f32.mrb[0].mxu0
        %v1177 = vpop.f32.mrb[0].mxu0
        %v1178 = vpop.f32.mrb[0].mxu0
        %1179 = vdwg.mxu0
        %1180 = vrot.lane.b32.xlu0 %v734, 72
        %v1181 = vpop.permute.xlu0 %1180
        %1183 = vxpose.xlu0.b32.start [1/16] %v1181, 128
        %1184 = vxpose.xlu0.b32.cont [2/16] 0.0, 128
        %1185 = vxpose.xlu0.b32.cont [3/16] 0.0, 128
        %1186 = vxpose.xlu0.b32.cont [4/16] 0.0, 128
        %1187 = vxpose.xlu0.b32.cont [5/16] 0.0, 128
        %1188 = vxpose.xlu0.b32.cont [6/16] 0.0, 128
        %1189 = vxpose.xlu0.b32.cont [7/16] 0.0, 128
        %1190 = vxpose.xlu0.b32.cont [8/16] 0.0, 128
        %1191 = vxpose.xlu0.b32.cont [9/16] 0.0, 128
        %1192 = vxpose.xlu0.b32.cont [10/16] 0.0, 128
        %1193 = vxpose.xlu0.b32.cont [11/16] 0.0, 128
        %1194 = vxpose.xlu0.b32.cont [12/16] 0.0, 128
        %1195 = vxpose.xlu0.b32.cont [13/16] 0.0, 128
        %1196 = vxpose.xlu0.b32.cont [14/16] 0.0, 128
        %1197 = vxpose.xlu0.b32.cont [15/16] 0.0, 128
        %1198 = vxpose.xlu0.b32.end [16/16] 0.0, 128
        %v1199 = vpop.trf.xlu0
        %v1200 = vpop.trf.xlu0
        %v1201 = vpop.trf.xlu0
        %v1202 = vpop.trf.xlu0
        %v1203 = vpop.trf.xlu0
        %v1204 = vpop.trf.xlu0
        %v1205 = vpop.trf.xlu0
        %v1206 = vpop.trf.xlu0
        %v1207 = vpop.trf.xlu0
        %v1208 = vpop.trf.xlu0
        %v1209 = vpop.trf.xlu0
        %v1210 = vpop.trf.xlu0
        %v1211 = vpop.trf.xlu0
        %v1212 = vpop.trf.xlu0
        %v1213 = vpop.trf.xlu0
        %v1214 = vpop.trf.xlu0
        %v1215 = vpack.c.bf16 %v1199, %v1199
        %1216 = vrot.lane.b32.xlu0 %v739, 104
        %v1217 = vpop.permute.xlu0 %1216
        %v1219 = vsel %vm783, %v1217, 0
        %v1222 = vsel %vm787, %v1215, 0
        %1224 = vmatprep.subr.bf16.mxu0 0
        %1225 = vmatpush1.bf16.msra.mxu0 %v1222
        %1226 = vmatprep.subr.bf16.mxu0 0
        %1227 = vmatpush1.bf16.msra.mxu0 0
        %1228 = vmatprep.subr.bf16.mxu0 0
        %1229 = vmatpush1.bf16.msra.mxu0 0
        %1230 = vmatprep.subr.bf16.mxu0 0
        %1231 = vmatpush1.bf16.msra.mxu0 0
        %1232 = vmatprep.subr.bf16.mxu0 0
        %1233 = vmatpush1.bf16.msra.mxu0 0
        %1234 = vmatprep.subr.bf16.mxu0 0
        %1235 = vmatpush1.bf16.msra.mxu0 0
        %1236 = vmatprep.subr.bf16.mxu0 0
        %1237 = vmatpush1.bf16.msra.mxu0 0
        %1238 = vmatprep.subr.bf16.mxu0 0
        %1239 = vmatpush1.bf16.msra.mxu0 0
        %1240 = vmatprep.subr.bf16.mxu0 0
        %1241 = vmatpush1.bf16.msra.mxu0 0
        %1242 = vmatprep.subr.bf16.mxu0 0
        %1243 = vmatpush1.bf16.msra.mxu0 0
        %1244 = vmatprep.subr.bf16.mxu0 0
        %1245 = vmatpush1.bf16.msra.mxu0 0
        %1246 = vmatprep.subr.bf16.mxu0 0
        %1247 = vmatpush1.bf16.msra.mxu0 0
        %1248 = vmatprep.subr.bf16.mxu0 0
        %1249 = vmatpush1.bf16.msra.mxu0 0
        %1250 = vmatprep.subr.bf16.mxu0 0
        %1251 = vmatpush1.bf16.msra.mxu0 0
        %1252 = vmatprep.subr.bf16.mxu0 0
        %1253 = vmatpush1.bf16.msra.mxu0 0
        %1254 = vmatprep.subr.bf16.mxu0 0
        %1255 = vmatpush1.bf16.msra.mxu0 0
        %1256 = vmatprep.mubr.bf16.mxu0 0
        %1257 = vmatmul.mubr.bf16.gmra.mrb[0].mxu0 %v1219
        %v1258 = vpop.f32.mrb[0].mxu0
        %v1259 = vadd.f32 %v781, %v1258
        %v1260 = vpop.f32.mrb[0].mxu0
        %v1261 = vpop.f32.mrb[0].mxu0
        %v1262 = vpop.f32.mrb[0].mxu0
        %1263 = vdwg.mxu0
        %v1264 = vsel %vm783, %v1259, -inf
        %1265 = vmax.xlane.f32.xlu0 %v1264
        %v1266 = vpop.xlane.xlu0 %1265
        %v1267 = vsub.f32 %v1259, %v1266
        %v1268 = vmul.f32 %v1267, 1.442695
        %v1269 = vpow.pop %v1268
        %v1270 = vsel %vm783, %v1269, 0.0
        %1271 = vadd.xlane.f32.xlu0 %v1270
        %v1272 = vpop.xlane.xlu0 %1271
        %v1273 = vrcp.pop %v1272
        %v1274 = vmul.f32 %v1269, %v1273
        %v1275 = vpack.c.bf16 %v1274, %v1274
        %1276 = vrot.lane.b32.xlu0 %v739, 40
        %v1277 = vpop.permute.xlu0 %1276
        %v1279 = vsel %vm783, %v1275, 0
        %v1282 = vsel %vm787, %v1277, 0
        %1284 = vmatprep.subr.bf16.mxu0 0
        %1285 = vmatpush1.bf16.msra.mxu0 %v1282
        %1286 = vmatprep.subr.bf16.mxu0 0
        %1287 = vmatpush1.bf16.msra.mxu0 0
        %1288 = vmatprep.subr.bf16.mxu0 0
        %1289 = vmatpush1.bf16.msra.mxu0 0
        %1290 = vmatprep.subr.bf16.mxu0 0
        %1291 = vmatpush1.bf16.msra.mxu0 0
        %1292 = vmatprep.subr.bf16.mxu0 0
        %1293 = vmatpush1.bf16.msra.mxu0 0
        %1294 = vmatprep.subr.bf16.mxu0 0
        %1295 = vmatpush1.bf16.msra.mxu0 0
        %1296 = vmatprep.subr.bf16.mxu0 0
        %1297 = vmatpush1.bf16.msra.mxu0 0
        %1298 = vmatprep.subr.bf16.mxu0 0
        %1299 = vmatpush1.bf16.msra.mxu0 0
        %1300 = vmatprep.subr.bf16.mxu0 0
        %1301 = vmatpush1.bf16.msra.mxu0 0
        %1302 = vmatprep.subr.bf16.mxu0 0
        %1303 = vmatpush1.bf16.msra.mxu0 0
        %1304 = vmatprep.subr.bf16.mxu0 0
        %1305 = vmatpush1.bf16.msra.mxu0 0
        %1306 = vmatprep.subr.bf16.mxu0 0
        %1307 = vmatpush1.bf16.msra.mxu0 0
        %1308 = vmatprep.subr.bf16.mxu0 0
        %1309 = vmatpush1.bf16.msra.mxu0 0
        %1310 = vmatprep.subr.bf16.mxu0 0
        %1311 = vmatpush1.bf16.msra.mxu0 0
        %1312 = vmatprep.subr.bf16.mxu0 0
        %1313 = vmatpush1.bf16.msra.mxu0 0
        %1314 = vmatprep.subr.bf16.mxu0 0
        %1315 = vmatpush1.bf16.msra.mxu0 0
        %1316 = vmatprep.mubr.bf16.mxu0 0
        %1317 = vmatmul.mubr.bf16.gmra.mrb[0].mxu0 %v1279
        %v1318 = vpop.f32.mrb[0].mxu0
        %v1319 = vadd.f32 0.0, %v1318
        %v1320 = vpop.f32.mrb[0].mxu0
        %v1321 = vpop.f32.mrb[0].mxu0
        %v1322 = vpop.f32.mrb[0].mxu0
        %1323 = vdwg.mxu0
        %1325 = vrot.lane.b32.xlu0 %v1031, 8
        %v1326 = vpop.permute.xlu0 %1325
        %1329 = vrot.lane.b32.xlu0 %v1175, 16
        %v1330 = vpop.permute.xlu0 %1329
        %1333 = vrot.lane.b32.xlu0 %v1319, 24
        %v1334 = vpop.permute.xlu0 %1333
        %v1336 = vsel %vm783, %v887, %v1326
        %vm1337 = vcmask 130048
        %v1338 = vsel %vm1337, %v1336, %v1330
        %vm1339 = vcmask 195584
        %v1340 = vsel %vm1339, %v1338, %v1334
        %v1341 = vpack.c.bf16 %v1340, %v1340
        %v1342 = vld [vmem:[%s6] sm:$0xf]
        %v1343 = vld [vmem:[%s6 + $0x4] sm:$0xf]
        %v1344 = vld [vmem:[%s6 + $0x8] sm:$0xf]
        %v1345 = vld [vmem:[%s6 + $0xc] sm:$0xf]
        %v1346 = vld [vmem:[%s7] sm:$0x1]
        %v1348 = vlaneseq
        %v1349 = vshrl.u32 %v1348, 7
        %v1350 = vsub.s32 0, %v1349
        %v1351 = vrot.slane %v1346, %v1350
        %v1357 = vunpack.c.l.b16 %v1342
        %v1358 = vunpack.c.l.b16 %v1343
        %v1359 = vunpack.c.l.b16 %v1344
        %v1360 = vunpack.c.l.b16 %v1345
        %v1361 = vpack.c.b16 %v1358, %v1357
        %v1362 = vpack.c.b16 %v1360, %v1359
        %v1366 = vsel %vm642, %v1341, 0
        %1368 = vmatprep.subr.bf16.mxu0 0
        %1369 = vmatpush1.bf16.msra.mxu0 %v1361
        %1370 = vmatprep.subr.bf16.mxu0 0
        %1371 = vmatpush1.bf16.msra.mxu0 %v1362
        %1372 = vmatprep.subr.bf16.mxu0 0
        %1373 = vmatpush1.bf16.msra.mxu0 0
        %1374 = vmatprep.subr.bf16.mxu0 0
        %1375 = vmatpush1.bf16.msra.mxu0 0
        %1376 = vmatprep.subr.bf16.mxu0 0
        %1377 = vmatpush1.bf16.msra.mxu0 0
        %1378 = vmatprep.subr.bf16.mxu0 0
        %1379 = vmatpush1.bf16.msra.mxu0 0
        %1380 = vmatprep.subr.bf16.mxu0 0
        %1381 = vmatpush1.bf16.msra.mxu0 0
        %1382 = vmatprep.subr.bf16.mxu0 0
        %1383 = vmatpush1.bf16.msra.mxu0 0
        %1384 = vmatprep.subr.bf16.mxu0 0
        %1385 = vmatpush1.bf16.msra.mxu0 0
        %1386 = vmatprep.subr.bf16.mxu0 0
        %1387 = vmatpush1.bf16.msra.mxu0 0
        %1388 = vmatprep.subr.bf16.mxu0 0
        %1389 = vmatpush1.bf16.msra.mxu0 0
        %1390 = vmatprep.subr.bf16.mxu0 0
        %1391 = vmatpush1.bf16.msra.mxu0 0
        %1392 = vmatprep.subr.bf16.mxu0 0
        %1393 = vmatpush1.bf16.msra.mxu0 0
        %1394 = vmatprep.subr.bf16.mxu0 0
        %1395 = vmatpush1.bf16.msra.mxu0 0
        %1396 = vmatprep.subr.bf16.mxu0 0
        %1397 = vmatpush1.bf16.msra.mxu0 0
        %1398 = vmatprep.subr.bf16.mxu0 0
        %1399 = vmatpush1.bf16.msra.mxu0 0
        %1400 = vmatprep.mubr.bf16.mxu0 0
        %1401 = vmatmul.mubr.bf16.gmra.mrb[0].mxu0 %v1366
        %v1402 = vpop.f32.mrb[0].mxu0
        %v1403 = vadd.f32 %v1351, %v1402
        %v1404 = vpop.f32.mrb[0].mxu0
        %v1405 = vpop.f32.mrb[0].mxu0
        %v1406 = vpop.f32.mrb[0].mxu0
        %1407 = vdwg.mxu0
        %v1408 = vadd.f32 %v1403, %v670
        %v1409 = vld [vmem:[%s8] sm:$0x1]
        %v1410 = vld [vmem:[%s9] sm:$0x1]
        %v1411 = vsel %vm642, %v1408, 0.0
        %1412 = vadd.xlane.f32.xlu0 %v1411
        %v1413 = vpop.xlane.xlu0 %1412
        %v1414 = vmul.f32 %v1413, %v646
        %v1415 = vsub.f32 %v1408, %v1414
        %v1416 = vmul.f32 %v1415, %v1415
        %v1417 = vsel %vm642, %v1416, 0.0
        %1418 = vadd.xlane.f32.xlu0 %v1417
        %v1419 = vpop.xlane.xlu0 %1418
        %v1420 = vmul.f32 %v1419, %v646
        %v1421 = vadd.f32 %v1420, 1e-12
        %v1422 = vrsqrt.pop %v1421
        %v1423 = vmul.f32 %v1415, %v1422
        %v1425 = vlaneseq
        %v1426 = vshrl.u32 %v1425, 7
        %v1427 = vsub.s32 0, %v1426
        %v1428 = vrot.slane %v1409, %v1427
        %v1430 = vmul.f32 %v1423, %v1428
        %v1432 = vlaneseq
        %v1433 = vshrl.u32 %v1432, 7
        %v1434 = vsub.s32 0, %v1433
        %v1435 = vrot.slane %v1410, %v1434
        %v1437 = vadd.f32 %v1430, %v1435
        %v1438 = vpack.c.bf16 %v1437, %v1437
        %v1439 = vld [vmem:[%s10] sm:$0xf]
        %v1440 = vld [vmem:[%s10 + $0x4] sm:$0xf]
        %v1441 = vld [vmem:[%s10 + $0x8] sm:$0xf]
        %v1442 = vld [vmem:[%s10 + $0xc] sm:$0xf]
        %v1443 = vld [vmem:[%s11] sm:$0x1]
        %v1445 = vlaneseq
        %v1446 = vshrl.u32 %v1445, 7
        %v1447 = vsub.s32 0, %v1446
        %v1448 = vrot.slane %v1443, %v1447
        %v1454 = vunpack.c.l.b16 %v1439
        %v1455 = vunpack.c.l.b16 %v1440
        %v1456 = vunpack.c.l.b16 %v1441
        %v1457 = vunpack.c.l.b16 %v1442
        %v1458 = vpack.c.b16 %v1455, %v1454
        %v1459 = vpack.c.b16 %v1457, %v1456
        %v1463 = vsel %vm642, %v1438, 0
        %1465 = vmatprep.subr.bf16.mxu0 0
        %1466 = vmatpush1.bf16.msra.mxu0 %v1458
        %1467 = vmatprep.subr.bf16.mxu0 0
        %1468 = vmatpush1.bf16.msra.mxu0 %v1459
        %1469 = vmatprep.subr.bf16.mxu0 0
        %1470 = vmatpush1.bf16.msra.mxu0 0
        %1471 = vmatprep.subr.bf16.mxu0 0
        %1472 = vmatpush1.bf16.msra.mxu0 0
        %1473 = vmatprep.subr.bf16.mxu0 0
        %1474 = vmatpush1.bf16.msra.mxu0 0
        %1475 = vmatprep.subr.bf16.mxu0 0
        %1476 = vmatpush1.bf16.msra.mxu0 0
        %1477 = vmatprep.subr.bf16.mxu0 0
        %1478 = vmatpush1.bf16.msra.mxu0 0
        %1479 = vmatprep.subr.bf16.mxu0 0
        %1480 = vmatpush1.bf16.msra.mxu0 0
        %1481 = vmatprep.subr.bf16.mxu0 0
        %1482 = vmatpush1.bf16.msra.mxu0 0
        %1483 = vmatprep.subr.bf16.mxu0 0
        %1484 = vmatpush1.bf16.msra.mxu0 0
        %1485 = vmatprep.subr.bf16.mxu0 0
        %1486 = vmatpush1.bf16.msra.mxu0 0
        %1487 = vmatprep.subr.bf16.mxu0 0
        %1488 = vmatpush1.bf16.msra.mxu0 0
        %1489 = vmatprep.subr.bf16.mxu0 0
        %1490 = vmatpush1.bf16.msra.mxu0 0
        %1491 = vmatprep.subr.bf16.mxu0 0
        %1492 = vmatpush1.bf16.msra.mxu0 0
        %1493 = vmatprep.subr.bf16.mxu0 0
        %1494 = vmatpush1.bf16.msra.mxu0 0
        %1495 = vmatprep.subr.bf16.mxu0 0
        %1496 = vmatpush1.bf16.msra.mxu0 0
        %1497 = vmatprep.mubr.bf16.mxu0 0
        %1498 = vmatmul.mubr.bf16.gmra.mrb[0].mxu0 %v1463
        %v1499 = vpop.f32.mrb[0].mxu0
        %v1500 = vadd.f32 %v1448, %v1499
        %v1501 = vpop.f32.mrb[0].mxu0
        %v1502 = vpop.f32.mrb[0].mxu0
        %v1503 = vpop.f32.mrb[0].mxu0
        %1504 = vdwg.mxu0
        %v1505 = vmul.f32 %v1500, %v1500
        %v1506 = vmul.f32 %v1500, %v1505
        %v1507 = vmul.f32 %v1506, 0.044715
        %v1508 = vadd.f32 %v1500, %v1507
        %v1509 = vmul.f32 %v1508, 0.7978846
        %v1510 = vtanh.pop %v1509
        %v1511 = vadd.f32 %v1510, 1.0
        %v1512 = vmul.f32 %v1511, 0.5
        %v1513 = vmul.f32 %v1500, %v1512
        %v1514 = vpack.c.bf16 %v1513, %v1513
        %v1515 = vld [vmem:[%s12] sm:$0xf]
        %v1516 = vld [vmem:[%s12 + $0x4] sm:$0xf]
        %v1517 = vld [vmem:[%s12 + $0x8] sm:$0xf]
        %v1518 = vld [vmem:[%s12 + $0xc] sm:$0xf]
        %v1519 = vld [vmem:[%s12 + $0x10] sm:$0xf]
        %v1520 = vld [vmem:[%s12 + $0x14] sm:$0xf]
        %v1521 = vld [vmem:[%s12 + $0x18] sm:$0xf]
        %v1522 = vld [vmem:[%s12 + $0x1c] sm:$0xf]
        %v1523 = vld [vmem:[%s12 + $0x20] sm:$0xf]
        %v1524 = vld [vmem:[%s12 + $0x24] sm:$0xf]
        %v1525 = vld [vmem:[%s12 + $0x28] sm:$0xf]
        %v1526 = vld [vmem:[%s12 + $0x2c] sm:$0xf]
        %v1527 = vld [vmem:[%s12 + $0x30] sm:$0xf]
        %v1528 = vld [vmem:[%s12 + $0x34] sm:$0xf]
        %v1529 = vld [vmem:[%s12 + $0x38] sm:$0xf]
        %v1530 = vld [vmem:[%s12 + $0x3c] sm:$0xf]
        %v1531 = vld [vmem:[%s13] sm:$0x1]
        %v1533 = vlaneseq
        %v1534 = vshrl.u32 %v1533, 7
        %v1535 = vsub.s32 0, %v1534
        %v1536 = vrot.slane %v1531, %v1535
        %v1554 = vunpack.c.l.b16 %v1515
        %v1555 = vunpack.c.l.b16 %v1516
        %v1556 = vunpack.c.l.b16 %v1517
        %v1557 = vunpack.c.l.b16 %v1518
        %v1558 = vunpack.c.l.b16 %v1519
        %v1559 = vunpack.c.l.b16 %v1520
        %v1560 = vunpack.c.l.b16 %v1521
        %v1561 = vunpack.c.l.b16 %v1522
        %v1562 = vunpack.c.l.b16 %v1523
        %v1563 = vunpack.c.l.b16 %v1524
        %v1564 = vunpack.c.l.b16 %v1525
        %v1565 = vunpack.c.l.b16 %v1526
        %v1566 = vunpack.c.l.b16 %v1527
        %v1567 = vunpack.c.l.b16 %v1528
        %v1568 = vunpack.c.l.b16 %v1529
        %v1569 = vunpack.c.l.b16 %v1530
        %v1570 = vpack.c.b16 %v1555, %v1554
        %v1571 = vpack.c.b16 %v1557, %v1556
        %v1572 = vpack.c.b16 %v1559, %v1558
        %v1573 = vpack.c.b16 %v1561, %v1560
        %v1574 = vpack.c.b16 %v1563, %v1562
        %v1575 = vpack.c.b16 %v1565, %v1564
        %v1576 = vpack.c.b16 %v1567, %v1566
        %v1577 = vpack.c.b16 %v1569, %v1568
        %1586 = vmatprep.subr.bf16.mxu0 0
        %1587 = vmatpush1.bf16.msra.mxu0 %v1570
        %1588 = vmatprep.subr.bf16.mxu0 0
        %1589 = vmatpush1.bf16.msra.mxu0 %v1571
        %1590 = vmatprep.subr.bf16.mxu0 0
        %1591 = vmatpush1.bf16.msra.mxu0 %v1572
        %1592 = vmatprep.subr.bf16.mxu0 0
        %1593 = vmatpush1.bf16.msra.mxu0 %v1573
        %1594 = vmatprep.subr.bf16.mxu0 0
        %1595 = vmatpush1.bf16.msra.mxu0 %v1574
        %1596 = vmatprep.subr.bf16.mxu0 0
        %1597 = vmatpush1.bf16.msra.mxu0 %v1575
        %1598 = vmatprep.subr.bf16.mxu0 0
        %1599 = vmatpush1.bf16.msra.mxu0 %v1576
        %1600 = vmatprep.subr.bf16.mxu0 0
        %1601 = vmatpush1.bf16.msra.mxu0 %v1577
        %1602 = vmatprep.subr.bf16.mxu0 0
        %1603 = vmatpush1.bf16.msra.mxu0 0
        %1604 = vmatprep.subr.bf16.mxu0 0
        %1605 = vmatpush1.bf16.msra.mxu0 0
        %1606 = vmatprep.subr.bf16.mxu0 0
        %1607 = vmatpush1.bf16.msra.mxu0 0
        %1608 = vmatprep.subr.bf16.mxu0 0
        %1609 = vmatpush1.bf16.msra.mxu0 0
        %1610 = vmatprep.subr.bf16.mxu0 0
        %1611 = vmatpush1.bf16.msra.mxu0 0
        %1612 = vmatprep.subr.bf16.mxu0 0
        %1613 = vmatpush1.bf16.msra.mxu0 0
        %1614 = vmatprep.subr.bf16.mxu0 0
        %1615 = vmatpush1.bf16.msra.mxu0 0
        %1616 = vmatprep.subr.bf16.mxu0 0
        %1617 = vmatpush1.bf16.msra.mxu0 0
        %1618 = vmatprep.mubr.bf16.mxu0 0
        %1619 = vmatmul.mubr.bf16.gmra.mrb[0].mxu0 %v1514
        %v1620 = vpop.f32.mrb[0].mxu0
        %v1621 = vadd.f32 %v1536, %v1620
        %v1622 = vpop.f32.mrb[0].mxu0
        %v1623 = vpop.f32.mrb[0].mxu0
        %v1624 = vpop.f32.mrb[0].mxu0
        %1625 = vdwg.mxu0
        %v1626 = vadd.f32 %v1621, %v1437
        %v1627 = vld [vmem:[%s14] sm:$0x1]
        %v1628 = vld [vmem:[%s15] sm:$0x1]
        %v1629 = vsel %vm642, %v1626, 0.0
        %1630 = vadd.xlane.f32.xlu0 %v1629
        %v1631 = vpop.xlane.xlu0 %1630
        %v1632 = vmul.f32 %v1631, %v646
        %v1633 = vsub.f32 %v1626, %v1632
        %v1634 = vmul.f32 %v1633, %v1633
        %v1635 = vsel %vm642, %v1634, 0.0
        %1636 = vadd.xlane.f32.xlu0 %v1635
        %v1637 = vpop.xlane.xlu0 %1636
        %v1638 = vmul.f32 %v1637, %v646
        %v1639 = vadd.f32 %v1638, 1e-12
        %v1640 = vrsqrt.pop %v1639
        %v1641 = vmul.f32 %v1633, %v1640
        %v1643 = vlaneseq
        %v1644 = vshrl.u32 %v1643, 7
        %v1645 = vsub.s32 0, %v1644
        %v1646 = vrot.slane %v1627, %v1645
        %v1648 = vmul.f32 %v1641, %v1646
        %v1650 = vlaneseq
        %v1651 = vshrl.u32 %v1650, 7
        %v1652 = vsub.s32 0, %v1651
        %v1653 = vrot.slane %v1628, %v1652
        %v1655 = vadd.f32 %v1648, %v1653
        %v1656 = vpack.c.bf16 %v1655, %v1655
        %s1657 = scalar_lea.vmem %s4, 16
        %v1658 = vld [vmem:[%s1657] sm:$0xf]
        %v1659 = vld [vmem:[%s1657 + $0x4] sm:$0xf]
        %v1660 = vld [vmem:[%s1657 + $0x8] sm:$0xf]
        %v1661 = vld [vmem:[%s1657 + $0xc] sm:$0xf]
        %s1662 = scalar_lea.vmem %s5, 1
        %v1663 = vld [vmem:[%s1662] sm:$0x1]
        %v1665 = vlaneseq
        %v1666 = vshrl.u32 %v1665, 7
        %v1667 = vsub.s32 0, %v1666
        %v1668 = vrot.slane %v1663, %v1667
        %v1674 = vunpack.c.l.b16 %v1658
        %v1675 = vunpack.c.l.b16 %v1659
        %v1676 = vunpack.c.l.b16 %v1660
        %v1677 = vunpack.c.l.b16 %v1661
        %v1678 = vpack.c.b16 %v1675, %v1674
        %v1679 = vpack.c.b16 %v1677, %v1676
        %v1683 = vsel %vm642, %v1656, 0
        %1685 = vmatprep.subr.bf16.mxu0 0
        %1686 = vmatpush1.bf16.msra.mxu0 %v1678
        %1687 = vmatprep.subr.bf16.mxu0 0
        %1688 = vmatpush1.bf16.msra.mxu0 %v1679
        %1689 = vmatprep.subr.bf16.mxu0 0
        %1690 = vmatpush1.bf16.msra.mxu0 0
        %1691 = vmatprep.subr.bf16.mxu0 0
        %1692 = vmatpush1.bf16.msra.mxu0 0
        %1693 = vmatprep.subr.bf16.mxu0 0
        %1694 = vmatpush1.bf16.msra.mxu0 0
        %1695 = vmatprep.subr.bf16.mxu0 0
        %1696 = vmatpush1.bf16.msra.mxu0 0
        %1697 = vmatprep.subr.bf16.mxu0 0
        %1698 = vmatpush1.bf16.msra.mxu0 0
        %1699 = vmatprep.subr.bf16.mxu0 0
        %1700 = vmatpush1.bf16.msra.mxu0 0
        %1701 = vmatprep.subr.bf16.mxu0 0
        %1702 = vmatpush1.bf16.msra.mxu0 0
        %1703 = vmatprep.subr.bf16.mxu0 0
        %1704 = vmatpush1.bf16.msra.mxu0 0
        %1705 = vmatprep.subr.bf16.mxu0 0
        %1706 = vmatpush1.bf16.msra.mxu0 0
        %1707 = vmatprep.subr.bf16.mxu0 0
        %1708 = vmatpush1.bf16.msra.mxu0 0
        %1709 = vmatprep.subr.bf16.mxu0 0
        %1710 = vmatpush1.bf16.msra.mxu0 0
        %1711 = vmatprep.subr.bf16.mxu0 0
        %1712 = vmatpush1.bf16.msra.mxu0 0
        %1713 = vmatprep.subr.bf16.mxu0 0
        %1714 = vmatpush1.bf16.msra.mxu0 0
        %1715 = vmatprep.subr.bf16.mxu0 0
        %1716 = vmatpush1.bf16.msra.mxu0 0
        %1717 = vmatprep.mubr.bf16.mxu0 0
        %1718 = vmatmul.mubr.bf16.gmra.mrb[0].mxu0 %v1683
        %v1719 = vpop.f32.mrb[0].mxu0
        %v1720 = vadd.f32 %v1668, %v1719
        %v1721 = vpop.f32.mrb[0].mxu0
        %v1722 = vpop.f32.mrb[0].mxu0
        %v1723 = vpop.f32.mrb[0].mxu0
        %1724 = vdwg.mxu0
        %v1725 = vpack.c.bf16 %v1720, %v1720
        %1727 = vrot.lane.b32.xlu0 %v1720, 96
        %v1728 = vpop.permute.xlu0 %1727
        %1730 = vxpose.xlu0.b32.start [1/16] %v1728, 128
        %1731 = vxpose.xlu0.b32.cont [2/16] 0.0, 128
        %1732 = vxpose.xlu0.b32.cont [3/16] 0.0, 128
        %1733 = vxpose.xlu0.b32.cont [4/16] 0.0, 128
        %1734 = vxpose.xlu0.b32.cont [5/16] 0.0, 128
        %1735 = vxpose.xlu0.b32.cont [6/16] 0.0, 128
        %1736 = vxpose.xlu0.b32.cont [7/16] 0.0, 128
        %1737 = vxpose.xlu0.b32.cont [8/16] 0.0, 128
        %1738 = vxpose.xlu0.b32.cont [9/16] 0.0, 128
        %1739 = vxpose.xlu0.b32.cont [10/16] 0.0, 128
        %1740 = vxpose.xlu0.b32.cont [11/16] 0.0, 128
        %1741 = vxpose.xlu0.b32.cont [12/16] 0.0, 128
        %1742 = vxpose.xlu0.b32.cont [13/16] 0.0, 128
        %1743 = vxpose.xlu0.b32.cont [14/16] 0.0, 128
        %1744 = vxpose.xlu0.b32.cont [15/16] 0.0, 128
        %1745 = vxpose.xlu0.b32.end [16/16] 0.0, 128
        %v1746 = vpop.trf.xlu0
        %v1747 = vpop.trf.xlu0
        %v1748 = vpop.trf.xlu0
        %v1749 = vpop.trf.xlu0
        %v1750 = vpop.trf.xlu0
        %v1751 = vpop.trf.xlu0
        %v1752 = vpop.trf.xlu0
        %v1753 = vpop.trf.xlu0
        %v1754 = vpop.trf.xlu0
        %v1755 = vpop.trf.xlu0
        %v1756 = vpop.trf.xlu0
        %v1757 = vpop.trf.xlu0
        %v1758 = vpop.trf.xlu0
        %v1759 = vpop.trf.xlu0
        %v1760 = vpop.trf.xlu0
        %v1761 = vpop.trf.xlu0
        %v1762 = vpack.c.bf16 %v1746, %v1746
        %v1764 = vsel %vm783, %v1725, 0
        %v1767 = vsel %vm787, %v1762, 0
        %1769 = vmatprep.subr.bf16.mxu0 0
        %1770 = vmatpush1.bf16.msra.mxu0 %v1767
        %1771 = vmatprep.subr.bf16.mxu0 0
        %1772 = vmatpush1.bf16.msra.mxu0 0
        %1773 = vmatprep.subr.bf16.mxu0 0
        %1774 = vmatpush1.bf16.msra.mxu0 0
        %1775 = vmatprep.subr.bf16.mxu0 0
        %1776 = vmatpush1.bf16.msra.mxu0 0
        %1777 = vmatprep.subr.bf16.mxu0 0
        %1778 = vmatpush1.bf16.msra.mxu0 0
        %1779 = vmatprep.subr.bf16.mxu0 0
        %1780 = vmatpush1.bf16.msra.mxu0 0
        %1781 = vmatprep.subr.bf16.mxu0 0
        %1782 = vmatpush1.bf16.msra.mxu0 0
        %1783 = vmatprep.subr.bf16.mxu0 0
        %1784 = vmatpush1.bf16.msra.mxu0 0
        %1785 = vmatprep.subr.bf16.mxu0 0
        %1786 = vmatpush1.bf16.msra.mxu0 0
        %1787 = vmatprep.subr.bf16.mxu0 0
        %1788 = vmatpush1.bf16.msra.mxu0 0
        %1789 = vmatprep.subr.bf16.mxu0 0
        %1790 = vmatpush1.bf16.msra.mxu0 0
        %1791 = vmatprep.subr.bf16.mxu0 0
        %1792 = vmatpush1.bf16.msra.mxu0 0
        %1793 = vmatprep.subr.bf16.mxu0 0
        %1794 = vmatpush1.bf16.msra.mxu0 0
        %1795 = vmatprep.subr.bf16.mxu0 0
        %1796 = vmatpush1.bf16.msra.mxu0 0
        %1797 = vmatprep.subr.bf16.mxu0 0
        %1798 = vmatpush1.bf16.msra.mxu0 0
        %1799 = vmatprep.subr.bf16.mxu0 0
        %1800 = vmatpush1.bf16.msra.mxu0 0
        %1801 = vmatprep.mubr.bf16.mxu0 0
        %1802 = vmatmul.mubr.bf16.gmra.mrb[0].mxu0 %v1764
        %v1803 = vpop.f32.mrb[0].mxu0
        %v1804 = vadd.f32 %v781, %v1803
        %v1805 = vpop.f32.mrb[0].mxu0
        %v1806 = vpop.f32.mrb[0].mxu0
        %v1807 = vpop.f32.mrb[0].mxu0
        %1808 = vdwg.mxu0
        %v1809 = vsel %vm783, %v1804, -inf
        %1810 = vmax.xlane.f32.xlu0 %v1809
        %v1811 = vpop.xlane.xlu0 %1810
        %v1812 = vsub.f32 %v1804, %v1811
        %v1813 = vmul.f32 %v1812, 1.442695
        %v1814 = vpow.pop %v1813
        %v1815 = vsel %vm783, %v1814, 0.0
        %1816 = vadd.xlane.f32.xlu0 %v1815
        %v1817 = vpop.xlane.xlu0 %1816
        %v1818 = vrcp.pop %v1817
        %v1819 = vmul.f32 %v1814, %v1818
        %v1820 = vpack.c.bf16 %v1819, %v1819
        %1822 = vrot.lane.b32.xlu0 %v1725, 64
        %v1823 = vpop.permute.xlu0 %1822
        %v1825 = vsel %vm783, %v1820, 0
        %v1828 = vsel %vm787, %v1823, 0
        %1830 = vmatprep.subr.bf16.mxu0 0
        %1831 = vmatpush1.bf16.msra.mxu0 %v1828
        %1832 = vmatprep.subr.bf16.mxu0 0
        %1833 = vmatpush1.bf16.msra.mxu0 0
        %1834 = vmatprep.subr.bf16.mxu0 0
        %1835 = vmatpush1.bf16.msra.mxu0 0
        %1836 = vmatprep.subr.bf16.mxu0 0
        %1837 = vmatpush1.bf16.msra.mxu0 0
        %1838 = vmatprep.subr.bf16.mxu0 0
        %1839 = vmatpush1.bf16.msra.mxu0 0
        %1840 = vmatprep.subr.bf16.mxu0 0
        %1841 = vmatpush1.bf16.msra.mxu0 0
        %1842 = vmatprep.subr.bf16.mxu0 0
        %1843 = vmatpush1.bf16.msra.mxu0 0
        %1844 = vmatprep.subr.bf16.mxu0 0
        %1845 = vmatpush1.bf16.msra.mxu0 0
        %1846 = vmatprep.subr.bf16.mxu0 0
        %1847 = vmatpush1.bf16.msra.mxu0 0
        %1848 = vmatprep.subr.bf16.mxu0 0
        %1849 = vmatpush1.bf16.msra.mxu0 0
        %1850 = vmatprep.subr.bf16.mxu0 0
        %1851 = vmatpush1.bf16.msra.mxu0 0
        %1852 = vmatprep.subr.bf16.mxu0 0
        %1853 = vmatpush1.bf16.msra.mxu0 0
        %1854 = vmatprep.subr.bf16.mxu0 0
        %1855 = vmatpush1.bf16.msra.mxu0 0
        %1856 = vmatprep.subr.bf16.mxu0 0
        %1857 = vmatpush1.bf16.msra.mxu0 0
        %1858 = vmatprep.subr.bf16.mxu0 0
        %1859 = vmatpush1.bf16.msra.mxu0 0
        %1860 = vmatprep.subr.bf16.mxu0 0
        %1861 = vmatpush1.bf16.msra.mxu0 0
        %1862 = vmatprep.mubr.bf16.mxu0 0
        %1863 = vmatmul.mubr.bf16.gmra.mrb[0].mxu0 %v1825
        %v1864 = vpop.f32.mrb[0].mxu0
        %v1865 = vadd.f32 0.0, %v1864
        %v1866 = vpop.f32.mrb[0].mxu0
        %v1867 = vpop.f32.mrb[0].mxu0
        %v1868 = vpop.f32.mrb[0].mxu0
        %1869 = vdwg.mxu0
        %1870 = vrot.lane.b32.xlu0 %v1720, 88
        %v1871 = vpop.permute.xlu0 %1870
        %1873 = vxpose.xlu0.b32.start [1/16] %v1871, 128
        %1874 = vxpose.xlu0.b32.cont [2/16] 0.0, 128
        %1875 = vxpose.xlu0.b32.cont [3/16] 0.0, 128
        %1876 = vxpose.xlu0.b32.cont [4/16] 0.0, 128
        %1877 = vxpose.xlu0.b32.cont [5/16] 0.0, 128
        %1878 = vxpose.xlu0.b32.cont [6/16] 0.0, 128
        %1879 = vxpose.xlu0.b32.cont [7/16] 0.0, 128
        %1880 = vxpose.xlu0.b32.cont [8/16] 0.0, 128
        %1881 = vxpose.xlu0.b32.cont [9/16] 0.0, 128
        %1882 = vxpose.xlu0.b32.cont [10/16] 0.0, 128
        %1883 = vxpose.xlu0.b32.cont [11/16] 0.0, 128
        %1884 = vxpose.xlu0.b32.cont [12/16] 0.0, 128
        %1885 = vxpose.xlu0.b32.cont [13/16] 0.0, 128
        %1886 = vxpose.xlu0.b32.cont [14/16] 0.0, 128
        %1887 = vxpose.xlu0.b32.cont [15/16] 0.0, 128
        %1888 = vxpose.xlu0.b32.end [16/16] 0.0, 128
        %v1889 = vpop.trf.xlu0
        %v1890 = vpop.trf.xlu0
        %v1891 = vpop.trf.xlu0
        %v1892 = vpop.trf.xlu0
        %v1893 = vpop.trf.xlu0
        %v1894 = vpop.trf.xlu0
        %v1895 = vpop.trf.xlu0
        %v1896 = vpop.trf.xlu0
        %v1897 = vpop.trf.xlu0
        %v1898 = vpop.trf.xlu0
        %v1899 = vpop.trf.xlu0
        %v1900 = vpop.trf.xlu0
        %v1901 = vpop.trf.xlu0
        %v1902 = vpop.trf.xlu0
        %v1903 = vpop.trf.xlu0
        %v1904 = vpop.trf.xlu0
        %v1905 = vpack.c.bf16 %v1889, %v1889
        %1906 = vrot.lane.b32.xlu0 %v1725, 120
        %v1907 = vpop.permute.xlu0 %1906
        %v1909 = vsel %vm783, %v1907, 0
        %v1912 = vsel %vm787, %v1905, 0
        %1914 = vmatprep.subr.bf16.mxu0 0
        %1915 = vmatpush1.bf16.msra.mxu0 %v1912
        %1916 = vmatprep.subr.bf16.mxu0 0
        %1917 = vmatpush1.bf16.msra.mxu0 0
        %1918 = vmatprep.subr.bf16.mxu0 0
        %1919 = vmatpush1.bf16.msra.mxu0 0
        %1920 = vmatprep.subr.bf16.mxu0 0
        %1921 = vmatpush1.bf16.msra.mxu0 0
        %1922 = vmatprep.subr.bf16.mxu0 0
        %1923 = vmatpush1.bf16.msra.mxu0 0
        %1924 = vmatprep.subr.bf16.mxu0 0
        %1925 = vmatpush1.bf16.msra.mxu0 0
        %1926 = vmatprep.subr.bf16.mxu0 0
        %1927 = vmatpush1.bf16.msra.mxu0 0
        %1928 = vmatprep.subr.bf16.mxu0 0
        %1929 = vmatpush1.bf16.msra.mxu0 0
        %1930 = vmatprep.subr.bf16.mxu0 0
        %1931 = vmatpush1.bf16.msra.mxu0 0
        %1932 = vmatprep.subr.bf16.mxu0 0
        %1933 = vmatpush1.bf16.msra.mxu0 0
        %1934 = vmatprep.subr.bf16.mxu0 0
        %1935 = vmatpush1.bf16.msra.mxu0 0
        %1936 = vmatprep.subr.bf16.mxu0 0
        %1937 = vmatpush1.bf16.msra.mxu0 0
        %1938 = vmatprep.subr.bf16.mxu0 0
        %1939 = vmatpush1.bf16.msra.mxu0 0
        %1940 = vmatprep.subr.bf16.mxu0 0
        %1941 = vmatpush1.bf16.msra.mxu0 0
        %1942 = vmatprep.subr.bf16.mxu0 0
        %1943 = vmatpush1.bf16.msra.mxu0 0
        %1944 = vmatprep.subr.bf16.mxu0 0
        %1945 = vmatpush1.bf16.msra.mxu0 0
        %1946 = vmatprep.mubr.bf16.mxu0 0
        %1947 = vmatmul.mubr.bf16.gmra.mrb[0].mxu0 %v1909
        %v1948 = vpop.f32.mrb[0].mxu0
        %v1949 = vadd.f32 %v781, %v1948
        %v1950 = vpop.f32.mrb[0].mxu0
        %v1951 = vpop.f32.mrb[0].mxu0
        %v1952 = vpop.f32.mrb[0].mxu0
        %1953 = vdwg.mxu0
        %v1954 = vsel %vm783, %v1949, -inf
        %1955 = vmax.xlane.f32.xlu0 %v1954
        %v1956 = vpop.xlane.xlu0 %1955
        %v1957 = vsub.f32 %v1949, %v1956
        %v1958 = vmul.f32 %v1957, 1.442695
        %v1959 = vpow.pop %v1958
        %v1960 = vsel %vm783, %v1959, 0.0
        %1961 = vadd.xlane.f32.xlu0 %v1960
        %v1962 = vpop.xlane.xlu0 %1961
        %v1963 = vrcp.pop %v1962
        %v1964 = vmul.f32 %v1959, %v1963
        %v1965 = vpack.c.bf16 %v1964, %v1964
        %1966 = vrot.lane.b32.xlu0 %v1725, 56
        %v1967 = vpop.permute.xlu0 %1966
        %v1969 = vsel %vm783, %v1965, 0
        %v1972 = vsel %vm787, %v1967, 0
        %1974 = vmatprep.subr.bf16.mxu0 0
        %1975 = vmatpush1.bf16.msra.mxu0 %v1972
        %1976 = vmatprep.subr.bf16.mxu0 0
        %1977 = vmatpush1.bf16.msra.mxu0 0
        %1978 = vmatprep.subr.bf16.mxu0 0
        %1979 = vmatpush1.bf16.msra.mxu0 0
        %1980 = vmatprep.subr.bf16.mxu0 0
        %1981 = vmatpush1.bf16.msra.mxu0 0
        %1982 = vmatprep.subr.bf16.mxu0 0
        %1983 = vmatpush1.bf16.msra.mxu0 0
        %1984 = vmatprep.subr.bf16.mxu0 0
        %1985 = vmatpush1.bf16.msra.mxu0 0
        %1986 = vmatprep.subr.bf16.mxu0 0
        %1987 = vmatpush1.bf16.msra.mxu0 0
        %1988 = vmatprep.subr.bf16.mxu0 0
        %1989 = vmatpush1.bf16.msra.mxu0 0
        %1990 = vmatprep.subr.bf16.mxu0 0
        %1991 = vmatpush1.bf16.msra.mxu0 0
        %1992 = vmatprep.subr.bf16.mxu0 0
        %1993 = vmatpush1.bf16.msra.mxu0 0
        %1994 = vmatprep.subr.bf16.mxu0 0
        %1995 = vmatpush1.bf16.msra.mxu0 0
        %1996 = vmatprep.subr.bf16.mxu0 0
        %1997 = vmatpush1.bf16.msra.mxu0 0
        %1998 = vmatprep.subr.bf16.mxu0 0
        %1999 = vmatpush1.bf16.msra.mxu0 0
        %2000 = vmatprep.subr.bf16.mxu0 0
        %2001 = vmatpush1.bf16.msra.mxu0 0
        %2002 = vmatprep.subr.bf16.mxu0 0
        %2003 = vmatpush1.bf16.msra.mxu0 0
        %2004 = vmatprep.subr.bf16.mxu0 0
        %2005 = vmatpush1.bf16.msra.mxu0 0
        %2006 = vmatprep.mubr.bf16.mxu0 0
        %2007 = vmatmul.mubr.bf16.gmra.mrb[0].mxu0 %v1969
        %v2008 = vpop.f32.mrb[0].mxu0
        %v2009 = vadd.f32 0.0, %v2008
        %v2010 = vpop.f32.mrb[0].mxu0
        %v2011 = vpop.f32.mrb[0].mxu0
        %v2012 = vpop.f32.mrb[0].mxu0
        %2013 = vdwg.mxu0
        %2014 = vrot.lane.b32.xlu0 %v1720, 80
        %v2015 = vpop.permute.xlu0 %2014
        %2017 = vxpose.xlu0.b32.start [1/16] %v2015, 128
        %2018 = vxpose.xlu0.b32.cont [2/16] 0.0, 128
        %2019 = vxpose.xlu0.b32.cont [3/16] 0.0, 128
        %2020 = vxpose.xlu0.b32.cont [4/16] 0.0, 128
        %2021 = vxpose.xlu0.b32.cont [5/16] 0.0, 128
        %2022 = vxpose.xlu0.b32.cont [6/16] 0.0, 128
        %2023 = vxpose.xlu0.b32.cont [7/16] 0.0, 128
        %2024 = vxpose.xlu0.b32.cont [8/16] 0.0, 128
        %2025 = vxpose.xlu0.b32.cont [9/16] 0.0, 128
        %2026 = vxpose.xlu0.b32.cont [10/16] 0.0, 128
        %2027 = vxpose.xlu0.b32.cont [11/16] 0.0, 128
        %2028 = vxpose.xlu0.b32.cont [12/16] 0.0, 128
        %2029 = vxpose.xlu0.b32.cont [13/16] 0.0, 128
        %2030 = vxpose.xlu0.b32.cont [14/16] 0.0, 128
        %2031 = vxpose.xlu0.b32.cont [15/16] 0.0, 128
        %2032 = vxpose.xlu0.b32.end [16/16] 0.0, 128
        %v2033 = vpop.trf.xlu0
        %v2034 = vpop.trf.xlu0
        %v2035 = vpop.trf.xlu0
        %v2036 = vpop.trf.xlu0
        %v2037 = vpop.trf.xlu0
        %v2038 = vpop.trf.xlu0
        %v2039 = vpop.trf.xlu0
        %v2040 = vpop.trf.xlu0
        %v2041 = vpop.trf.xlu0
        %v2042 = vpop.trf.xlu0
        %v2043 = vpop.trf.xlu0
        %v2044 = vpop.trf.xlu0
        %v2045 = vpop.trf.xlu0
        %v2046 = vpop.trf.xlu0
        %v2047 = vpop.trf.xlu0
        %v2048 = vpop.trf.xlu0
        %v2049 = vpack.c.bf16 %v2033, %v2033
        %2050 = vrot.lane.b32.xlu0 %v1725, 112
        %v2051 = vpop.permute.xlu0 %2050
        %v2053 = vsel %vm783, %v2051, 0
        %v2056 = vsel %vm787, %v2049, 0
        %2058 = vmatprep.subr.bf16.mxu0 0
        %2059 = vmatpush1.bf16.msra.mxu0 %v2056
        %2060 = vmatprep.subr.bf16.mxu0 0
        %2061 = vmatpush1.bf16.msra.mxu0 0
        %2062 = vmatprep.subr.bf16.mxu0 0
        %2063 = vmatpush1.bf16.msra.mxu0 0
        %2064 = vmatprep.subr.bf16.mxu0 0
        %2065 = vmatpush1.bf16.msra.mxu0 0
        %2066 = vmatprep.subr.bf16.mxu0 0
        %2067 = vmatpush1.bf16.msra.mxu0 0
        %2068 = vmatprep.subr.bf16.mxu0 0
        %2069 = vmatpush1.bf16.msra.mxu0 0
        %2070 = vmatprep.subr.bf16.mxu0 0
        %2071 = vmatpush1.bf16.msra.mxu0 0
        %2072 = vmatprep.subr.bf16.mxu0 0
        %2073 = vmatpush1.bf16.msra.mxu0 0
        %2074 = vmatprep.subr.bf16.mxu0 0
        %2075 = vmatpush1.bf16.msra.mxu0 0
        %2076 = vmatprep.subr.bf16.mxu0 0
        %2077 = vmatpush1.bf16.msra.mxu0 0
        %2078 = vmatprep.subr.bf16.mxu0 0
        %2079 = vmatpush1.bf16.msra.mxu0 0
        %2080 = vmatprep.subr.bf16.mxu0 0
        %2081 = vmatpush1.bf16.msra.mxu0 0
        %2082 = vmatprep.subr.bf16.mxu0 0
        %2083 = vmatpush1.bf16.msra.mxu0 0
        %2084 = vmatprep.subr.bf16.mxu0 0
        %2085 = vmatpush1.bf16.msra.mxu0 0
        %2086 = vmatprep.subr.bf16.mxu0 0
        %2087 = vmatpush1.bf16.msra.mxu0 0
        %2088 = vmatprep.subr.bf16.mxu0 0
        %2089 = vmatpush1.bf16.msra.mxu0 0
        %2090 = vmatprep.mubr.bf16.mxu0 0
        %2091 = vmatmul.mubr.bf16.gmra.mrb[0].mxu0 %v2053
        %v2092 = vpop.f32.mrb[0].mxu0
        %v2093 = vadd.f32 %v781, %v2092
        %v2094 = vpop.f32.mrb[0].mxu0
        %v2095 = vpop.f32.mrb[0].mxu0
        %v2096 = vpop.f32.mrb[0].mxu0
        %2097 = vdwg.mxu0
        %v2098 = vsel %vm783, %v2093, -inf
        %2099 = vmax.xlane.f32.xlu0 %v2098
        %v2100 = vpop.xlane.xlu0 %2099
        %v2101 = vsub.f32 %v2093, %v2100
        %v2102 = vmul.f32 %v2101, 1.442695
        %v2103 = vpow.pop %v2102
        %v2104 = vsel %vm783, %v2103, 0.0
        %2105 = vadd.xlane.f32.xlu0 %v2104
        %v2106 = vpop.xlane.xlu0 %2105
        %v2107 = vrcp.pop %v2106
        %v2108 = vmul.f32 %v2103, %v2107
        %v2109 = vpack.c.bf16 %v2108, %v2108
        %2110 = vrot.lane.b32.xlu0 %v1725, 48
        %v2111 = vpop.permute.xlu0 %2110
        %v2113 = vsel %vm783, %v2109, 0
        %v2116 = vsel %vm787, %v2111, 0
        %2118 = vmatprep.subr.bf16.mxu0 0
        %2119 = vmatpush1.bf16.msra.mxu0 %v2116
        %2120 = vmatprep.subr.bf16.mxu0 0
        %2121 = vmatpush1.bf16.msra.mxu0 0
        %2122 = vmatprep.subr.bf16.mxu0 0
        %2123 = vmatpush1.bf16.msra.mxu0 0
        %2124 = vmatprep.subr.bf16.mxu0 0
        %2125 = vmatpush1.bf16.msra.mxu0 0
        %2126 = vmatprep.subr.bf16.mxu0 0
        %2127 = vmatpush1.bf16.msra.mxu0 0
        %2128 = vmatprep.subr.bf16.mxu0 0
        %2129 = vmatpush1.bf16.msra.mxu0 0
        %2130 = vmatprep.subr.bf16.mxu0 0
        %2131 = vmatpush1.bf16.msra.mxu0 0
        %2132 = vmatprep.subr.bf16.mxu0 0
        %2133 = vmatpush1.bf16.msra.mxu0 0
        %2134 = vmatprep.subr.bf16.mxu0 0
        %2135 = vmatpush1.bf16.msra.mxu0 0
        %2136 = vmatprep.subr.bf16.mxu0 0
        %2137 = vmatpush1.bf16.msra.mxu0 0
        %2138 = vmatprep.subr.bf16.mxu0 0
        %2139 = vmatpush1.bf16.msra.mxu0 0
        %2140 = vmatprep.subr.bf16.mxu0 0
        %2141 = vmatpush1.bf16.msra.mxu0 0
        %2142 = vmatprep.subr.bf16.mxu0 0
        %2143 = vmatpush1.bf16.msra.mxu0 0
        %2144 = vmatprep.subr.bf16.mxu0 0
        %2145 = vmatpush1.bf16.msra.mxu0 0
        %2146 = vmatprep.subr.bf16.mxu0 0
        %2147 = vmatpush1.bf16.msra.mxu0 0
        %2148 = vmatprep.subr.bf16.mxu0 0
        %2149 = vmatpush1.bf16.msra.mxu0 0
        %2150 = vmatprep.mubr.bf16.mxu0 0
        %2151 = vmatmul.mubr.bf16.gmra.mrb[0].mxu0 %v2113
        %v2152 = vpop.f32.mrb[0].mxu0
        %v2153 = vadd.f32 0.0, %v2152
        %v2154 = vpop.f32.mrb[0].mxu0
        %v2155 = vpop.f32.mrb[0].mxu0
        %v2156 = vpop.f32.mrb[0].mxu0
        %2157 = vdwg.mxu0
        %2158 = vrot.lane.b32.xlu0 %v1720, 72
        %v2159 = vpop.permute.xlu0 %2158
        %2161 = vxpose.xlu0.b32.start [1/16] %v2159, 128
        %2162 = vxpose.xlu0.b32.cont [2/16] 0.0, 128
        %2163 = vxpose.xlu0.b32.cont [3/16] 0.0, 128
        %2164 = vxpose.xlu0.b32.cont [4/16] 0.0, 128
        %2165 = vxpose.xlu0.b32.cont [5/16] 0.0, 128
        %2166 = vxpose.xlu0.b32.cont [6/16] 0.0, 128
        %2167 = vxpose.xlu0.b32.cont [7/16] 0.0, 128
        %2168 = vxpose.xlu0.b32.cont [8/16] 0.0, 128
        %2169 = vxpose.xlu0.b32.cont [9/16] 0.0, 128
        %2170 = vxpose.xlu0.b32.cont [10/16] 0.0, 128
        %2171 = vxpose.xlu0.b32.cont [11/16] 0.0, 128
        %2172 = vxpose.xlu0.b32.cont [12/16] 0.0, 128
        %2173 = vxpose.xlu0.b32.cont [13/16] 0.0, 128
        %2174 = vxpose.xlu0.b32.cont [14/16] 0.0, 128
        %2175 = vxpose.xlu0.b32.cont [15/16] 0.0, 128
        %2176 = vxpose.xlu0.b32.end [16/16] 0.0, 128
        %v2177 = vpop.trf.xlu0
        %v2178 = vpop.trf.xlu0
        %v2179 = vpop.trf.xlu0
        %v2180 = vpop.trf.xlu0
        %v2181 = vpop.trf.xlu0
        %v2182 = vpop.trf.xlu0
        %v2183 = vpop.trf.xlu0
        %v2184 = vpop.trf.xlu0
        %v2185 = vpop.trf.xlu0
        %v2186 = vpop.trf.xlu0
        %v2187 = vpop.trf.xlu0
        %v2188 = vpop.trf.xlu0
        %v2189 = vpop.trf.xlu0
        %v2190 = vpop.trf.xlu0
        %v2191 = vpop.trf.xlu0
        %v2192 = vpop.trf.xlu0
        %v2193 = vpack.c.bf16 %v2177, %v2177
        %2194 = vrot.lane.b32.xlu0 %v1725, 104
        %v2195 = vpop.permute.xlu0 %2194
        %v2197 = vsel %vm783, %v2195, 0
        %v2200 = vsel %vm787, %v2193, 0
        %2202 = vmatprep.subr.bf16.mxu0 0
        %2203 = vmatpush1.bf16.msra.mxu0 %v2200
        %2204 = vmatprep.subr.bf16.mxu0 0
        %2205 = vmatpush1.bf16.msra.mxu0 0
        %2206 = vmatprep.subr.bf16.mxu0 0
        %2207 = vmatpush1.bf16.msra.mxu0 0
        %2208 = vmatprep.subr.bf16.mxu0 0
        %2209 = vmatpush1.bf16.msra.mxu0 0
        %2210 = vmatprep.subr.bf16.mxu0 0
        %2211 = vmatpush1.bf16.msra.mxu0 0
        %2212 = vmatprep.subr.bf16.mxu0 0
        %2213 = vmatpush1.bf16.msra.mxu0 0
        %2214 = vmatprep.subr.bf16.mxu0 0
        %2215 = vmatpush1.bf16.msra.mxu0 0
        %2216 = vmatprep.subr.bf16.mxu0 0
        %2217 = vmatpush1.bf16.msra.mxu0 0
        %2218 = vmatprep.subr.bf16.mxu0 0
        %2219 = vmatpush1.bf16.msra.mxu0 0
        %2220 = vmatprep.subr.bf16.mxu0 0
        %2221 = vmatpush1.bf16.msra.mxu0 0
        %2222 = vmatprep.subr.bf16.mxu0 0
        %2223 = vmatpush1.bf16.msra.mxu0 0
        %2224 = vmatprep.subr.bf16.mxu0 0
        %2225 = vmatpush1.bf16.msra.mxu0 0
        %2226 = vmatprep.subr.bf16.mxu0 0
        %2227 = vmatpush1.bf16.msra.mxu0 0
        %2228 = vmatprep.subr.bf16.mxu0 0
        %2229 = vmatpush1.bf16.msra.mxu0 0
        %2230 = vmatprep.subr.bf16.mxu0 0
        %2231 = vmatpush1.bf16.msra.mxu0 0
        %2232 = vmatprep.subr.bf16.mxu0 0
        %2233 = vmatpush1.bf16.msra.mxu0 0
        %2234 = vmatprep.mubr.bf16.mxu0 0
        %2235 = vmatmul.mubr.bf16.gmra.mrb[0].mxu0 %v2197
        %v2236 = vpop.f32.mrb[0].mxu0
        %v2237 = vadd.f32 %v781, %v2236
        %v2238 = vpop.f32.mrb[0].mxu0
        %v2239 = vpop.f32.mrb[0].mxu0
        %v2240 = vpop.f32.mrb[0].mxu0
        %2241 = vdwg.mxu0
        %v2242 = vsel %vm783, %v2237, -inf
        %2243 = vmax.xlane.f32.xlu0 %v2242
        %v2244 = vpop.xlane.xlu0 %2243
        %v2245 = vsub.f32 %v2237, %v2244
        %v2246 = vmul.f32 %v2245, 1.442695
        %v2247 = vpow.pop %v2246
        %v2248 = vsel %vm783, %v2247, 0.0
        %2249 = vadd.xlane.f32.xlu0 %v2248
        %v2250 = vpop.xlane.xlu0 %2249
        %v2251 = vrcp.pop %v2250
        %v2252 = vmul.f32 %v2247, %v2251
        %v2253 = vpack.c.bf16 %v2252, %v2252
        %2254 = vrot.lane.b32.xlu0 %v1725, 40
        %v2255 = vpop.permute.xlu0 %2254
        %v2257 = vsel %vm783, %v2253, 0
        %v2260 = vsel %vm787, %v2255, 0
        %2262 = vmatprep.subr.bf16.mxu0 0
        %2263 = vmatpush1.bf16.msra.mxu0 %v2260
        %2264 = vmatprep.subr.bf16.mxu0 0
        %2265 = vmatpush1.bf16.msra.mxu0 0
        %2266 = vmatprep.subr.bf16.mxu0 0
        %2267 = vmatpush1.bf16.msra.mxu0 0
        %2268 = vmatprep.subr.bf16.mxu0 0
        %2269 = vmatpush1.bf16.msra.mxu0 0
        %2270 = vmatprep.subr.bf16.mxu0 0
        %2271 = vmatpush1.bf16.msra.mxu0 0
        %2272 = vmatprep.subr.bf16.mxu0 0
        %2273 = vmatpush1.bf16.msra.mxu0 0
        %2274 = vmatprep.subr.bf16.mxu0 0
        %2275 = vmatpush1.bf16.msra.mxu0 0
        %2276 = vmatprep.subr.bf16.mxu0 0
        %2277 = vmatpush1.bf16.msra.mxu0 0
        %2278 = vmatprep.subr.bf16.mxu0 0
        %2279 = vmatpush1.bf16.msra.mxu0 0
        %2280 = vmatprep.subr.bf16.mxu0 0
        %2281 = vmatpush1.bf16.msra.mxu0 0
        %2282 = vmatprep.subr.bf16.mxu0 0
        %2283 = vmatpush1.bf16.msra.mxu0 0
        %2284 = vmatprep.subr.bf16.mxu0 0
        %2285 = vmatpush1.bf16.msra.mxu0 0
        %2286 = vmatprep.subr.bf16.mxu0 0
        %2287 = vmatpush1.bf16.msra.mxu0 0
        %2288 = vmatprep.subr.bf16.mxu0 0
        %2289 = vmatpush1.bf16.msra.mxu0 0
        %2290 = vmatprep.subr.bf16.mxu0 0
        %2291 = vmatpush1.bf16.msra.mxu0 0
        %2292 = vmatprep.subr.bf16.mxu0 0
        %2293 = vmatpush1.bf16.msra.mxu0 0
        %2294 = vmatprep.mubr.bf16.mxu0 0
        %2295 = vmatmul.mubr.bf16.gmra.mrb[0].mxu0 %v2257
        %v2296 = vpop.f32.mrb[0].mxu0
        %v2297 = vadd.f32 0.0, %v2296
        %v2298 = vpop.f32.mrb[0].mxu0
        %v2299 = vpop.f32.mrb[0].mxu0
        %v2300 = vpop.f32.mrb[0].mxu0
        %2301 = vdwg.mxu0
        %2303 = vrot.lane.b32.xlu0 %v2009, 8
        %v2304 = vpop.permute.xlu0 %2303
        %2307 = vrot.lane.b32.xlu0 %v2153, 16
        %v2308 = vpop.permute.xlu0 %2307
        %2311 = vrot.lane.b32.xlu0 %v2297, 24
        %v2312 = vpop.permute.xlu0 %2311
        %v2314 = vsel %vm783, %v1865, %v2304
        %v2315 = vsel %vm1337, %v2314, %v2308
        %v2316 = vsel %vm1339, %v2315, %v2312
        %v2317 = vpack.c.bf16 %v2316, %v2316
        %s2318 = scalar_lea.vmem %s6, 16
        %v2319 = vld [vmem:[%s2318] sm:$0xf]
        %v2320 = vld [vmem:[%s2318 + $0x4] sm:$0xf]
        %v2321 = vld [vmem:[%s2318 + $0x8] sm:$0xf]
        %v2322 = vld [vmem:[%s2318 + $0xc] sm:$0xf]
        %s2323 = scalar_lea.vmem %s7, 1
        %v2324 = vld [vmem:[%s2323] sm:$0x1]
        %v2326 = vlaneseq
        %v2327 = vshrl.u32 %v2326, 7
        %v2328 = vsub.s32 0, %v2327
        %v2329 = vrot.slane %v2324, %v2328
        %v2335 = vunpack.c.l.b16 %v2319
        %v2336 = vunpack.c.l.b16 %v2320
        %v2337 = vunpack.c.l.b16 %v2321
        %v2338 = vunpack.c.l.b16 %v2322
        %v2339 = vpack.c.b16 %v2336, %v2335
        %v2340 = vpack.c.b16 %v2338, %v2337
        %v2344 = vsel %vm642, %v2317, 0
        %2346 = vmatprep.subr.bf16.mxu0 0
        %2347 = vmatpush1.bf16.msra.mxu0 %v2339
        %2348 = vmatprep.subr.bf16.mxu0 0
        %2349 = vmatpush1.bf16.msra.mxu0 %v2340
        %2350 = vmatprep.subr.bf16.mxu0 0
        %2351 = vmatpush1.bf16.msra.mxu0 0
        %2352 = vmatprep.subr.bf16.mxu0 0
        %2353 = vmatpush1.bf16.msra.mxu0 0
        %2354 = vmatprep.subr.bf16.mxu0 0
        %2355 = vmatpush1.bf16.msra.mxu0 0
        %2356 = vmatprep.subr.bf16.mxu0 0
        %2357 = vmatpush1.bf16.msra.mxu0 0
        %2358 = vmatprep.subr.bf16.mxu0 0
        %2359 = vmatpush1.bf16.msra.mxu0 0
        %2360 = vmatprep.subr.bf16.mxu0 0
        %2361 = vmatpush1.bf16.msra.mxu0 0
        %2362 = vmatprep.subr.bf16.mxu0 0
        %2363 = vmatpush1.bf16.msra.mxu0 0
        %2364 = vmatprep.subr.bf16.mxu0 0
        %2365 = vmatpush1.bf16.msra.mxu0 0
        %2366 = vmatprep.subr.bf16.mxu0 0
        %2367 = vmatpush1.bf16.msra.mxu0 0
        %2368 = vmatprep.subr.bf16.mxu0 0
        %2369 = vmatpush1.bf16.msra.mxu0 0
        %2370 = vmatprep.subr.bf16.mxu0 0
        %2371 = vmatpush1.bf16.msra.mxu0 0
        %2372 = vmatprep.subr.bf16.mxu0 0
        %2373 = vmatpush1.bf16.msra.mxu0 0
        %2374 = vmatprep.subr.bf16.mxu0 0
        %2375 = vmatpush1.bf16.msra.mxu0 0
        %2376 = vmatprep.subr.bf16.mxu0 0
        %2377 = vmatpush1.bf16.msra.mxu0 0
        %2378 = vmatprep.mubr.bf16.mxu0 0
        %2379 = vmatmul.mubr.bf16.gmra.mrb[0].mxu0 %v2344
        %v2380 = vpop.f32.mrb[0].mxu0
        %v2381 = vadd.f32 %v2329, %v2380
        %v2382 = vpop.f32.mrb[0].mxu0
        %v2383 = vpop.f32.mrb[0].mxu0
        %v2384 = vpop.f32.mrb[0].mxu0
        %2385 = vdwg.mxu0
        %v2386 = vadd.f32 %v2381, %v1655
        %s2387 = scalar_lea.vmem %s8, 1
        %v2388 = vld [vmem:[%s2387] sm:$0x1]
        %s2389 = scalar_lea.vmem %s9, 1
        %v2390 = vld [vmem:[%s2389] sm:$0x1]
        %v2391 = vsel %vm642, %v2386, 0.0
        %2392 = vadd.xlane.f32.xlu0 %v2391
        %v2393 = vpop.xlane.xlu0 %2392
        %v2394 = vmul.f32 %v2393, %v646
        %v2395 = vsub.f32 %v2386, %v2394
        %v2396 = vmul.f32 %v2395, %v2395
        %v2397 = vsel %vm642, %v2396, 0.0
        %2398 = vadd.xlane.f32.xlu0 %v2397
        %v2399 = vpop.xlane.xlu0 %2398
        %v2400 = vmul.f32 %v2399, %v646
        %v2401 = vadd.f32 %v2400, 1e-12
        %v2402 = vrsqrt.pop %v2401
        %v2403 = vmul.f32 %v2395, %v2402
        %v2405 = vlaneseq
        %v2406 = vshrl.u32 %v2405, 7
        %v2407 = vsub.s32 0, %v2406
        %v2408 = vrot.slane %v2388, %v2407
        %v2410 = vmul.f32 %v2403, %v2408
        %v2412 = vlaneseq
        %v2413 = vshrl.u32 %v2412, 7
        %v2414 = vsub.s32 0, %v2413
        %v2415 = vrot.slane %v2390, %v2414
        %v2417 = vadd.f32 %v2410, %v2415
        %v2418 = vpack.c.bf16 %v2417, %v2417
        %s2419 = scalar_lea.vmem %s10, 16
        %v2420 = vld [vmem:[%s2419] sm:$0xf]
        %v2421 = vld [vmem:[%s2419 + $0x4] sm:$0xf]
        %v2422 = vld [vmem:[%s2419 + $0x8] sm:$0xf]
        %v2423 = vld [vmem:[%s2419 + $0xc] sm:$0xf]
        %s2424 = scalar_lea.vmem %s11, 1
        %v2425 = vld [vmem:[%s2424] sm:$0x1]
        %v2427 = vlaneseq
        %v2428 = vshrl.u32 %v2427, 7
        %v2429 = vsub.s32 0, %v2428
        %v2430 = vrot.slane %v2425, %v2429
        %v2436 = vunpack.c.l.b16 %v2420
        %v2437 = vunpack.c.l.b16 %v2421
        %v2438 = vunpack.c.l.b16 %v2422
        %v2439 = vunpack.c.l.b16 %v2423
        %v2440 = vpack.c.b16 %v2437, %v2436
        %v2441 = vpack.c.b16 %v2439, %v2438
        %v2445 = vsel %vm642, %v2418, 0
        %2447 = vmatprep.subr.bf16.mxu0 0
        %2448 = vmatpush1.bf16.msra.mxu0 %v2440
        %2449 = vmatprep.subr.bf16.mxu0 0
        %2450 = vmatpush1.bf16.msra.mxu0 %v2441
        %2451 = vmatprep.subr.bf16.mxu0 0
        %2452 = vmatpush1.bf16.msra.mxu0 0
        %2453 = vmatprep.subr.bf16.mxu0 0
        %2454 = vmatpush1.bf16.msra.mxu0 0
        %2455 = vmatprep.subr.bf16.mxu0 0
        %2456 = vmatpush1.bf16.msra.mxu0 0
        %2457 = vmatprep.subr.bf16.mxu0 0
        %2458 = vmatpush1.bf16.msra.mxu0 0
        %2459 = vmatprep.subr.bf16.mxu0 0
        %2460 = vmatpush1.bf16.msra.mxu0 0
        %2461 = vmatprep.subr.bf16.mxu0 0
        %2462 = vmatpush1.bf16.msra.mxu0 0
        %2463 = vmatprep.subr.bf16.mxu0 0
        %2464 = vmatpush1.bf16.msra.mxu0 0
        %2465 = vmatprep.subr.bf16.mxu0 0
        %2466 = vmatpush1.bf16.msra.mxu0 0
        %2467 = vmatprep.subr.bf16.mxu0 0
        %2468 = vmatpush1.bf16.msra.mxu0 0
        %2469 = vmatprep.subr.bf16.mxu0 0
        %2470 = vmatpush1.bf16.msra.mxu0 0
        %2471 = vmatprep.subr.bf16.mxu0 0
        %2472 = vmatpush1.bf16.msra.mxu0 0
        %2473 = vmatprep.subr.bf16.mxu0 0
        %2474 = vmatpush1.bf16.msra.mxu0 0
        %2475 = vmatprep.subr.bf16.mxu0 0
        %2476 = vmatpush1.bf16.msra.mxu0 0
        %2477 = vmatprep.subr.bf16.mxu0 0
        %2478 = vmatpush1.bf16.msra.mxu0 0
        %2479 = vmatprep.mubr.bf16.mxu0 0
        %2480 = vmatmul.mubr.bf16.gmra.mrb[0].mxu0 %v2445
        %v2481 = vpop.f32.mrb[0].mxu0
        %v2482 = vadd.f32 %v2430, %v2481
        %v2483 = vpop.f32.mrb[0].mxu0
        %v2484 = vpop.f32.mrb[0].mxu0
        %v2485 = vpop.f32.mrb[0].mxu0
        %2486 = vdwg.mxu0
        %v2487 = vmul.f32 %v2482, %v2482
        %v2488 = vmul.f32 %v2482, %v2487
        %v2489 = vmul.f32 %v2488, 0.044715
        %v2490 = vadd.f32 %v2482, %v2489
        %v2491 = vmul.f32 %v2490, 0.7978846
        %v2492 = vtanh.pop %v2491
        %v2493 = vadd.f32 %v2492, 1.0
        %v2494 = vmul.f32 %v2493, 0.5
        %v2495 = vmul.f32 %v2482, %v2494
        %v2496 = vpack.c.bf16 %v2495, %v2495
        %s2497 = scalar_lea.vmem %s12, 64
        %v2498 = vld [vmem:[%s2497] sm:$0xf]
        %v2499 = vld [vmem:[%s2497 + $0x4] sm:$0xf]
        %v2500 = vld [vmem:[%s2497 + $0x8] sm:$0xf]
        %v2501 = vld [vmem:[%s2497 + $0xc] sm:$0xf]
        %v2502 = vld [vmem:[%s2497 + $0x10] sm:$0xf]
        %v2503 = vld [vmem:[%s2497 + $0x14] sm:$0xf]
        %v2504 = vld [vmem:[%s2497 + $0x18] sm:$0xf]
        %v2505 = vld [vmem:[%s2497 + $0x1c] sm:$0xf]
        %v2506 = vld [vmem:[%s2497 + $0x20] sm:$0xf]
        %v2507 = vld [vmem:[%s2497 + $0x24] sm:$0xf]
        %v2508 = vld [vmem:[%s2497 + $0x28] sm:$0xf]
        %v2509 = vld [vmem:[%s2497 + $0x2c] sm:$0xf]
        %v2510 = vld [vmem:[%s2497 + $0x30] sm:$0xf]
        %v2511 = vld [vmem:[%s2497 + $0x34] sm:$0xf]
        %v2512 = vld [vmem:[%s2497 + $0x38] sm:$0xf]
        %v2513 = vld [vmem:[%s2497 + $0x3c] sm:$0xf]
        %s2514 = scalar_lea.vmem %s13, 1
        %v2515 = vld [vmem:[%s2514] sm:$0x1]
        %v2517 = vlaneseq
        %v2518 = vshrl.u32 %v2517, 7
        %v2519 = vsub.s32 0, %v2518
        %v2520 = vrot.slane %v2515, %v2519
        %v2538 = vunpack.c.l.b16 %v2498
        %v2539 = vunpack.c.l.b16 %v2499
        %v2540 = vunpack.c.l.b16 %v2500
        %v2541 = vunpack.c.l.b16 %v2501
        %v2542 = vunpack.c.l.b16 %v2502
        %v2543 = vunpack.c.l.b16 %v2503
        %v2544 = vunpack.c.l.b16 %v2504
        %v2545 = vunpack.c.l.b16 %v2505
        %v2546 = vunpack.c.l.b16 %v2506
        %v2547 = vunpack.c.l.b16 %v2507
        %v2548 = vunpack.c.l.b16 %v2508
        %v2549 = vunpack.c.l.b16 %v2509
        %v2550 = vunpack.c.l.b16 %v2510
        %v2551 = vunpack.c.l.b16 %v2511
        %v2552 = vunpack.c.l.b16 %v2512
        %v2553 = vunpack.c.l.b16 %v2513
        %v2554 = vpack.c.b16 %v2539, %v2538
        %v2555 = vpack.c.b16 %v2541, %v2540
        %v2556 = vpack.c.b16 %v2543, %v2542
        %v2557 = vpack.c.b16 %v2545, %v2544
        %v2558 = vpack.c.b16 %v2547, %v2546
        %v2559 = vpack.c.b16 %v2549, %v2548
        %v2560 = vpack.c.b16 %v2551, %v2550
        %v2561 = vpack.c.b16 %v2553, %v2552
        %2570 = vmatprep.subr.bf16.mxu0 0
        %2571 = vmatpush1.bf16.msra.mxu0 %v2554
        %2572 = vmatprep.subr.bf16.mxu0 0
        %2573 = vmatpush1.bf16.msra.mxu0 %v2555
        %2574 = vmatprep.subr.bf16.mxu0 0
        %2575 = vmatpush1.bf16.msra.mxu0 %v2556
        %2576 = vmatprep.subr.bf16.mxu0 0
        %2577 = vmatpush1.bf16.msra.mxu0 %v2557
        %2578 = vmatprep.subr.bf16.mxu0 0
        %2579 = vmatpush1.bf16.msra.mxu0 %v2558
        %2580 = vmatprep.subr.bf16.mxu0 0
        %2581 = vmatpush1.bf16.msra.mxu0 %v2559
        %2582 = vmatprep.subr.bf16.mxu0 0
        %2583 = vmatpush1.bf16.msra.mxu0 %v2560
        %2584 = vmatprep.subr.bf16.mxu0 0
        %2585 = vmatpush1.bf16.msra.mxu0 %v2561
        %2586 = vmatprep.subr.bf16.mxu0 0
        %2587 = vmatpush1.bf16.msra.mxu0 0
        %2588 = vmatprep.subr.bf16.mxu0 0
        %2589 = vmatpush1.bf16.msra.mxu0 0
        %2590 = vmatprep.subr.bf16.mxu0 0
        %2591 = vmatpush1.bf16.msra.mxu0 0
        %2592 = vmatprep.subr.bf16.mxu0 0
        %2593 = vmatpush1.bf16.msra.mxu0 0
        %2594 = vmatprep.subr.bf16.mxu0 0
        %2595 = vmatpush1.bf16.msra.mxu0 0
        %2596 = vmatprep.subr.bf16.mxu0 0
        %2597 = vmatpush1.bf16.msra.mxu0 0
        %2598 = vmatprep.subr.bf16.mxu0 0
        %2599 = vmatpush1.bf16.msra.mxu0 0
        %2600 = vmatprep.subr.bf16.mxu0 0
        %2601 = vmatpush1.bf16.msra.mxu0 0
        %2602 = vmatprep.mubr.bf16.mxu0 0
        %2603 = vmatmul.mubr.bf16.gmra.mrb[0].mxu0 %v2496
        %v2604 = vpop.f32.mrb[0].mxu0
        %v2605 = vadd.f32 %v2520, %v2604
        %v2606 = vpop.f32.mrb[0].mxu0
        %v2607 = vpop.f32.mrb[0].mxu0
        %v2608 = vpop.f32.mrb[0].mxu0
        %2609 = vdwg.mxu0
        %v2610 = vadd.f32 %v2605, %v2417
        %s2611 = scalar_lea.vmem %s14, 1
        %v2612 = vld [vmem:[%s2611] sm:$0x1]
        %s2613 = scalar_lea.vmem %s15, 1
        %v2614 = vld [vmem:[%s2613] sm:$0x1]
        %v2615 = vsel %vm642, %v2610, 0.0
        %2616 = vadd.xlane.f32.xlu0 %v2615
        %v2617 = vpop.xlane.xlu0 %2616
        %v2618 = vmul.f32 %v2617, %v646
        %v2619 = vsub.f32 %v2610, %v2618
        %v2620 = vmul.f32 %v2619, %v2619
        %v2621 = vsel %vm642, %v2620, 0.0
        %2622 = vadd.xlane.f32.xlu0 %v2621
        %v2623 = vpop.xlane.xlu0 %2622
        %v2624 = vmul.f32 %v2623, %v646
        %v2625 = vadd.f32 %v2624, 1e-12
        %v2626 = vrsqrt.pop %v2625
        %v2627 = vmul.f32 %v2619, %v2626
        %v2629 = vlaneseq
        %v2630 = vshrl.u32 %v2629, 7
        %v2631 = vsub.s32 0, %v2630
        %v2632 = vrot.slane %v2612, %v2631
        %v2634 = vmul.f32 %v2627, %v2632
        %v2636 = vlaneseq
        %v2637 = vshrl.u32 %v2636, 7
        %v2638 = vsub.s32 0, %v2637
        %v2639 = vrot.slane %v2614, %v2638
        %v2641 = vadd.f32 %v2634, %v2639
        %v2642 = vpack.c.bf16 %v2641, %v2641
        %v2643 = vld [vmem:[%s16] sm:$0xf]
        %v2644 = vld [vmem:[%s16 + $0x4] sm:$0xf]
        %v2645 = vld [vmem:[%s16 + $0x8] sm:$0xf]
        %v2646 = vld [vmem:[%s16 + $0xc] sm:$0xf]
        %v2647 = vld [vmem:[%s17] sm:$0x1]
        %v2649 = vlaneseq
        %v2650 = vshrl.u32 %v2649, 7
        %v2651 = vsub.s32 0, %v2650
        %v2652 = vrot.slane %v2647, %v2651
        %v2658 = vunpack.c.l.b16 %v2643
        %v2659 = vunpack.c.l.b16 %v2644
        %v2660 = vunpack.c.l.b16 %v2645
        %v2661 = vunpack.c.l.b16 %v2646
        %v2662 = vpack.c.b16 %v2659, %v2658
        %v2663 = vpack.c.b16 %v2661, %v2660
        %v2667 = vsel %vm642, %v2642, 0
        %2669 = vmatprep.subr.bf16.mxu0 0
        %2670 = vmatpush1.bf16.msra.mxu0 %v2662
        %2671 = vmatprep.subr.bf16.mxu0 0
        %2672 = vmatpush1.bf16.msra.mxu0 %v2663
        %2673 = vmatprep.subr.bf16.mxu0 0
        %2674 = vmatpush1.bf16.msra.mxu0 0
        %2675 = vmatprep.subr.bf16.mxu0 0
        %2676 = vmatpush1.bf16.msra.mxu0 0
        %2677 = vmatprep.subr.bf16.mxu0 0
        %2678 = vmatpush1.bf16.msra.mxu0 0
        %2679 = vmatprep.subr.bf16.mxu0 0
        %2680 = vmatpush1.bf16.msra.mxu0 0
        %2681 = vmatprep.subr.bf16.mxu0 0
        %2682 = vmatpush1.bf16.msra.mxu0 0
        %2683 = vmatprep.subr.bf16.mxu0 0
        %2684 = vmatpush1.bf16.msra.mxu0 0
        %2685 = vmatprep.subr.bf16.mxu0 0
        %2686 = vmatpush1.bf16.msra.mxu0 0
        %2687 = vmatprep.subr.bf16.mxu0 0
        %2688 = vmatpush1.bf16.msra.mxu0 0
        %2689 = vmatprep.subr.bf16.mxu0 0
        %2690 = vmatpush1.bf16.msra.mxu0 0
        %2691 = vmatprep.subr.bf16.mxu0 0
        %2692 = vmatpush1.bf16.msra.mxu0 0
        %2693 = vmatprep.subr.bf16.mxu0 0
        %2694 = vmatpush1.bf16.msra.mxu0 0
        %2695 = vmatprep.subr.bf16.mxu0 0
        %2696 = vmatpush1.bf16.msra.mxu0 0
        %2697 = vmatprep.subr.bf16.mxu0 0
        %2698 = vmatpush1.bf16.msra.mxu0 0
        %2699 = vmatprep.subr.bf16.mxu0 0
        %2700 = vmatpush1.bf16.msra.mxu0 0
        %2701 = vmatprep.mubr.bf16.mxu0 0
        %2702 = vmatmul.mubr.bf16.gmra.mrb[0].mxu0 %v2667
        %v2703 = vpop.f32.mrb[0].mxu0
        %v2704 = vadd.f32 %v2652, %v2703
        %v2705 = vpop.f32.mrb[0].mxu0
        %v2706 = vpop.f32.mrb[0].mxu0
        %v2707 = vpop.f32.mrb[0].mxu0
        %2708 = vdwg.mxu0
        %v2709 = vtanh.pop %v2704
        %v2710 = vpack.c.bf16 %v2709, %v2709
        %v2711 = vld [vmem:[%s18] sm:$0xf]
        %v2712 = vld [vmem:[%s18 + $0x4] sm:$0xf]
        %v2713 = vld [vmem:[%s18 + $0x8] sm:$0xf]
        %v2714 = vld [vmem:[%s18 + $0xc] sm:$0xf]
        %v2715 = vld [vmem:[%s19] sm:$0x1]
        %v2717 = vlaneseq
        %v2718 = vshrl.u32 %v2717, 7
        %v2719 = vsub.s32 0, %v2718
        %v2720 = vrot.slane %v2715, %v2719
        %v2726 = vunpack.c.l.b16 %v2711
        %v2727 = vunpack.c.l.b16 %v2712
        %v2728 = vunpack.c.l.b16 %v2713
        %v2729 = vunpack.c.l.b16 %v2714
        %v2730 = vpack.c.b16 %v2727, %v2726
        %v2731 = vpack.c.b16 %v2729, %v2728
        %v2735 = vsel %vm642, %v2710, 0
        %2737 = vmatprep.subr.bf16.mxu0 0
        %2738 = vmatpush1.bf16.msra.mxu0 %v2730
        %2739 = vmatprep.subr.bf16.mxu0 0
        %2740 = vmatpush1.bf16.msra.mxu0 %v2731
        %2741 = vmatprep.subr.bf16.mxu0 0
        %2742 = vmatpush1.bf16.msra.mxu0 0
        %2743 = vmatprep.subr.bf16.mxu0 0
        %2744 = vmatpush1.bf16.msra.mxu0 0
        %2745 = vmatprep.subr.bf16.mxu0 0
        %2746 = vmatpush1.bf16.msra.mxu0 0
        %2747 = vmatprep.subr.bf16.mxu0 0
        %2748 = vmatpush1.bf16.msra.mxu0 0
        %2749 = vmatprep.subr.bf16.mxu0 0
        %2750 = vmatpush1.bf16.msra.mxu0 0
        %2751 = vmatprep.subr.bf16.mxu0 0
        %2752 = vmatpush1.bf16.msra.mxu0 0
        %2753 = vmatprep.subr.bf16.mxu0 0
        %2754 = vmatpush1.bf16.msra.mxu0 0
        %2755 = vmatprep.subr.bf16.mxu0 0
        %2756 = vmatpush1.bf16.msra.mxu0 0
        %2757 = vmatprep.subr.bf16.mxu0 0
        %2758 = vmatpush1.bf16.msra.mxu0 0
        %2759 = vmatprep.subr.bf16.mxu0 0
        %2760 = vmatpush1.bf16.msra.mxu0 0
        %2761 = vmatprep.subr.bf16.mxu0 0
        %2762 = vmatpush1.bf16.msra.mxu0 0
        %2763 = vmatprep.subr.bf16.mxu0 0
        %2764 = vmatpush1.bf16.msra.mxu0 0
        %2765 = vmatprep.subr.bf16.mxu0 0
        %2766 = vmatpush1.bf16.msra.mxu0 0
        %2767 = vmatprep.subr.bf16.mxu0 0
        %2768 = vmatpush1.bf16.msra.mxu0 0
        %2769 = vmatprep.mubr.bf16.mxu0 0
        %2770 = vmatmul.mubr.bf16.gmra.mrb[0].mxu0 %v2735
        %v2771 = vpop.f32.mrb[0].mxu0
        %v2772 = vadd.f32 %v2720, %v2771
        %v2773 = vpop.f32.mrb[0].mxu0
        %v2774 = vpop.f32.mrb[0].mxu0
        %v2775 = vpop.f32.mrb[0].mxu0
        %2776 = vdwg.mxu0
        %2777 = vst [vmem:[%s630] sm:$0x1] %v2772
        %s2778 = sand.u32 %s472, 1
        %s2779 = scalar_lea.sflag [#allocation3], %s2778
        %s2780 = sand.u32 %s472, 1
        %s2781 = scalar_lea.vmem [#allocation2], %s2780
        // Predicated region
        $region101: #{bert_class_forward.1} parent=99 // pred_check
          %p2782 = pneg %p482
        $region102: #{bert_class_forward.1} parent=99 // pred_check_branch
          %2784 = sbr.rel (%p2782) target = $region104
        $region103: #{bert_class_forward.1} parent=99 // pred_region
          %s2786 = ssub.s32 16, 16
          %2787 = vsyncadd %s2779, %s2786
          %s2788 = smul.addr %s34, 16
          %s2789 = scalar_lea.hbm %s20, %s2788
          %s2791 = sshll.u32 %s2781, 4
          %s2792 = int_to_ptr.vmem [resolvable:$true] %s2791
          %2794 = dma.vmem_to_hbm [thread:$0]  %s2792, 16, %s2789, %s2779
        $region104: #{bert_class_forward.1} parent=99 // pred_fallthru
          _
      $region100: #{bert_class_forward.1} parent=5 // pred_fallthru
        _
      %p2795 = scmp.le.s32.totalorder 2, %s29
      // Predicated region
      $region105: #{bert_class_forward.1} parent=5 // pred_check
        %p2796 = pneg %p2795
      $region106: #{bert_class_forward.1} parent=5 // pred_check_branch
        %2798 = sbr.rel (%p2796) target = $region108
      $region107: #{bert_class_forward.1} parent=5 // pred_region
        %s2799 = ssub.s32 %s29, 2
        // Predicated region
        $region109: #{bert_class_forward.1} parent=107 // pred_check
          %p2800 = pneg %p488
        $region110: #{bert_class_forward.1} parent=107 // pred_check_branch
          %2802 = sbr.rel (%p2800) target = $region112
        $region111: #{bert_class_forward.1} parent=107 // pred_region
          %s2803 = sand.u32 %s473, 1
          %s2804 = scalar_lea.sflag [#allocation3], %s2803
          %s2805 = sand.u32 %s473, 1
          %s2806 = scalar_lea.vmem [#allocation2], %s2805
          %2807 = dma.done %s2804, 16
        $region112: #{bert_class_forward.1} parent=107 // pred_fallthru
          _
      $region108: #{bert_class_forward.1} parent=5 // pred_fallthru
        _
    $region6: #{bert_class_forward.1} parent=1 // loop_footer
      %s33 = sadd.s32 1, %s29
    $region7: #{bert_class_forward.1} parent=1 // loop_footer_branch
      %28 = sbr.rel target = $region3
    $region8: #{bert_class_forward.1} parent=1 // loop_exit
      _
    %2808 = vsyncpa [#allocation3], 1
    %s2809 = scalar_lea.sflag [#allocation3], 1
    %2810 = vsyncpa %s2809, 1

</llo_original>
